<compile_context>
chip_gen: v7x
topology: tpu7x:2x2x1
jax: 0.10.0
libtpu: 0.0.40
codegen_flags: <defaults>
</compile_context>

<pallas_src>
import math

import numpy as np
import jax
import jax.numpy as jnp
from jax import lax
from jax.experimental import pallas as pl
from jax.experimental.pallas import tpu as pltpu

CONST_SCALE = 0.18215
IMG_DIM = 64          # scaled down from 768 (must be a multiple of 8)
LATENT_C = 4
LATENT_C_PAD = 8      # latent channels padded to a full sublane group
MODEL_C = 32          # synthetic UNet width
TEMB_DIM = 32
TEXT_SEQ = 2          # empty prompt -> BOS+EOS
TEXT_DIM = 32         # scaled down from 768/1024
NUM_TRAIN_TIMESTEPS = 1000
LAT_H = IMG_DIM // 8  # 8
LAT_W = LAT_H
LAT_HW = LAT_H * LAT_W  # 64

# 3x3 conv taps (dy, dx), matching the weight layout [9, C_in, C_out].
_TAPS = [(dy, dx) for dy in (-1, 0, 1) for dx in (-1, 0, 1)]


# --------------------------------------------------------------------------
# Pallas kernels
# --------------------------------------------------------------------------
def _resize_kernel(x_ref, rh_ref, rwt_ref, o_ref):
    """Separable bilinear resize of all images in one grid step: Rh @ X @ Rw^T."""
    for i in range(x_ref.shape[0]):                       # static image count
        tmp = jnp.dot(x_ref[i], rwt_ref[...], preferred_element_type=jnp.float32)
        o_ref[i] = jnp.dot(rh_ref[...], tmp, preferred_element_type=jnp.float32)


def _vae_encode_kernel(pt_ref, w_ref, b_ref, n_ref, o_ref):
    """Patchify conv -> (mean, logvar) in one matmul -> posterior sample * CONST_SCALE.

    Lane layout: pt_ref [K, NPIX], output [LATENT_C, NPIX] (pixels on lanes)."""
    proj = jnp.dot(w_ref[...], pt_ref[...],
                   preferred_element_type=jnp.float32) + b_ref[...]      # [8, NPIX]
    mean = proj[0:LATENT_C, :]
    logvar = jnp.clip(proj[LATENT_C:2 * LATENT_C, :], -30.0, 20.0)
    std = jnp.exp(0.5 * logvar)
    o_ref[...] = (mean + std * n_ref[...]) * CONST_SCALE


def _decode_kernel(lat_ref, w_ref, b_ref, o_ref):
    """1/CONST_SCALE -> VAE decode with pre-combined gray weights -> /2+0.5 clamp."""
    x = lat_ref[...] * (1.0 / CONST_SCALE)                               # [4, NPIX]
    g = jnp.dot(w_ref[...], x, preferred_element_type=jnp.float32) + b_ref[...]
    o_ref[...] = jnp.clip(g * 0.5 + 0.5, 0.0, 1.0)                       # [64, NPIX]


def _denoise_kernel(rgb_ref, init_ref, temb_ref, k0_ref, k1_ref, v0_ref, v1_ref,
                    masks_ref, wir_ref, wil_ref, bi_ref, wq_ref, wo_ref, bo_ref,
                    coefs_ref, out_ref):
    """Entire DDIM denoising loop, fused UNet step per iteration.

    Layout: channels on sublanes, batch*pixels on lanes ([C, NPIX], NPIX=128).
    The latent is the fori_loop carry; DDIM coefficients live in SMEM."""
    n_steps = temb_ref.shape[0]
    npix = rgb_ref.shape[-1]
    attn_scale = 1.0 / math.sqrt(MODEL_C)

    # Boundary masks for the 9 conv taps (loop-invariant; load once).
    masks = [masks_ref[t] for t in range(9)]              # each [1, NPIX]

    def shifted_stack(x):
        """x: [C, NPIX] f32 -> bf16 [9*C, NPIX]; per-tap shifted + masked copies.

        Shifts run on the XLU lane axis; zero-padding at image borders (and at
        batch boundaries) is enforced by the masks, so rolling across the
        concatenated-batch lane axis is safe."""
        pieces = []
        for tap, (dy, dx) in enumerate(_TAPS):
            d = dy * LAT_W + dx
            s = x if d == 0 else pltpu.roll(x, shift=(-d) % npix, axis=1)
            pieces.append(s * masks[tap])
        return jnp.concatenate(pieces, axis=0).astype(jnp.bfloat16)

    # Step-invariant rgb contribution to conv_in (+ bias): computed once.
    rgb_base = jnp.dot(wir_ref[...], shifted_stack(rgb_ref[...]),
                       preferred_element_type=jnp.float32) + bi_ref[...]  # [32, NPIX]

    wil = wil_ref[...]
    wq = wq_ref[...]
    wo = wo_ref[...]
    bo = bo_ref[...]
    k0 = k0_ref[...]
    k1 = k1_ref[...]
    v0 = v0_ref[...]
    v1 = v1_ref[...]

    def body(step, lat):
        # ---- conv_in (3x3, pad 1) over concat([rgb, lat]) -> SiLU -> + temb ----
        feat = rgb_base + jnp.dot(wil, shifted_stack(lat),
                                  preferred_element_type=jnp.float32)
        feat = feat * jax.nn.sigmoid(feat)                # SiLU
        feat = feat + temb_ref[step]                      # [MODEL_C, 1] broadcast

        # ---- cross-attention against shared empty-prompt K/V (S = 2) ----
        q = jnp.dot(wq, feat.astype(jnp.bfloat16),
                    preferred_element_type=jnp.float32)   # [32, NPIX]
        s0 = jnp.sum(q * k0, axis=0, keepdims=True) * attn_scale   # [1, NPIX]
        s1 = jnp.sum(q * k1, axis=0, keepdims=True) * attn_scale
        m = jnp.maximum(s0, s1)
        e0 = jnp.exp(s0 - m)
        e1 = jnp.exp(s1 - m)
        inv = pl.reciprocal(e0 + e1, approx=True)
        feat = feat + (v0 * e0 + v1 * e1) * inv           # VPU combine over S=2

        # ---- conv_out (3x3, pad 1) -> v-prediction (channel-padded rows) ----
        vpred = jnp.dot(wo, shifted_stack(feat),
                        preferred_element_type=jnp.float32) + bo   # [8, NPIX]

        # ---- DDIM step (v-prediction, eta=0); coefficients from SMEM ----
        sa_t = coefs_ref[4 * step + 0]
        sb_t = coefs_ref[4 * step + 1]
        sa_p = coefs_ref[4 * step + 2]
        sb_p = coefs_ref[4 * step + 3]
        pred_x0 = sa_t * lat - sb_t * vpred
        pred_eps = sa_t * vpred + sb_t * lat
        return sa_p * pred_x0 + sb_p * pred_eps

    out_ref[...] = lax.fori_loop(0, n_steps, body, init_ref[...])


# --------------------------------------------------------------------------
# Pallas wrappers
# --------------------------------------------------------------------------
def _full_spec(shape):
    return pl.BlockSpec(shape, lambda i, _s=shape: (0,) * len(_s))


def pallas_resize(x, rh, rwt):
    """x: [B, C, H, W] -> [B, C, out_h, out_w]; all images in one grid step."""
    B, C, H, W = x.shape
    oh, ow = rh.shape[0], rwt.shape[1]
    x2 = x.reshape(B * C, H, W).astype(jnp.float32)
    out = pl.pallas_call(
        _resize_kernel,
        out_shape=jax.ShapeDtypeStruct((B * C, oh, ow), jnp.float32),
        grid=(1,),
        in_specs=[
            _full_spec((B * C, H, W)),
            _full_spec((oh, H)),
            _full_spec((W, ow)),
        ],
        out_specs=_full_spec((B * C, oh, ow)),
        compiler_params=pltpu.CompilerParams(dimension_semantics=("arbitrary",)),
    )(x2, rh.astype(jnp.float32), rwt.astype(jnp.float32))
    return out.reshape(B, C, oh, ow)


def pallas_vae_encode(patchesT, enc_w, enc_b, noise):
    """patchesT: [3*64, NPIX] -> sampled latents [LATENT_C, NPIX]."""
    K, npix = patchesT.shape
    wT = enc_w.T                                          # [2*LATENT_C, K]
    b = enc_b.reshape(2 * LATENT_C, 1)
    return pl.pallas_call(
        _vae_encode_kernel,
        out_shape=jax.ShapeDtypeStruct((LATENT_C, npix), jnp.float32),
        grid=(1,),
        in_specs=[
            _full_spec((K, npix)),
            _full_spec((2 * LATENT_C, K)),
            _full_spec((2 * LATENT_C, 1)),
            _full_spec((LATENT_C, npix)),
        ],
        out_specs=_full_spec((LATENT_C, npix)),
        compiler_params=pltpu.CompilerParams(dimension_semantics=("arbitrary",)),
    )(patchesT, wT, b, noise)


def pallas_decode(lat, wgT, bg):
    """lat: [LATENT_C, NPIX] -> gray 8x8 patches [64, NPIX] (decode+mean+clamp)."""
    _, npix = lat.shape
    return pl.pallas_call(
        _decode_kernel,
        out_shape=jax.ShapeDtypeStruct((64, npix), jnp.float32),
        grid=(1,),
        in_specs=[
            _full_spec((LATENT_C, npix)),
            _full_spec((64, LATENT_C)),
            _full_spec((64, 1)),
        ],
        out_specs=_full_spec((64, npix)),
        compiler_params=pltpu.CompilerParams(dimension_semantics=("arbitrary",)),
    )(lat, wgT, bg)


def pallas_denoise_loop(rgb_pad, init_pad, temb, k0, k1, v0, v1, masks,
                        wir, wil, bi, wq, wo, bo, coefs_flat):
    """Entire DDIM loop in one pallas_call (grid=(1,), step loop in-kernel)."""
    Cp, npix = rgb_pad.shape
    n_steps = temb.shape[0]
    return pl.pallas_call(
        _denoise_kernel,
        out_shape=jax.ShapeDtypeStruct((Cp, npix), jnp.float32),
        grid=(1,),
        in_specs=[
            _full_spec((Cp, npix)),              # rgb latent (padded channels)
            _full_spec((Cp, npix)),              # initial noise latent
            _full_spec((n_steps, MODEL_C, 1)),   # temb per step
            _full_spec((MODEL_C, 1)),            # k0
            _full_spec((MODEL_C, 1)),            # k1
            _full_spec((MODEL_C, 1)),            # v0
            _full_spec((MODEL_C, 1)),            # v1
            _full_spec((9, 1, npix)),            # conv boundary masks
            _full_spec((MODEL_C, 9 * Cp)),       # conv_in rgb weights (bf16)
            _full_spec((MODEL_C, 9 * Cp)),       # conv_in lat weights (bf16)
            _full_spec((MODEL_C, 1)),            # conv_in bias
            _full_spec((MODEL_C, MODEL_C)),      # Wq^T (bf16)
            _full_spec((Cp, 9 * MODEL_C)),       # conv_out weights (bf16)
            _full_spec((Cp, 1)),                 # conv_out bias
            pl.BlockSpec(memory_space=pltpu.MemorySpace.SMEM),  # DDIM coefs
        ],
        out_specs=_full_spec((Cp, npix)),
        compiler_params=pltpu.CompilerParams(dimension_semantics=("arbitrary",)),
    )(rgb_pad, init_pad, temb, k0, k1, v0, v1, masks,
      wir, wil, bi, wq, wo, bo, coefs_flat)


# --------------------------------------------------------------------------
# Host-side constants: bilinear resampling matrices, conv boundary masks
# --------------------------------------------------------------------------
def _bilinear_matrix(in_size, out_size):
    """F.interpolate(mode='bilinear', align_corners=False) resampling matrix."""
    i = np.arange(out_size, dtype=np.float64)
    src = (i + 0.5) * (in_size / out_size) - 0.5
    src = np.clip(src, 0.0, in_size - 1)
    lo = np.floor(src).astype(np.int64)
    hi = np.minimum(lo + 1, in_size - 1)
    frac = src - lo
    M = np.zeros((out_size, in_size), np.float32)
    M[np.arange(out_size), lo] += (1.0 - frac)
    M[np.arange(out_size), hi] += frac
    return M


def _tap_masks(h, w, batch):
    """[9, 1, batch*h*w] 0/1 masks: valid source pixel for each 3x3 tap."""
    npix = batch * h * w
    p = np.arange(npix)
    loc = p % (h * w)
    y = loc // w
    x = loc % w
    masks = np.zeros((9, 1, npix), np.float32)
    for t, (dy, dx) in enumerate(_TAPS):
        ok = (y + dy >= 0) & (y + dy < h) & (x + dx >= 0) & (x + dx < w)
        masks[t, 0, :] = ok.astype(np.float32)
    return masks


# --------------------------------------------------------------------------
# DDIM scheduler (rescale_betas_zero_snr=True, timestep_spacing='trailing',
# v-prediction, eta=0) — coefficient math on host, update fused in-kernel.
# --------------------------------------------------------------------------
class DDIMScheduler:
    def __init__(self, num_train_timesteps=NUM_TRAIN_TIMESTEPS):
        self.T = num_train_timesteps
        betas = np.linspace(0.00085 ** 0.5, 0.012 ** 0.5, self.T, dtype=np.float64) ** 2
        alphas_cumprod = np.cumprod(1.0 - betas)
        abs_sqrt = np.sqrt(alphas_cumprod)
        a0, aT = abs_sqrt[0], abs_sqrt[-1]
        abs_sqrt = (abs_sqrt - aT) * (a0 / (a0 - aT))       # rescale_zero_terminal_snr
        self.alphas_cumprod = abs_sqrt ** 2
        self.final_alpha_cumprod = self.alphas_cumprod[0]   # set_alpha_to_one=False

    def set_timesteps(self, num_inference_steps):
        self.num_inference_steps = num_inference_steps
        step_ratio = self.T / num_inference_steps
        ts = np.round(np.arange(self.T, 0, -step_ratio)).astype(np.int64) - 1
        return ts

    def step_coefs(self, t):
        prev_t = t - self.T // self.num_inference_steps
        a_t = self.alphas_cumprod[t]
        a_p = self.alphas_cumprod[prev_t] if prev_t >= 0 else self.final_alpha_cumprod
        return np.array([math.sqrt(a_t), math.sqrt(1.0 - a_t),
                         math.sqrt(a_p), math.sqrt(1.0 - a_p)], np.float32)

    def all_step_coefs(self, timesteps):
        return np.stack([self.step_coefs(int(t)) for t in timesteps], axis=0)


# --------------------------------------------------------------------------
# Synthetic parameters
# --------------------------------------------------------------------------
def init_params(key):
    # TODO(synk): pretrained CLIP tokenizer/text-encoder, diffusers VAE and UNet
    # weights are not loadable here; replaced by synthetic deterministic params.
    ks = jax.random.split(key, 17)
    w = lambda k, shp, s=0.05: jax.random.normal(k, shp, jnp.float32) * s
    return {
        "enc_w": w(ks[0], (3 * 64, 2 * LATENT_C)),
        "enc_b": w(ks[1], (2 * LATENT_C,)),
        "dec_w": w(ks[2], (LATENT_C, 3 * 64)),
        "dec_b": w(ks[3], (3 * 64,)),
        "temb_w1": w(ks[4], (TEMB_DIM, MODEL_C)),
        "temb_b1": w(ks[5], (MODEL_C,)),
        "temb_w2": w(ks[6], (MODEL_C, MODEL_C)),
        "temb_b2": w(ks[7], (MODEL_C,)),
        "conv_in_w_rgb": w(ks[8], (9, LATENT_C, MODEL_C)),
        "conv_in_w_lat": w(ks[9], (9, LATENT_C, MODEL_C)),
        "conv_in_b": w(ks[10], (MODEL_C,)),
        "wq": w(ks[11], (MODEL_C, MODEL_C)),
        "wk": w(ks[12], (TEXT_DIM, MODEL_C)),
        "wv": w(ks[13], (TEXT_DIM, MODEL_C)),
        "conv_out_w": w(ks[14], (9, MODEL_C, LATENT_C)),
        "conv_out_b": w(ks[15], (LATENT_C,)),
        "empty_text_embed": w(ks[16], (1, TEXT_SEQ, TEXT_DIM), 1.0),
    }


# --------------------------------------------------------------------------
# Jitted Marigold forward
# --------------------------------------------------------------------------
def _forward_impl(imgs, params, noise_enc, init_lat, coefs_flat, temb_sin,
                  rh_dn, rwt_dn, rh_up, rwt_up, masks):
    B = imgs.shape[0]
    npix = B * LAT_HW
    f32 = jnp.float32
    bf16 = jnp.bfloat16
    pad_c = LATENT_C_PAD - LATENT_C

    # 1) F.interpolate(imgs, (IMG_DIM, IMG_DIM), 'bilinear').to(float16)
    image = pallas_resize(imgs, rh_dn, rwt_dn)
    image = image.astype(jnp.float16).astype(f32)

    # 2) VAE encode: 8x8 patchify conv -> posterior sample * CONST_SCALE
    patches = image.reshape(B, 3, LAT_H, 8, LAT_W, 8).transpose(0, 2, 4, 1, 3, 5)
    patchesT = patches.reshape(npix, 3 * 64).T                       # [192, npix]
    rgb_lat = pallas_vae_encode(patchesT, params["enc_w"], params["enc_b"],
                                noise_enc)                           # [4, npix]

    # 3) Timestep-embedding MLP (tiny -> plain jnp, no kernel launch)
    h = temb_sin @ params["temb_w1"] + params["temb_b1"]
    h = h * jax.nn.sigmoid(h)
    temb = (h @ params["temb_w2"] + params["temb_b2"]).astype(f32)
    temb = temb.reshape(-1, MODEL_C, 1)                              # [steps, 32, 1]

    # 4) Shared empty-prompt K/V (tiny -> plain jnp, identical across batch/steps)
    text = params["empty_text_embed"][0]                             # [S, TEXT_DIM]
    k = text @ params["wk"]
    v = text @ params["wv"]
    k0 = k[0].reshape(MODEL_C, 1); k1 = k[1].reshape(MODEL_C, 1)
    v0 = v[0].reshape(MODEL_C, 1); v1 = v[1].reshape(MODEL_C, 1)

    # 5) Lane-dense, channel-padded weight layouts for the fused denoise kernel
    wir = jnp.pad(jnp.transpose(params["conv_in_w_rgb"], (2, 0, 1)),
                  ((0, 0), (0, 0), (0, pad_c))).reshape(MODEL_C, 9 * LATENT_C_PAD)
    wil = jnp.pad(jnp.transpose(params["conv_in_w_lat"], (2, 0, 1)),
                  ((0, 0), (0, 0), (0, pad_c))).reshape(MODEL_C, 9 * LATENT_C_PAD)
    wo = jnp.pad(jnp.transpose(params["conv_out_w"], (2, 0, 1)).reshape(
        LATENT_C, 9 * MODEL_C), ((0, pad_c), (0, 0)))
    bi = params["conv_in_b"].reshape(MODEL_C, 1)
    bo = jnp.pad(params["conv_out_b"], (0, pad_c)).reshape(LATENT_C_PAD, 1)
    wq = params["wq"].T

    rgb_pad = jnp.pad(rgb_lat, ((0, pad_c), (0, 0)))                 # [8, npix]
    init_pad = jnp.pad(init_lat, ((0, pad_c), (0, 0)))               # [8, npix]

    lat = pallas_denoise_loop(
        rgb_pad, init_pad, temb, k0, k1, v0, v1, masks,
        wir.astype(bf16), wil.astype(bf16), bi,
        wq.astype(bf16), wo.astype(bf16), bo, coefs_flat)
    lat = lat[:LATENT_C, :]

    # latents.half() before decode (mimic fp16 pipeline truncation)
    lat = lat.astype(jnp.float16).astype(f32)

    # 6) VAE decode + channel mean + (x/2+0.5).clamp(0,1), fused; the channel
    #    mean is linear, so the 3 RGB decode planes are pre-combined.
    dec_w3 = params["dec_w"].reshape(LATENT_C, 3, 64)
    dec_b3 = params["dec_b"].reshape(3, 64)
    wgT = jnp.mean(dec_w3, axis=1).T                                 # [64, 4]
    bg = jnp.mean(dec_b3, axis=0).reshape(64, 1)
    gray = pallas_decode(lat, wgT, bg)                               # [64, npix]

    img = gray.reshape(8, 8, B, LAT_H, LAT_W).transpose(2, 3, 0, 4, 1)
    img = img.reshape(B, 1, IMG_DIM, IMG_DIM)

    # 7) F.interpolate back to the original (H, W)
    depth = pallas_resize(img, rh_up, rwt_up)
    return depth.astype(jnp.float16)


_forward_jit = jax.jit(_forward_impl)


def img_to_depth(imgs, params, sched, num_inference_steps=50, latents=None,
                 key=jax.random.PRNGKey(0)):
    B, C, H, W = imgs.shape
    k_enc, k_lat = jax.random.split(key)

    # Host-side static prep: timesteps, DDIM coefs, sinusoid embeddings,
    # resize matrices, conv boundary masks.
    timesteps = sched.set_timesteps(num_inference_steps)
    coefs_flat = jnp.asarray(sched.all_step_coefs(timesteps).reshape(-1), jnp.float32)

    half = TEMB_DIM // 2
    freqs = np.exp(-math.log(10000.0) * np.arange(half, dtype=np.float64) / half)
    args = timesteps[:, None].astype(np.float64) * freqs[None, :]
    temb_sin = jnp.asarray(
        np.concatenate([np.sin(args), np.cos(args)], axis=1).astype(np.float32))

    rh_dn = jnp.asarray(_bilinear_matrix(H, IMG_DIM))
    rwt_dn = jnp.asarray(_bilinear_matrix(W, IMG_DIM).T)
    rh_up = jnp.asarray(_bilinear_matrix(IMG_DIM, H))
    rwt_up = jnp.asarray(_bilinear_matrix(IMG_DIM, W).T)
    masks = jnp.asarray(_tap_masks(LAT_H, LAT_W, B))

    noise_enc = jax.random.normal(k_enc, (LATENT_C, B * LAT_HW), jnp.float32)
    if latents is None:
        init_lat = jax.random.normal(k_lat, (LATENT_C, B * LAT_HW), jnp.float32)
    else:
        init_lat = jnp.transpose(latents, (1, 0, 2, 3)).reshape(
            LATENT_C, B * LAT_HW).astype(jnp.float32)

    return _forward_jit(imgs.astype(jnp.float32), params, noise_enc, init_lat,
                        coefs_flat, temb_sin, rh_dn, rwt_dn, rh_up, rwt_up, masks)


def marigold_forward(imgs, params, sched, num_inference_steps=50, latents=None,
                     key=jax.random.PRNGKey(0)):
    return img_to_depth(imgs, params, sched, num_inference_steps, latents, key)


if __name__ == "__main__":
    key = jax.random.PRNGKey(0)
    k_img, k_param, k_noise = jax.random.split(key, 3)
    imgs = jax.random.uniform(k_img, (2, 3, 16, 16), jnp.float32)   # BS 3 H W
    params = init_params(k_param)
    sched = DDIMScheduler(NUM_TRAIN_TIMESTEPS)
    depth = marigold_forward(imgs, params, sched, num_inference_steps=4, key=k_noise)
    depth = jax.block_until_ready(depth)
    assert depth.shape == (2, 1, 16, 16), depth.shape
    assert bool(jnp.all(jnp.isfinite(depth.astype(jnp.float32))))
    print("KERNEL_OK")
</pallas_src>

<mosaic_0001>
module attributes {stable_mosaic.version = 11 : i64} {
  func.func @_resize_kernel(%arg0: i32, %arg1: memref<6x16x16xf32, #tpu.memory_space<vmem>>, %arg2: memref<64x16xf32, #tpu.memory_space<vmem>>, %arg3: memref<16x64xf32, #tpu.memory_space<vmem>>, %arg4: memref<6x64x64xf32, #tpu.memory_space<vmem>>) attributes {dimension_semantics = [#tpu.dimension_semantics<arbitrary>], iteration_bounds = array<i64: 1>, scalar_prefetch = 0 : i64, scratch_operands = 0 : i64, tpu.core_type = #tpu.core_type<tc>, window_params = [{pipeline_mode = #tpu.pipeline_mode<synchronous>, transform_indices = @transform_0, window_bounds = array<i64: 6, 16, 16>}, {pipeline_mode = #tpu.pipeline_mode<synchronous>, transform_indices = @transform_1, window_bounds = array<i64: 64, 16>}, {pipeline_mode = #tpu.pipeline_mode<synchronous>, transform_indices = @transform_2, window_bounds = array<i64: 16, 64>}, {pipeline_mode = #tpu.pipeline_mode<synchronous>, transform_indices = @transform_3, window_bounds = array<i64: 6, 64, 64>}]} {
    %c0 = arith.constant 0 : index
    %c0_0 = arith.constant 0 : index
    %c0_1 = arith.constant 0 : index
    %0 = vector.load %arg1[%c0, %c0_0, %c0_1] : memref<6x16x16xf32, #tpu.memory_space<vmem>>, vector<1x16x16xf32>
    %1 = vector.shape_cast %0 : vector<1x16x16xf32> to vector<16x16xf32>
    %c0_2 = arith.constant 0 : index
    %c0_3 = arith.constant 0 : index
    %2 = vector.load %arg3[%c0_2, %c0_3] : memref<16x64xf32, #tpu.memory_space<vmem>>, vector<16x64xf32>
    %cst = arith.constant dense<0.000000e+00> : vector<16x64xf32>
    %3 = tpu.matmul %1, %2, %cst {dimension_numbers = #tpu.dot_dimension_numbers<[1], [0], [0], [1], [0, 0, 1, 1], [], []>} : vector<16x16xf32>, vector<16x64xf32>, vector<16x64xf32> -> vector<16x64xf32>
    %c0_4 = arith.constant 0 : index
    %c0_5 = arith.constant 0 : index
    %4 = vector.load %arg2[%c0_4, %c0_5] : memref<64x16xf32, #tpu.memory_space<vmem>>, vector<64x16xf32>
    %cst_6 = arith.constant dense<0.000000e+00> : vector<64x64xf32>
    %5 = tpu.matmul %4, %3, %cst_6 {dimension_numbers = #tpu.dot_dimension_numbers<[1], [0], [0], [1], [0, 0, 1, 1], [], []>} : vector<64x16xf32>, vector<16x64xf32>, vector<64x64xf32> -> vector<64x64xf32>
    %c0_7 = arith.constant 0 : index
    %c0_8 = arith.constant 0 : index
    %c0_9 = arith.constant 0 : index
    %6 = vector.load %arg4[%c0_7, %c0_8, %c0_9] : memref<6x64x64xf32, #tpu.memory_space<vmem>>, vector<1x64x64xf32>
    %7 = vector.shape_cast %6 : vector<1x64x64xf32> to vector<64x64xf32>
    %8 = vector.shape_cast %5 : vector<64x64xf32> to vector<1x64x64xf32>
    tpu.vector_store %arg4[%c0_7, %c0_8, %c0_9], %8 {strides = array<i32>} : memref<6x64x64xf32, #tpu.memory_space<vmem>>, vector<1x64x64xf32>,
    %c1 = arith.constant 1 : index
    %c0_10 = arith.constant 0 : index
    %c0_11 = arith.constant 0 : index
    %9 = vector.load %arg1[%c1, %c0_10, %c0_11] : memref<6x16x16xf32, #tpu.memory_space<vmem>>, vector<1x16x16xf32>
    %10 = vector.shape_cast %9 : vector<1x16x16xf32> to vector<16x16xf32>
    %c0_12 = arith.constant 0 : index
    %c0_13 = arith.constant 0 : index
    %11 = vector.load %arg3[%c0_12, %c0_13] : memref<16x64xf32, #tpu.memory_space<vmem>>, vector<16x64xf32>
    %cst_14 = arith.constant dense<0.000000e+00> : vector<16x64xf32>
    %12 = tpu.matmul %10, %11, %cst_14 {dimension_numbers = #tpu.dot_dimension_numbers<[1], [0], [0], [1], [0, 0, 1, 1], [], []>} : vector<16x16xf32>, vector<16x64xf32>, vector<16x64xf32> -> vector<16x64xf32>
    %c0_15 = arith.constant 0 : index
    %c0_16 = arith.constant 0 : index
    %13 = vector.load %arg2[%c0_15, %c0_16] : memref<64x16xf32, #tpu.memory_space<vmem>>, vector<64x16xf32>
    %cst_17 = arith.constant dense<0.000000e+00> : vector<64x64xf32>
    %14 = tpu.matmul %13, %12, %cst_17 {dimension_numbers = #tpu.dot_dimension_numbers<[1], [0], [0], [1], [0, 0, 1, 1], [], []>} : vector<64x16xf32>, vector<16x64xf32>, vector<64x64xf32> -> vector<64x64xf32>
    %c1_18 = arith.constant 1 : index
    %c0_19 = arith.constant 0 : index
    %c0_20 = arith.constant 0 : index
    %15 = vector.load %arg4[%c1_18, %c0_19, %c0_20] : memref<6x64x64xf32, #tpu.memory_space<vmem>>, vector<1x64x64xf32>
    %16 = vector.shape_cast %15 : vector<1x64x64xf32> to vector<64x64xf32>
    %17 = vector.shape_cast %14 : vector<64x64xf32> to vector<1x64x64xf32>
    tpu.vector_store %arg4[%c1_18, %c0_19, %c0_20], %17 {strides = array<i32>} : memref<6x64x64xf32, #tpu.memory_space<vmem>>, vector<1x64x64xf32>,
    %c2 = arith.constant 2 : index
    %c0_21 = arith.constant 0 : index
    %c0_22 = arith.constant 0 : index
    %18 = vector.load %arg1[%c2, %c0_21, %c0_22] : memref<6x16x16xf32, #tpu.memory_space<vmem>>, vector<1x16x16xf32>
    %19 = vector.shape_cast %18 : vector<1x16x16xf32> to vector<16x16xf32>
    %c0_23 = arith.constant 0 : index
    %c0_24 = arith.constant 0 : index
    %20 = vector.load %arg3[%c0_23, %c0_24] : memref<16x64xf32, #tpu.memory_space<vmem>>, vector<16x64xf32>
    %cst_25 = arith.constant dense<0.000000e+00> : vector<16x64xf32>
    %21 = tpu.matmul %19, %20, %cst_25 {dimension_numbers = #tpu.dot_dimension_numbers<[1], [0], [0], [1], [0, 0, 1, 1], [], []>} : vector<16x16xf32>, vector<16x64xf32>, vector<16x64xf32> -> vector<16x64xf32>
    %c0_26 = arith.constant 0 : index
    %c0_27 = arith.constant 0 : index
    %22 = vector.load %arg2[%c0_26, %c0_27] : memref<64x16xf32, #tpu.memory_space<vmem>>, vector<64x16xf32>
    %cst_28 = arith.constant dense<0.000000e+00> : vector<64x64xf32>
    %23 = tpu.matmul %22, %21, %cst_28 {dimension_numbers = #tpu.dot_dimension_numbers<[1], [0], [0], [1], [0, 0, 1, 1], [], []>} : vector<64x16xf32>, vector<16x64xf32>, vector<64x64xf32> -> vector<64x64xf32>
    %c2_29 = arith.constant 2 : index
    %c0_30 = arith.constant 0 : index
    %c0_31 = arith.constant 0 : index
    %24 = vector.load %arg4[%c2_29, %c0_30, %c0_31] : memref<6x64x64xf32, #tpu.memory_space<vmem>>, vector<1x64x64xf32>
    %25 = vector.shape_cast %24 : vector<1x64x64xf32> to vector<64x64xf32>
    %26 = vector.shape_cast %23 : vector<64x64xf32> to vector<1x64x64xf32>
    tpu.vector_store %arg4[%c2_29, %c0_30, %c0_31], %26 {strides = array<i32>} : memref<6x64x64xf32, #tpu.memory_space<vmem>>, vector<1x64x64xf32>,
    %c3 = arith.constant 3 : index
    %c0_32 = arith.constant 0 : index
    %c0_33 = arith.constant 0 : index
    %27 = vector.load %arg1[%c3, %c0_32, %c0_33] : memref<6x16x16xf32, #tpu.memory_space<vmem>>, vector<1x16x16xf32>
    %28 = vector.shape_cast %27 : vector<1x16x16xf32> to vector<16x16xf32>
    %c0_34 = arith.constant 0 : index
    %c0_35 = arith.constant 0 : index
    %29 = vector.load %arg3[%c0_34, %c0_35] : memref<16x64xf32, #tpu.memory_space<vmem>>, vector<16x64xf32>
    %cst_36 = arith.constant dense<0.000000e+00> : vector<16x64xf32>
    %30 = tpu.matmul %28, %29, %cst_36 {dimension_numbers = #tpu.dot_dimension_numbers<[1], [0], [0], [1], [0, 0, 1, 1], [], []>} : vector<16x16xf32>, vector<16x64xf32>, vector<16x64xf32> -> vector<16x64xf32>
    %c0_37 = arith.constant 0 : index
    %c0_38 = arith.constant 0 : index
    %31 = vector.load %arg2[%c0_37, %c0_38] : memref<64x16xf32, #tpu.memory_space<vmem>>, vector<64x16xf32>
    %cst_39 = arith.constant dense<0.000000e+00> : vector<64x64xf32>
    %32 = tpu.matmul %31, %30, %cst_39 {dimension_numbers = #tpu.dot_dimension_numbers<[1], [0], [0], [1], [0, 0, 1, 1], [], []>} : vector<64x16xf32>, vector<16x64xf32>, vector<64x64xf32> -> vector<64x64xf32>
    %c3_40 = arith.constant 3 : index
    %c0_41 = arith.constant 0 : index
    %c0_42 = arith.constant 0 : index
    %33 = vector.load %arg4[%c3_40, %c0_41, %c0_42] : memref<6x64x64xf32, #tpu.memory_space<vmem>>, vector<1x64x64xf32>
    %34 = vector.shape_cast %33 : vector<1x64x64xf32> to vector<64x64xf32>
    %35 = vector.shape_cast %32 : vector<64x64xf32> to vector<1x64x64xf32>
    tpu.vector_store %arg4[%c3_40, %c0_41, %c0_42], %35 {strides = array<i32>} : memref<6x64x64xf32, #tpu.memory_space<vmem>>, vector<1x64x64xf32>,
    %c4 = arith.constant 4 : index
    %c0_43 = arith.constant 0 : index
    %c0_44 = arith.constant 0 : index
    %36 = vector.load %arg1[%c4, %c0_43, %c0_44] : memref<6x16x16xf32, #tpu.memory_space<vmem>>, vector<1x16x16xf32>
    %37 = vector.shape_cast %36 : vector<1x16x16xf32> to vector<16x16xf32>
    %c0_45 = arith.constant 0 : index
    %c0_46 = arith.constant 0 : index
    %38 = vector.load %arg3[%c0_45, %c0_46] : memref<16x64xf32, #tpu.memory_space<vmem>>, vector<16x64xf32>
    %cst_47 = arith.constant dense<0.000000e+00> : vector<16x64xf32>
    %39 = tpu.matmul %37, %38, %cst_47 {dimension_numbers = #tpu.dot_dimension_numbers<[1], [0], [0], [1], [0, 0, 1, 1], [], []>} : vector<16x16xf32>, vector<16x64xf32>, vector<16x64xf32> -> vector<16x64xf32>
    %c0_48 = arith.constant 0 : index
    %c0_49 = arith.constant 0 : index
    %40 = vector.load %arg2[%c0_48, %c0_49] : memref<64x16xf32, #tpu.memory_space<vmem>>, vector<64x16xf32>
    %cst_50 = arith.constant dense<0.000000e+00> : vector<64x64xf32>
    %41 = tpu.matmul %40, %39, %cst_50 {dimension_numbers = #tpu.dot_dimension_numbers<[1], [0], [0], [1], [0, 0, 1, 1], [], []>} : vector<64x16xf32>, vector<16x64xf32>, vector<64x64xf32> -> vector<64x64xf32>
    %c4_51 = arith.constant 4 : index
    %c0_52 = arith.constant 0 : index
    %c0_53 = arith.constant 0 : index
    %42 = vector.load %arg4[%c4_51, %c0_52, %c0_53] : memref<6x64x64xf32, #tpu.memory_space<vmem>>, vector<1x64x64xf32>
    %43 = vector.shape_cast %42 : vector<1x64x64xf32> to vector<64x64xf32>
    %44 = vector.shape_cast %41 : vector<64x64xf32> to vector<1x64x64xf32>
    tpu.vector_store %arg4[%c4_51, %c0_52, %c0_53], %44 {strides = array<i32>} : memref<6x64x64xf32, #tpu.memory_space<vmem>>, vector<1x64x64xf32>,
    %c5 = arith.constant 5 : index
    %c0_54 = arith.constant 0 : index
    %c0_55 = arith.constant 0 : index
    %45 = vector.load %arg1[%c5, %c0_54, %c0_55] : memref<6x16x16xf32, #tpu.memory_space<vmem>>, vector<1x16x16xf32>
    %46 = vector.shape_cast %45 : vector<1x16x16xf32> to vector<16x16xf32>
    %c0_56 = arith.constant 0 : index
    %c0_57 = arith.constant 0 : index
    %47 = vector.load %arg3[%c0_56, %c0_57] : memref<16x64xf32, #tpu.memory_space<vmem>>, vector<16x64xf32>
    %cst_58 = arith.constant dense<0.000000e+00> : vector<16x64xf32>
    %48 = tpu.matmul %46, %47, %cst_58 {dimension_numbers = #tpu.dot_dimension_numbers<[1], [0], [0], [1], [0, 0, 1, 1], [], []>} : vector<16x16xf32>, vector<16x64xf32>, vector<16x64xf32> -> vector<16x64xf32>
    %c0_59 = arith.constant 0 : index
    %c0_60 = arith.constant 0 : index
    %49 = vector.load %arg2[%c0_59, %c0_60] : memref<64x16xf32, #tpu.memory_space<vmem>>, vector<64x16xf32>
    %cst_61 = arith.constant dense<0.000000e+00> : vector<64x64xf32>
    %50 = tpu.matmul %49, %48, %cst_61 {dimension_numbers = #tpu.dot_dimension_numbers<[1], [0], [0], [1], [0, 0, 1, 1], [], []>} : vector<64x16xf32>, vector<16x64xf32>, vector<64x64xf32> -> vector<64x64xf32>
    %c5_62 = arith.constant 5 : index
    %c0_63 = arith.constant 0 : index
    %c0_64 = arith.constant 0 : index
    %51 = vector.load %arg4[%c5_62, %c0_63, %c0_64] : memref<6x64x64xf32, #tpu.memory_space<vmem>>, vector<1x64x64xf32>
    %52 = vector.shape_cast %51 : vector<1x64x64xf32> to vector<64x64xf32>
    %53 = vector.shape_cast %50 : vector<64x64xf32> to vector<1x64x64xf32>
    tpu.vector_store %arg4[%c5_62, %c0_63, %c0_64], %53 {strides = array<i32>} : memref<6x64x64xf32, #tpu.memory_space<vmem>>, vector<1x64x64xf32>,
    return
  }
  func.func @transform_0(%arg0: i32) -> (i32, i32, i32) {
    %c0_i32 = arith.constant 0 : i32
    %c0_i32_0 = arith.constant 0 : i32
    %c0_i32_1 = arith.constant 0 : i32
    %c0_i32_2 = arith.constant 0 : i32
    return %c0_i32, %c0_i32_0, %c0_i32_1 : i32, i32, i32
  }
  func.func @transform_1(%arg0: i32) -> (i32, i32) {
    %c0_i32 = arith.constant 0 : i32
    %c0_i32_0 = arith.constant 0 : i32
    %c0_i32_1 = arith.constant 0 : i32
    return %c0_i32, %c0_i32_0 : i32, i32
  }
  func.func @transform_2(%arg0: i32) -> (i32, i32) {
    %c0_i32 = arith.constant 0 : i32
    %c0_i32_0 = arith.constant 0 : i32
    %c0_i32_1 = arith.constant 0 : i32
    return %c0_i32, %c0_i32_0 : i32, i32
  }
  func.func @transform_3(%arg0: i32) -> (i32, i32, i32) {
    %c0_i32 = arith.constant 0 : i32
    %c0_i32_0 = arith.constant 0 : i32
    %c0_i32_1 = arith.constant 0 : i32
    %c0_i32_2 = arith.constant 0 : i32
    return %c0_i32, %c0_i32_0, %c0_i32_1 : i32, i32, i32
  }
}

module attributes {stable_mosaic.version = 11 : i64} {
  func.func @_vae_encode_kernel(%arg0: i32, %arg1: memref<192x128xf32, #tpu.memory_space<vmem>>, %arg2: memref<8x192xf32, #tpu.memory_space<vmem>>, %arg3: memref<8x1xf32, #tpu.memory_space<vmem>>, %arg4: memref<4x128xf32, #tpu.memory_space<vmem>>, %arg5: memref<4x128xf32, #tpu.memory_space<vmem>>) attributes {dimension_semantics = [#tpu.dimension_semantics<arbitrary>], iteration_bounds = array<i64: 1>, scalar_prefetch = 0 : i64, scratch_operands = 0 : i64, tpu.core_type = #tpu.core_type<tc>, window_params = [{pipeline_mode = #tpu.pipeline_mode<synchronous>, transform_indices = @transform_0, window_bounds = array<i64: 192, 128>}, {pipeline_mode = #tpu.pipeline_mode<synchronous>, transform_indices = @transform_1, window_bounds = array<i64: 8, 192>}, {pipeline_mode = #tpu.pipeline_mode<synchronous>, transform_indices = @transform_2, window_bounds = array<i64: 8, 1>}, {pipeline_mode = #tpu.pipeline_mode<synchronous>, transform_indices = @transform_3, window_bounds = array<i64: 4, 128>}, {pipeline_mode = #tpu.pipeline_mode<synchronous>, transform_indices = @transform_4, window_bounds = array<i64: 4, 128>}]} {
    %c0 = arith.constant 0 : index
    %c0_0 = arith.constant 0 : index
    %0 = vector.load %arg2[%c0, %c0_0] : memref<8x192xf32, #tpu.memory_space<vmem>>, vector<8x192xf32>
    %c0_1 = arith.constant 0 : index
    %c0_2 = arith.constant 0 : index
    %1 = vector.load %arg1[%c0_1, %c0_2] : memref<192x128xf32, #tpu.memory_space<vmem>>, vector<192x128xf32>
    %cst = arith.constant dense<0.000000e+00> : vector<8x128xf32>
    %2 = tpu.matmul %0, %1, %cst {dimension_numbers = #tpu.dot_dimension_numbers<[1], [0], [0], [1], [0, 0, 1, 1], [], []>} : vector<8x192xf32>, vector<192x128xf32>, vector<8x128xf32> -> vector<8x128xf32>
    %c0_3 = arith.constant 0 : index
    %c0_4 = arith.constant 0 : index
    %3 = vector.load %arg3[%c0_3, %c0_4] : memref<8x1xf32, #tpu.memory_space<vmem>>, vector<8x1xf32>
    %4 = vector.broadcast %3 : vector<8x1xf32> to vector<8x128xf32>
    %5 = arith.addf %2, %4 : vector<8x128xf32>
    %6 = vector.extract_strided_slice %5 {offsets = [0, 0], sizes = [4, 128], strides = [1, 1]} : vector<8x128xf32> to vector<4x128xf32>
    %7 = vector.extract_strided_slice %5 {offsets = [4, 0], sizes = [4, 128], strides = [1, 1]} : vector<8x128xf32> to vector<4x128xf32>
    %cst_5 = arith.constant -3.000000e+01 : f32
    %cst_6 = arith.constant 2.000000e+01 : f32
    %8 = vector.broadcast %cst_5 : f32 to vector<4x128xf32>
    %9 = arith.maximumf %8, %7 : vector<4x128xf32>
    %10 = vector.broadcast %cst_6 : f32 to vector<4x128xf32>
    %11 = arith.minimumf %10, %9 : vector<4x128xf32>
    %cst_7 = arith.constant 5.000000e-01 : f32
    %12 = vector.broadcast %cst_7 : f32 to vector<4x128xf32>
    %13 = arith.mulf %12, %11 : vector<4x128xf32>
    %14 = math.exp %13 : vector<4x128xf32>
    %c0_8 = arith.constant 0 : index
    %c0_9 = arith.constant 0 : index
    %15 = vector.load %arg4[%c0_8, %c0_9] : memref<4x128xf32, #tpu.memory_space<vmem>>, vector<4x128xf32>
    %16 = arith.mulf %14, %15 : vector<4x128xf32>
    %17 = arith.addf %6, %16 : vector<4x128xf32>
    %cst_10 = arith.constant 1.821500e-01 : f32
    %18 = vector.broadcast %cst_10 : f32 to vector<4x128xf32>
    %19 = arith.mulf %17, %18 : vector<4x128xf32>
    %c0_11 = arith.constant 0 : index
    %c0_12 = arith.constant 0 : index
    %20 = vector.load %arg5[%c0_11, %c0_12] : memref<4x128xf32, #tpu.memory_space<vmem>>, vector<4x128xf32>
    tpu.vector_store %arg5[%c0_11, %c0_12], %19 {strides = array<i32>} : memref<4x128xf32, #tpu.memory_space<vmem>>, vector<4x128xf32>,
    return
  }
  func.func @transform_0(%arg0: i32) -> (i32, i32) {
    %c0_i32 = arith.constant 0 : i32
    %c0_i32_0 = arith.constant 0 : i32
    %c0_i32_1 = arith.constant 0 : i32
    return %c0_i32, %c0_i32_0 : i32, i32
  }
  func.func @transform_1(%arg0: i32) -> (i32, i32) {
    %c0_i32 = arith.constant 0 : i32
    %c0_i32_0 = arith.constant 0 : i32
    %c0_i32_1 = arith.constant 0 : i32
    return %c0_i32, %c0_i32_0 : i32, i32
  }
  func.func @transform_2(%arg0: i32) -> (i32, i32) {
    %c0_i32 = arith.constant 0 : i32
    %c0_i32_0 = arith.constant 0 : i32
    %c0_i32_1 = arith.constant 0 : i32
    return %c0_i32, %c0_i32_0 : i32, i32
  }
  func.func @transform_3(%arg0: i32) -> (i32, i32) {
    %c0_i32 = arith.constant 0 : i32
    %c0_i32_0 = arith.constant 0 : i32
    %c0_i32_1 = arith.constant 0 : i32
    return %c0_i32, %c0_i32_0 : i32, i32
  }
  func.func @transform_4(%arg0: i32) -> (i32, i32) {
    %c0_i32 = arith.constant 0 : i32
    %c0_i32_0 = arith.constant 0 : i32
    %c0_i32_1 = arith.constant 0 : i32
    return %c0_i32, %c0_i32_0 : i32, i32
  }
}

module attributes {stable_mosaic.version = 11 : i64} {
  func.func @_denoise_kernel(%arg0: i32, %arg1: memref<8x128xf32, #tpu.memory_space<vmem>>, %arg2: memref<8x128xf32, #tpu.memory_space<vmem>>, %arg3: memref<4x32x1xf32, #tpu.memory_space<vmem>>, %arg4: memref<32x1xf32, #tpu.memory_space<vmem>>, %arg5: memref<32x1xf32, #tpu.memory_space<vmem>>, %arg6: memref<32x1xf32, #tpu.memory_space<vmem>>, %arg7: memref<32x1xf32, #tpu.memory_space<vmem>>, %arg8: memref<9x1x128xf32, #tpu.memory_space<vmem>>, %arg9: memref<32x72xbf16, #tpu.memory_space<vmem>>, %arg10: memref<32x72xbf16, #tpu.memory_space<vmem>>, %arg11: memref<32x1xf32, #tpu.memory_space<vmem>>, %arg12: memref<32x32xbf16, #tpu.memory_space<vmem>>, %arg13: memref<8x288xbf16, #tpu.memory_space<vmem>>, %arg14: memref<8x1xf32, #tpu.memory_space<vmem>>, %arg15: memref<16xf32, #tpu.memory_space<smem>>, %arg16: memref<8x128xf32, #tpu.memory_space<vmem>>) attributes {dimension_semantics = [#tpu.dimension_semantics<arbitrary>], iteration_bounds = array<i64: 1>, scalar_prefetch = 0 : i64, scratch_operands = 0 : i64, tpu.core_type = #tpu.core_type<tc>, window_params = [{pipeline_mode = #tpu.pipeline_mode<synchronous>, transform_indices = @transform_0, window_bounds = array<i64: 8, 128>}, {pipeline_mode = #tpu.pipeline_mode<synchronous>, transform_indices = @transform_1, window_bounds = array<i64: 8, 128>}, {pipeline_mode = #tpu.pipeline_mode<synchronous>, transform_indices = @transform_2, window_bounds = array<i64: 4, 32, 1>}, {pipeline_mode = #tpu.pipeline_mode<synchronous>, transform_indices = @transform_3, window_bounds = array<i64: 32, 1>}, {pipeline_mode = #tpu.pipeline_mode<synchronous>, transform_indices = @transform_4, window_bounds = array<i64: 32, 1>}, {pipeline_mode = #tpu.pipeline_mode<synchronous>, transform_indices = @transform_5, window_bounds = array<i64: 32, 1>}, {pipeline_mode = #tpu.pipeline_mode<synchronous>, transform_indices = @transform_6, window_bounds = array<i64: 32, 1>}, {pipeline_mode = #tpu.pipeline_mode<synchronous>, transform_indices = @transform_7, window_bounds = array<i64: 9, 1, 128>}, {pipeline_mode = #tpu.pipeline_mode<synchronous>, transform_indices = @transform_8, window_bounds = array<i64: 32, 72>}, {pipeline_mode = #tpu.pipeline_mode<synchronous>, transform_indices = @transform_9, window_bounds = array<i64: 32, 72>}, {pipeline_mode = #tpu.pipeline_mode<synchronous>, transform_indices = @transform_10, window_bounds = array<i64: 32, 1>}, {pipeline_mode = #tpu.pipeline_mode<synchronous>, transform_indices = @transform_11, window_bounds = array<i64: 32, 32>}, {pipeline_mode = #tpu.pipeline_mode<synchronous>, transform_indices = @transform_12, window_bounds = array<i64: 8, 288>}, {pipeline_mode = #tpu.pipeline_mode<synchronous>, transform_indices = @transform_13, window_bounds = array<i64: 8, 1>}, {transform_indices = @transform_14, window_bounds = array<i64: 16>}, {pipeline_mode = #tpu.pipeline_mode<synchronous>, transform_indices = @transform_15, window_bounds = array<i64: 8, 128>}]} {
    %c0 = arith.constant 0 : index
    %c0_0 = arith.constant 0 : index
    %c0_1 = arith.constant 0 : index
    %0 = vector.load %arg8[%c0, %c0_0, %c0_1] : memref<9x1x128xf32, #tpu.memory_space<vmem>>, vector<1x1x128xf32>
    %1 = vector.shape_cast %0 : vector<1x1x128xf32> to vector<1x128xf32>
    %c1 = arith.constant 1 : index
    %c0_2 = arith.constant 0 : index
    %c0_3 = arith.constant 0 : index
    %2 = vector.load %arg8[%c1, %c0_2, %c0_3] : memref<9x1x128xf32, #tpu.memory_space<vmem>>, vector<1x1x128xf32>
    %3 = vector.shape_cast %2 : vector<1x1x128xf32> to vector<1x128xf32>
    %c2 = arith.constant 2 : index
    %c0_4 = arith.constant 0 : index
    %c0_5 = arith.constant 0 : index
    %4 = vector.load %arg8[%c2, %c0_4, %c0_5] : memref<9x1x128xf32, #tpu.memory_space<vmem>>, vector<1x1x128xf32>
    %5 = vector.shape_cast %4 : vector<1x1x128xf32> to vector<1x128xf32>
    %c3 = arith.constant 3 : index
    %c0_6 = arith.constant 0 : index
    %c0_7 = arith.constant 0 : index
    %6 = vector.load %arg8[%c3, %c0_6, %c0_7] : memref<9x1x128xf32, #tpu.memory_space<vmem>>, vector<1x1x128xf32>
    %7 = vector.shape_cast %6 : vector<1x1x128xf32> to vector<1x128xf32>
    %c4 = arith.constant 4 : index
    %c0_8 = arith.constant 0 : index
    %c0_9 = arith.constant 0 : index
    %8 = vector.load %arg8[%c4, %c0_8, %c0_9] : memref<9x1x128xf32, #tpu.memory_space<vmem>>, vector<1x1x128xf32>
    %9 = vector.shape_cast %8 : vector<1x1x128xf32> to vector<1x128xf32>
    %c5 = arith.constant 5 : index
    %c0_10 = arith.constant 0 : index
    %c0_11 = arith.constant 0 : index
    %10 = vector.load %arg8[%c5, %c0_10, %c0_11] : memref<9x1x128xf32, #tpu.memory_space<vmem>>, vector<1x1x128xf32>
    %11 = vector.shape_cast %10 : vector<1x1x128xf32> to vector<1x128xf32>
    %c6 = arith.constant 6 : index
    %c0_12 = arith.constant 0 : index
    %c0_13 = arith.constant 0 : index
    %12 = vector.load %arg8[%c6, %c0_12, %c0_13] : memref<9x1x128xf32, #tpu.memory_space<vmem>>, vector<1x1x128xf32>
    %13 = vector.shape_cast %12 : vector<1x1x128xf32> to vector<1x128xf32>
    %c7 = arith.constant 7 : index
    %c0_14 = arith.constant 0 : index
    %c0_15 = arith.constant 0 : index
    %14 = vector.load %arg8[%c7, %c0_14, %c0_15] : memref<9x1x128xf32, #tpu.memory_space<vmem>>, vector<1x1x128xf32>
    %15 = vector.shape_cast %14 : vector<1x1x128xf32> to vector<1x128xf32>
    %c8 = arith.constant 8 : index
    %c0_16 = arith.constant 0 : index
    %c0_17 = arith.constant 0 : index
    %16 = vector.load %arg8[%c8, %c0_16, %c0_17] : memref<9x1x128xf32, #tpu.memory_space<vmem>>, vector<1x1x128xf32>
    %17 = vector.shape_cast %16 : vector<1x1x128xf32> to vector<1x128xf32>
    %c0_18 = arith.constant 0 : index
    %c0_19 = arith.constant 0 : index
    %18 = vector.load %arg9[%c0_18, %c0_19] : memref<32x72xbf16, #tpu.memory_space<vmem>>, vector<32x72xbf16>
    %c0_20 = arith.constant 0 : index
    %c0_21 = arith.constant 0 : index
    %19 = vector.load %arg1[%c0_20, %c0_21] : memref<8x128xf32, #tpu.memory_space<vmem>>, vector<8x128xf32>
    %c9_i32 = arith.constant 9 : i32
    %20 = tpu.dynamic_rotate %19 by %c9_i32 dim 1 : vector<8x128xf32>, i32 -> vector<8x128xf32>
    %21 = vector.broadcast %1 : vector<1x128xf32> to vector<8x128xf32>
    %22 = arith.mulf %20, %21 : vector<8x128xf32>
    %c8_i32 = arith.constant 8 : i32
    %23 = tpu.dynamic_rotate %19 by %c8_i32 dim 1 : vector<8x128xf32>, i32 -> vector<8x128xf32>
    %24 = vector.broadcast %3 : vector<1x128xf32> to vector<8x128xf32>
    %25 = arith.mulf %23, %24 : vector<8x128xf32>
    %c7_i32 = arith.constant 7 : i32
    %26 = tpu.dynamic_rotate %19 by %c7_i32 dim 1 : vector<8x128xf32>, i32 -> vector<8x128xf32>
    %27 = vector.broadcast %5 : vector<1x128xf32> to vector<8x128xf32>
    %28 = arith.mulf %26, %27 : vector<8x128xf32>
    %c1_i32 = arith.constant 1 : i32
    %29 = tpu.dynamic_rotate %19 by %c1_i32 dim 1 : vector<8x128xf32>, i32 -> vector<8x128xf32>
    %30 = vector.broadcast %7 : vector<1x128xf32> to vector<8x128xf32>
    %31 = arith.mulf %29, %30 : vector<8x128xf32>
    %32 = vector.broadcast %9 : vector<1x128xf32> to vector<8x128xf32>
    %33 = arith.mulf %19, %32 : vector<8x128xf32>
    %c127_i32 = arith.constant 127 : i32
    %34 = tpu.dynamic_rotate %19 by %c127_i32 dim 1 : vector<8x128xf32>, i32 -> vector<8x128xf32>
    %35 = vector.broadcast %11 : vector<1x128xf32> to vector<8x128xf32>
    %36 = arith.mulf %34, %35 : vector<8x128xf32>
    %c121_i32 = arith.constant 121 : i32
    %37 = tpu.dynamic_rotate %19 by %c121_i32 dim 1 : vector<8x128xf32>, i32 -> vector<8x128xf32>
    %38 = vector.broadcast %13 : vector<1x128xf32> to vector<8x128xf32>
    %39 = arith.mulf %37, %38 : vector<8x128xf32>
    %c120_i32 = arith.constant 120 : i32
    %40 = tpu.dynamic_rotate %19 by %c120_i32 dim 1 : vector<8x128xf32>, i32 -> vector<8x128xf32>
    %41 = vector.broadcast %15 : vector<1x128xf32> to vector<8x128xf32>
    %42 = arith.mulf %40, %41 : vector<8x128xf32>
    %c119_i32 = arith.constant 119 : i32
    %43 = tpu.dynamic_rotate %19 by %c119_i32 dim 1 : vector<8x128xf32>, i32 -> vector<8x128xf32>
    %44 = vector.broadcast %17 : vector<1x128xf32> to vector<8x128xf32>
    %45 = arith.mulf %43, %44 : vector<8x128xf32>
    %46 = tpu.concatenate %22, %25, %28, %31, %33, %36, %39, %42, %45 in 0 : vector<8x128xf32>, vector<8x128xf32>, vector<8x128xf32>, vector<8x128xf32>, vector<8x128xf32>, vector<8x128xf32>, vector<8x128xf32>, vector<8x128xf32>, vector<8x128xf32> -> vector<72x128xf32>
    %47 = arith.truncf %46 : vector<72x128xf32> to vector<72x128xbf16>
    %cst = arith.constant dense<0.000000e+00> : vector<32x128xf32>
    %48 = tpu.matmul %18, %47, %cst {dimension_numbers = #tpu.dot_dimension_numbers<[1], [0], [0], [1], [0, 0, 1, 1], [], []>} : vector<32x72xbf16>, vector<72x128xbf16>, vector<32x128xf32> -> vector<32x128xf32>
    %c0_22 = arith.constant 0 : index
    %c0_23 = arith.constant 0 : index
    %49 = vector.load %arg11[%c0_22, %c0_23] : memref<32x1xf32, #tpu.memory_space<vmem>>, vector<32x1xf32>
    %50 = vector.broadcast %49 : vector<32x1xf32> to vector<32x128xf32>
    %51 = arith.addf %48, %50 : vector<32x128xf32>
    %c0_24 = arith.constant 0 : index
    %c0_25 = arith.constant 0 : index
    %52 = vector.load %arg10[%c0_24, %c0_25] : memref<32x72xbf16, #tpu.memory_space<vmem>>, vector<32x72xbf16>
    %c0_26 = arith.constant 0 : index
    %c0_27 = arith.constant 0 : index
    %53 = vector.load %arg12[%c0_26, %c0_27] : memref<32x32xbf16, #tpu.memory_space<vmem>>, vector<32x32xbf16>
    %c0_28 = arith.constant 0 : index
    %c0_29 = arith.constant 0 : index
    %54 = vector.load %arg13[%c0_28, %c0_29] : memref<8x288xbf16, #tpu.memory_space<vmem>>, vector<8x288xbf16>
    %c0_30 = arith.constant 0 : index
    %c0_31 = arith.constant 0 : index
    %55 = vector.load %arg14[%c0_30, %c0_31] : memref<8x1xf32, #tpu.memory_space<vmem>>, vector<8x1xf32>
    %c0_32 = arith.constant 0 : index
    %c0_33 = arith.constant 0 : index
    %56 = vector.load %arg4[%c0_32, %c0_33] : memref<32x1xf32, #tpu.memory_space<vmem>>, vector<32x1xf32>
    %c0_34 = arith.constant 0 : index
    %c0_35 = arith.constant 0 : index
    %57 = vector.load %arg5[%c0_34, %c0_35] : memref<32x1xf32, #tpu.memory_space<vmem>>, vector<32x1xf32>
    %c0_36 = arith.constant 0 : index
    %c0_37 = arith.constant 0 : index
    %58 = vector.load %arg6[%c0_36, %c0_37] : memref<32x1xf32, #tpu.memory_space<vmem>>, vector<32x1xf32>
    %c0_38 = arith.constant 0 : index
    %c0_39 = arith.constant 0 : index
    %59 = vector.load %arg7[%c0_38, %c0_39] : memref<32x1xf32, #tpu.memory_space<vmem>>, vector<32x1xf32>
    %c0_40 = arith.constant 0 : index
    %c0_41 = arith.constant 0 : index
    %60 = vector.load %arg2[%c0_40, %c0_41] : memref<8x128xf32, #tpu.memory_space<vmem>>, vector<8x128xf32>
    %c0_i32 = arith.constant 0 : i32
    %c4_i32 = arith.constant 4 : i32
    %61 = arith.addi %c0_i32, %c4_i32 : i32
    %c1_i32_42 = arith.constant 1 : i32
    %62 = scf.for %arg17 = %c0_i32 to %61 step %c1_i32_42 iter_args(%arg18 = %60) -> (vector<8x128xf32>)  : i32 {
      %c9_i32_46 = arith.constant 9 : i32
      %64 = tpu.dynamic_rotate %arg18 by %c9_i32_46 dim 1 : vector<8x128xf32>, i32 -> vector<8x128xf32>
      %65 = vector.broadcast %1 : vector<1x128xf32> to vector<8x128xf32>
      %66 = arith.mulf %64, %65 : vector<8x128xf32>
      %c8_i32_47 = arith.constant 8 : i32
      %67 = tpu.dynamic_rotate %arg18 by %c8_i32_47 dim 1 : vector<8x128xf32>, i32 -> vector<8x128xf32>
      %68 = vector.broadcast %3 : vector<1x128xf32> to vector<8x128xf32>
      %69 = arith.mulf %67, %68 : vector<8x128xf32>
      %c7_i32_48 = arith.constant 7 : i32
      %70 = tpu.dynamic_rotate %arg18 by %c7_i32_48 dim 1 : vector<8x128xf32>, i32 -> vector<8x128xf32>
      %71 = vector.broadcast %5 : vector<1x128xf32> to vector<8x128xf32>
      %72 = arith.mulf %70, %71 : vector<8x128xf32>
      %c1_i32_49 = arith.constant 1 : i32
      %73 = tpu.dynamic_rotate %arg18 by %c1_i32_49 dim 1 : vector<8x128xf32>, i32 -> vector<8x128xf32>
      %74 = vector.broadcast %7 : vector<1x128xf32> to vector<8x128xf32>
      %75 = arith.mulf %73, %74 : vector<8x128xf32>
      %76 = vector.broadcast %9 : vector<1x128xf32> to vector<8x128xf32>
      %77 = arith.mulf %arg18, %76 : vector<8x128xf32>
      %c127_i32_50 = arith.constant 127 : i32
      %78 = tpu.dynamic_rotate %arg18 by %c127_i32_50 dim 1 : vector<8x128xf32>, i32 -> vector<8x128xf32>
      %79 = vector.broadcast %11 : vector<1x128xf32> to vector<8x128xf32>
      %80 = arith.mulf %78, %79 : vector<8x128xf32>
      %c121_i32_51 = arith.constant 121 : i32
      %81 = tpu.dynamic_rotate %arg18 by %c121_i32_51 dim 1 : vector<8x128xf32>, i32 -> vector<8x128xf32>
      %82 = vector.broadcast %13 : vector<1x128xf32> to vector<8x128xf32>
      %83 = arith.mulf %81, %82 : vector<8x128xf32>
      %c120_i32_52 = arith.constant 120 : i32
      %84 = tpu.dynamic_rotate %arg18 by %c120_i32_52 dim 1 : vector<8x128xf32>, i32 -> vector<8x128xf32>
      %85 = vector.broadcast %15 : vector<1x128xf32> to vector<8x128xf32>
      %86 = arith.mulf %84, %85 : vector<8x128xf32>
      %c119_i32_53 = arith.constant 119 : i32
      %87 = tpu.dynamic_rotate %arg18 by %c119_i32_53 dim 1 : vector<8x128xf32>, i32 -> vector<8x128xf32>
      %88 = vector.broadcast %17 : vector<1x128xf32> to vector<8x128xf32>
      %89 = arith.mulf %87, %88 : vector<8x128xf32>
      %90 = tpu.concatenate %66, %69, %72, %75, %77, %80, %83, %86, %89 in 0 : vector<8x128xf32>, vector<8x128xf32>, vector<8x128xf32>, vector<8x128xf32>, vector<8x128xf32>, vector<8x128xf32>, vector<8x128xf32>, vector<8x128xf32>, vector<8x128xf32> -> vector<72x128xf32>
      %91 = arith.truncf %90 : vector<72x128xf32> to vector<72x128xbf16>
      %cst_54 = arith.constant dense<0.000000e+00> : vector<32x128xf32>
      %92 = tpu.matmul %52, %91, %cst_54 {dimension_numbers = #tpu.dot_dimension_numbers<[1], [0], [0], [1], [0, 0, 1, 1], [], []>} : vector<32x72xbf16>, vector<72x128xbf16>, vector<32x128xf32> -> vector<32x128xf32>
      %93 = arith.addf %51, %92 : vector<32x128xf32>
      %94 = arith.negf %93 : vector<32x128xf32>
      %95 = math.exp %94 : vector<32x128xf32>
      %cst_55 = arith.constant 1.000000e+00 : f32
      %96 = vector.broadcast %cst_55 : f32 to vector<32x128xf32>
      %97 = arith.addf %96, %95 : vector<32x128xf32>
      %98 = arith.divf %96, %97 : vector<32x128xf32>
      %99 = arith.mulf %93, %98 : vector<32x128xf32>
      %100 = arith.index_cast %arg17 : i32 to index
      %c0_56 = arith.constant 0 : index
      %c0_57 = arith.constant 0 : index
      %101 = vector.load %arg3[%100, %c0_56, %c0_57] : memref<4x32x1xf32, #tpu.memory_space<vmem>>, vector<1x32x1xf32>
      %102 = vector.shape_cast %101 : vector<1x32x1xf32> to vector<32x1xf32>
      %103 = vector.broadcast %102 : vector<32x1xf32> to vector<32x128xf32>
      %104 = arith.addf %99, %103 : vector<32x128xf32>
      %105 = arith.truncf %104 : vector<32x128xf32> to vector<32x128xbf16>
      %cst_58 = arith.constant dense<0.000000e+00> : vector<32x128xf32>
      %106 = tpu.matmul %53, %105, %cst_58 {dimension_numbers = #tpu.dot_dimension_numbers<[1], [0], [0], [1], [0, 0, 1, 1], [], []>} : vector<32x32xbf16>, vector<32x128xbf16>, vector<32x128xf32> -> vector<32x128xf32>
      %107 = vector.broadcast %56 : vector<32x1xf32> to vector<32x128xf32>
      %108 = arith.mulf %106, %107 : vector<32x128xf32>
      %cst_59 = arith.constant dense<0.000000e+00> : vector<128xf32>
      %109 = vector.multi_reduction <add>, %108, %cst_59 [0] : vector<32x128xf32> to vector<128xf32>
      %110 = vector.shape_cast %109 : vector<128xf32> to vector<1x128xf32>
      %cst_60 = arith.constant 0.176776692 : f32
      %111 = vector.broadcast %cst_60 : f32 to vector<1x128xf32>
      %112 = arith.mulf %110, %111 : vector<1x128xf32>
      %113 = vector.broadcast %57 : vector<32x1xf32> to vector<32x128xf32>
      %114 = arith.mulf %106, %113 : vector<32x128xf32>
      %cst_61 = arith.constant dense<0.000000e+00> : vector<128xf32>
      %115 = vector.multi_reduction <add>, %114, %cst_61 [0] : vector<32x128xf32> to vector<128xf32>
      %116 = vector.shape_cast %115 : vector<128xf32> to vector<1x128xf32>
      %cst_62 = arith.constant 0.176776692 : f32
      %117 = vector.broadcast %cst_62 : f32 to vector<1x128xf32>
      %118 = arith.mulf %116, %117 : vector<1x128xf32>
      %119 = arith.maximumf %112, %118 : vector<1x128xf32>
      %120 = arith.subf %112, %119 : vector<1x128xf32>
      %121 = math.exp %120 : vector<1x128xf32>
      %122 = arith.subf %118, %119 : vector<1x128xf32>
      %123 = math.exp %122 : vector<1x128xf32>
      %124 = arith.addf %121, %123 : vector<1x128xf32>
      %125 = tpu.reciprocal %124 {approx = true} : vector<1x128xf32> -> vector<1x128xf32>
      %126 = vector.broadcast %58 : vector<32x1xf32> to vector<32x128xf32>
      %127 = vector.broadcast %121 : vector<1x128xf32> to vector<32x128xf32>
      %128 = arith.mulf %126, %127 : vector<32x128xf32>
      %129 = vector.broadcast %59 : vector<32x1xf32> to vector<32x128xf32>
      %130 = vector.broadcast %123 : vector<1x128xf32> to vector<32x128xf32>
      %131 = arith.mulf %129, %130 : vector<32x128xf32>
      %132 = arith.addf %128, %131 : vector<32x128xf32>
      %133 = vector.broadcast %125 : vector<1x128xf32> to vector<32x128xf32>
      %134 = arith.mulf %132, %133 : vector<32x128xf32>
      %135 = arith.addf %104, %134 : vector<32x128xf32>
      %c9_i32_63 = arith.constant 9 : i32
      %136 = tpu.dynamic_rotate %135 by %c9_i32_63 dim 1 : vector<32x128xf32>, i32 -> vector<32x128xf32>
      %137 = vector.broadcast %1 : vector<1x128xf32> to vector<32x128xf32>
      %138 = arith.mulf %136, %137 : vector<32x128xf32>
      %c8_i32_64 = arith.constant 8 : i32
      %139 = tpu.dynamic_rotate %135 by %c8_i32_64 dim 1 : vector<32x128xf32>, i32 -> vector<32x128xf32>
      %140 = vector.broadcast %3 : vector<1x128xf32> to vector<32x128xf32>
      %141 = arith.mulf %139, %140 : vector<32x128xf32>
      %c7_i32_65 = arith.constant 7 : i32
      %142 = tpu.dynamic_rotate %135 by %c7_i32_65 dim 1 : vector<32x128xf32>, i32 -> vector<32x128xf32>
      %143 = vector.broadcast %5 : vector<1x128xf32> to vector<32x128xf32>
      %144 = arith.mulf %142, %143 : vector<32x128xf32>
      %c1_i32_66 = arith.constant 1 : i32
      %145 = tpu.dynamic_rotate %135 by %c1_i32_66 dim 1 : vector<32x128xf32>, i32 -> vector<32x128xf32>
      %146 = vector.broadcast %7 : vector<1x128xf32> to vector<32x128xf32>
      %147 = arith.mulf %145, %146 : vector<32x128xf32>
      %148 = vector.broadcast %9 : vector<1x128xf32> to vector<32x128xf32>
      %149 = arith.mulf %135, %148 : vector<32x128xf32>
      %c127_i32_67 = arith.constant 127 : i32
      %150 = tpu.dynamic_rotate %135 by %c127_i32_67 dim 1 : vector<32x128xf32>, i32 -> vector<32x128xf32>
      %151 = vector.broadcast %11 : vector<1x128xf32> to vector<32x128xf32>
      %152 = arith.mulf %150, %151 : vector<32x128xf32>
      %c121_i32_68 = arith.constant 121 : i32
      %153 = tpu.dynamic_rotate %135 by %c121_i32_68 dim 1 : vector<32x128xf32>, i32 -> vector<32x128xf32>
      %154 = vector.broadcast %13 : vector<1x128xf32> to vector<32x128xf32>
      %155 = arith.mulf %153, %154 : vector<32x128xf32>
      %c120_i32_69 = arith.constant 120 : i32
      %156 = tpu.dynamic_rotate %135 by %c120_i32_69 dim 1 : vector<32x128xf32>, i32 -> vector<32x128xf32>
      %157 = vector.broadcast %15 : vector<1x128xf32> to vector<32x128xf32>
      %158 = arith.mulf %156, %157 : vector<32x128xf32>
      %c119_i32_70 = arith.constant 119 : i32
      %159 = tpu.dynamic_rotate %135 by %c119_i32_70 dim 1 : vector<32x128xf32>, i32 -> vector<32x128xf32>
      %160 = vector.broadcast %17 : vector<1x128xf32> to vector<32x128xf32>
      %161 = arith.mulf %159, %160 : vector<32x128xf32>
      %162 = tpu.concatenate %138, %141, %144, %147, %149, %152, %155, %158, %161 in 0 : vector<32x128xf32>, vector<32x128xf32>, vector<32x128xf32>, vector<32x128xf32>, vector<32x128xf32>, vector<32x128xf32>, vector<32x128xf32>, vector<32x128xf32>, vector<32x128xf32> -> vector<288x128xf32>
      %163 = arith.truncf %162 : vector<288x128xf32> to vector<288x128xbf16>
      %cst_71 = arith.constant dense<0.000000e+00> : vector<8x128xf32>
      %164 = tpu.matmul %54, %163, %cst_71 {dimension_numbers = #tpu.dot_dimension_numbers<[1], [0], [0], [1], [0, 0, 1, 1], [], []>} : vector<8x288xbf16>, vector<288x128xbf16>, vector<8x128xf32> -> vector<8x128xf32>
      %165 = vector.broadcast %55 : vector<8x1xf32> to vector<8x128xf32>
      %166 = arith.addf %164, %165 : vector<8x128xf32>
      %c4_i32_72 = arith.constant 4 : i32
      %167 = arith.muli %c4_i32_72, %arg17 : i32
      %c0_i32_73 = arith.constant 0 : i32
      %168 = arith.addi %167, %c0_i32_73 : i32
      %169 = arith.index_cast %168 : i32 to index
      %170 = memref.load %arg15[%169] : memref<16xf32, #tpu.memory_space<smem>>
      %c4_i32_74 = arith.constant 4 : i32
      %171 = arith.muli %c4_i32_74, %arg17 : i32
      %c1_i32_75 = arith.constant 1 : i32
      %172 = arith.addi %171, %c1_i32_75 : i32
      %173 = arith.index_cast %172 : i32 to index
      %174 = memref.load %arg15[%173] : memref<16xf32, #tpu.memory_space<smem>>
      %c4_i32_76 = arith.constant 4 : i32
      %175 = arith.muli %c4_i32_76, %arg17 : i32
      %c2_i32 = arith.constant 2 : i32
      %176 = arith.addi %175, %c2_i32 : i32
      %177 = arith.index_cast %176 : i32 to index
      %178 = memref.load %arg15[%177] : memref<16xf32, #tpu.memory_space<smem>>
      %c4_i32_77 = arith.constant 4 : i32
      %179 = arith.muli %c4_i32_77, %arg17 : i32
      %c3_i32 = arith.constant 3 : i32
      %180 = arith.addi %179, %c3_i32 : i32
      %181 = arith.index_cast %180 : i32 to index
      %182 = memref.load %arg15[%181] : memref<16xf32, #tpu.memory_space<smem>>
      %183 = vector.broadcast %170 : f32 to vector<8x128xf32>
      %184 = arith.mulf %183, %arg18 : vector<8x128xf32>
      %185 = vector.broadcast %174 : f32 to vector<8x128xf32>
      %186 = arith.mulf %185, %166 : vector<8x128xf32>
      %187 = arith.subf %184, %186 : vector<8x128xf32>
      %188 = vector.broadcast %170 : f32 to vector<8x128xf32>
      %189 = arith.mulf %188, %166 : vector<8x128xf32>
      %190 = vector.broadcast %174 : f32 to vector<8x128xf32>
      %191 = arith.mulf %190, %arg18 : vector<8x128xf32>
      %192 = arith.addf %189, %191 : vector<8x128xf32>
      %193 = vector.broadcast %178 : f32 to vector<8x128xf32>
      %194 = arith.mulf %193, %187 : vector<8x128xf32>
      %195 = vector.broadcast %182 : f32 to vector<8x128xf32>
      %196 = arith.mulf %195, %192 : vector<8x128xf32>
      %197 = arith.addf %194, %196 : vector<8x128xf32>
      scf.yield %197 : vector<8x128xf32>
    }
    %c4_i32_43 = arith.constant 4 : i32
    %c0_44 = arith.constant 0 : index
    %c0_45 = arith.constant 0 : index
    %63 = vector.load %arg16[%c0_44, %c0_45] : memref<8x128xf32, #tpu.memory_space<vmem>>, vector<8x128xf32>
    tpu.vector_store %arg16[%c0_44, %c0_45], %62 {strides = array<i32>} : memref<8x128xf32, #tpu.memory_space<vmem>>, vector<8x128xf32>,
    return
  }
  func.func @transform_0(%arg0: i32) -> (i32, i32) {
    %c0_i32 = arith.constant 0 : i32
    %c0_i32_0 = arith.constant 0 : i32
    %c0_i32_1 = arith.constant 0 : i32
    return %c0_i32, %c0_i32_0 : i32, i32
  }
  func.func @transform_1(%arg0: i32) -> (i32, i32) {
    %c0_i32 = arith.constant 0 : i32
    %c0_i32_0 = arith.constant 0 : i32
    %c0_i32_1 = arith.constant 0 : i32
    return %c0_i32, %c0_i32_0 : i32, i32
  }
  func.func @transform_2(%arg0: i32) -> (i32, i32, i32) {
    %c0_i32 = arith.constant 0 : i32
    %c0_i32_0 = arith.constant 0 : i32
    %c0_i32_1 = arith.constant 0 : i32
    %c0_i32_2 = arith.constant 0 : i32
    return %c0_i32, %c0_i32_0, %c0_i32_1 : i32, i32, i32
  }
  func.func @transform_3(%arg0: i32) -> (i32, i32) {
    %c0_i32 = arith.constant 0 : i32
    %c0_i32_0 = arith.constant 0 : i32
    %c0_i32_1 = arith.constant 0 : i32
    return %c0_i32, %c0_i32_0 : i32, i32
  }
  func.func @transform_4(%arg0: i32) -> (i32, i32) {
    %c0_i32 = arith.constant 0 : i32
    %c0_i32_0 = arith.constant 0 : i32
    %c0_i32_1 = arith.constant 0 : i32
    return %c0_i32, %c0_i32_0 : i32, i32
  }
  func.func @transform_5(%arg0: i32) -> (i32, i32) {
    %c0_i32 = arith.constant 0 : i32
    %c0_i32_0 = arith.constant 0 : i32
    %c0_i32_1 = arith.constant 0 : i32
    return %c0_i32, %c0_i32_0 : i32, i32
  }
  func.func @transform_6(%arg0: i32) -> (i32, i32) {
    %c0_i32 = arith.constant 0 : i32
    %c0_i32_0 = arith.constant 0 : i32
    %c0_i32_1 = arith.constant 0 : i32
    return %c0_i32, %c0_i32_0 : i32, i32
  }
  func.func @transform_7(%arg0: i32) -> (i32, i32, i32) {
    %c0_i32 = arith.constant 0 : i32
    %c0_i32_0 = arith.constant 0 : i32
    %c0_i32_1 = arith.constant 0 : i32
    %c0_i32_2 = arith.constant 0 : i32
    return %c0_i32, %c0_i32_0, %c0_i32_1 : i32, i32, i32
  }
  func.func @transform_8(%arg0: i32) -> (i32, i32) {
    %c0_i32 = arith.constant 0 : i32
    %c0_i32_0 = arith.constant 0 : i32
    %c0_i32_1 = arith.constant 0 : i32
    return %c0_i32, %c0_i32_0 : i32, i32
  }
  func.func @transform_9(%arg0: i32) -> (i32, i32) {
    %c0_i32 = arith.constant 0 : i32
    %c0_i32_0 = arith.constant 0 : i32
    %c0_i32_1 = arith.constant 0 : i32
    return %c0_i32, %c0_i32_0 : i32, i32
  }
  func.func @transform_10(%arg0: i32) -> (i32, i32) {
    %c0_i32 = arith.constant 0 : i32
    %c0_i32_0 = arith.constant 0 : i32
    %c0_i32_1 = arith.constant 0 : i32
    return %c0_i32, %c0_i32_0 : i32, i32
  }
  func.func @transform_11(%arg0: i32) -> (i32, i32) {
    %c0_i32 = arith.constant 0 : i32
    %c0_i32_0 = arith.constant 0 : i32
    %c0_i32_1 = arith.constant 0 : i32
    return %c0_i32, %c0_i32_0 : i32, i32
  }
  func.func @transform_12(%arg0: i32) -> (i32, i32) {
    %c0_i32 = arith.constant 0 : i32
    %c0_i32_0 = arith.constant 0 : i32
    %c0_i32_1 = arith.constant 0 : i32
    return %c0_i32, %c0_i32_0 : i32, i32
  }
  func.func @transform_13(%arg0: i32) -> (i32, i32) {
    %c0_i32 = arith.constant 0 : i32
    %c0_i32_0 = arith.constant 0 : i32
    %c0_i32_1 = arith.constant 0 : i32
    return %c0_i32, %c0_i32_0 : i32, i32
  }
  func.func @transform_14(%arg0: i32) -> i32 {
    %c0_i32 = arith.constant 0 : i32
    %c0_i32_0 = arith.constant 0 : i32
    return %c0_i32 : i32
  }
  func.func @transform_15(%arg0: i32) -> (i32, i32) {
    %c0_i32 = arith.constant 0 : i32
    %c0_i32_0 = arith.constant 0 : i32
    %c0_i32_1 = arith.constant 0 : i32
    return %c0_i32, %c0_i32_0 : i32, i32
  }
}

module attributes {stable_mosaic.version = 11 : i64} {
  func.func @_decode_kernel(%arg0: i32, %arg1: memref<4x128xf32, #tpu.memory_space<vmem>>, %arg2: memref<64x4xf32, #tpu.memory_space<vmem>>, %arg3: memref<64x1xf32, #tpu.memory_space<vmem>>, %arg4: memref<64x128xf32, #tpu.memory_space<vmem>>) attributes {dimension_semantics = [#tpu.dimension_semantics<arbitrary>], iteration_bounds = array<i64: 1>, scalar_prefetch = 0 : i64, scratch_operands = 0 : i64, tpu.core_type = #tpu.core_type<tc>, window_params = [{pipeline_mode = #tpu.pipeline_mode<synchronous>, transform_indices = @transform_0, window_bounds = array<i64: 4, 128>}, {pipeline_mode = #tpu.pipeline_mode<synchronous>, transform_indices = @transform_1, window_bounds = array<i64: 64, 4>}, {pipeline_mode = #tpu.pipeline_mode<synchronous>, transform_indices = @transform_2, window_bounds = array<i64: 64, 1>}, {pipeline_mode = #tpu.pipeline_mode<synchronous>, transform_indices = @transform_3, window_bounds = array<i64: 64, 128>}]} {
    %c0 = arith.constant 0 : index
    %c0_0 = arith.constant 0 : index
    %0 = vector.load %arg1[%c0, %c0_0] : memref<4x128xf32, #tpu.memory_space<vmem>>, vector<4x128xf32>
    %cst = arith.constant 5.4899807 : f32
    %1 = vector.broadcast %cst : f32 to vector<4x128xf32>
    %2 = arith.mulf %0, %1 : vector<4x128xf32>
    %c0_1 = arith.constant 0 : index
    %c0_2 = arith.constant 0 : index
    %3 = vector.load %arg2[%c0_1, %c0_2] : memref<64x4xf32, #tpu.memory_space<vmem>>, vector<64x4xf32>
    %cst_3 = arith.constant dense<0.000000e+00> : vector<64x128xf32>
    %4 = tpu.matmul %3, %2, %cst_3 {dimension_numbers = #tpu.dot_dimension_numbers<[1], [0], [0], [1], [0, 0, 1, 1], [], []>} : vector<64x4xf32>, vector<4x128xf32>, vector<64x128xf32> -> vector<64x128xf32>
    %c0_4 = arith.constant 0 : index
    %c0_5 = arith.constant 0 : index
    %5 = vector.load %arg3[%c0_4, %c0_5] : memref<64x1xf32, #tpu.memory_space<vmem>>, vector<64x1xf32>
    %6 = vector.broadcast %5 : vector<64x1xf32> to vector<64x128xf32>
    %7 = arith.addf %4, %6 : vector<64x128xf32>
    %cst_6 = arith.constant 5.000000e-01 : f32
    %8 = vector.broadcast %cst_6 : f32 to vector<64x128xf32>
    %9 = arith.mulf %7, %8 : vector<64x128xf32>
    %cst_7 = arith.constant 5.000000e-01 : f32
    %10 = vector.broadcast %cst_7 : f32 to vector<64x128xf32>
    %11 = arith.addf %9, %10 : vector<64x128xf32>
    %cst_8 = arith.constant 0.000000e+00 : f32
    %cst_9 = arith.constant 1.000000e+00 : f32
    %12 = vector.broadcast %cst_8 : f32 to vector<64x128xf32>
    %13 = arith.maximumf %12, %11 : vector<64x128xf32>
    %14 = vector.broadcast %cst_9 : f32 to vector<64x128xf32>
    %15 = arith.minimumf %14, %13 : vector<64x128xf32>
    %c0_10 = arith.constant 0 : index
    %c0_11 = arith.constant 0 : index
    %16 = vector.load %arg4[%c0_10, %c0_11] : memref<64x128xf32, #tpu.memory_space<vmem>>, vector<64x128xf32>
    tpu.vector_store %arg4[%c0_10, %c0_11], %15 {strides = array<i32>} : memref<64x128xf32, #tpu.memory_space<vmem>>, vector<64x128xf32>,
    return
  }
  func.func @transform_0(%arg0: i32) -> (i32, i32) {
    %c0_i32 = arith.constant 0 : i32
    %c0_i32_0 = arith.constant 0 : i32
    %c0_i32_1 = arith.constant 0 : i32
    return %c0_i32, %c0_i32_0 : i32, i32
  }
  func.func @transform_1(%arg0: i32) -> (i32, i32) {
    %c0_i32 = arith.constant 0 : i32
    %c0_i32_0 = arith.constant 0 : i32
    %c0_i32_1 = arith.constant 0 : i32
    return %c0_i32, %c0_i32_0 : i32, i32
  }
  func.func @transform_2(%arg0: i32) -> (i32, i32) {
    %c0_i32 = arith.constant 0 : i32
    %c0_i32_0 = arith.constant 0 : i32
    %c0_i32_1 = arith.constant 0 : i32
    return %c0_i32, %c0_i32_0 : i32, i32
  }
  func.func @transform_3(%arg0: i32) -> (i32, i32) {
    %c0_i32 = arith.constant 0 : i32
    %c0_i32_0 = arith.constant 0 : i32
    %c0_i32_1 = arith.constant 0 : i32
    return %c0_i32, %c0_i32_0 : i32, i32
  }
}

module attributes {stable_mosaic.version = 11 : i64} {
  func.func @_resize_kernel(%arg0: i32, %arg1: memref<2x64x64xf32, #tpu.memory_space<vmem>>, %arg2: memref<16x64xf32, #tpu.memory_space<vmem>>, %arg3: memref<64x16xf32, #tpu.memory_space<vmem>>, %arg4: memref<2x16x16xf32, #tpu.memory_space<vmem>>) attributes {dimension_semantics = [#tpu.dimension_semantics<arbitrary>], iteration_bounds = array<i64: 1>, scalar_prefetch = 0 : i64, scratch_operands = 0 : i64, tpu.core_type = #tpu.core_type<tc>, window_params = [{pipeline_mode = #tpu.pipeline_mode<synchronous>, transform_indices = @transform_0, window_bounds = array<i64: 2, 64, 64>}, {pipeline_mode = #tpu.pipeline_mode<synchronous>, transform_indices = @transform_1, window_bounds = array<i64: 16, 64>}, {pipeline_mode = #tpu.pipeline_mode<synchronous>, transform_indices = @transform_2, window_bounds = array<i64: 64, 16>}, {pipeline_mode = #tpu.pipeline_mode<synchronous>, transform_indices = @transform_3, window_bounds = array<i64: 2, 16, 16>}]} {
    %c0 = arith.constant 0 : index
    %c0_0 = arith.constant 0 : index
    %c0_1 = arith.constant 0 : index
    %0 = vector.load %arg1[%c0, %c0_0, %c0_1] : memref<2x64x64xf32, #tpu.memory_space<vmem>>, vector<1x64x64xf32>
    %1 = vector.shape_cast %0 : vector<1x64x64xf32> to vector<64x64xf32>
    %c0_2 = arith.constant 0 : index
    %c0_3 = arith.constant 0 : index
    %2 = vector.load %arg3[%c0_2, %c0_3] : memref<64x16xf32, #tpu.memory_space<vmem>>, vector<64x16xf32>
    %cst = arith.constant dense<0.000000e+00> : vector<64x16xf32>
    %3 = tpu.matmul %1, %2, %cst {dimension_numbers = #tpu.dot_dimension_numbers<[1], [0], [0], [1], [0, 0, 1, 1], [], []>} : vector<64x64xf32>, vector<64x16xf32>, vector<64x16xf32> -> vector<64x16xf32>
    %c0_4 = arith.constant 0 : index
    %c0_5 = arith.constant 0 : index
    %4 = vector.load %arg2[%c0_4, %c0_5] : memref<16x64xf32, #tpu.memory_space<vmem>>, vector<16x64xf32>
    %cst_6 = arith.constant dense<0.000000e+00> : vector<16x16xf32>
    %5 = tpu.matmul %4, %3, %cst_6 {dimension_numbers = #tpu.dot_dimension_numbers<[1], [0], [0], [1], [0, 0, 1, 1], [], []>} : vector<16x64xf32>, vector<64x16xf32>, vector<16x16xf32> -> vector<16x16xf32>
    %c0_7 = arith.constant 0 : index
    %c0_8 = arith.constant 0 : index
    %c0_9 = arith.constant 0 : index
    %6 = vector.load %arg4[%c0_7, %c0_8, %c0_9] : memref<2x16x16xf32, #tpu.memory_space<vmem>>, vector<1x16x16xf32>
    %7 = vector.shape_cast %6 : vector<1x16x16xf32> to vector<16x16xf32>
    %8 = vector.shape_cast %5 : vector<16x16xf32> to vector<1x16x16xf32>
    tpu.vector_store %arg4[%c0_7, %c0_8, %c0_9], %8 {strides = array<i32>} : memref<2x16x16xf32, #tpu.memory_space<vmem>>, vector<1x16x16xf32>,
    %c1 = arith.constant 1 : index
    %c0_10 = arith.constant 0 : index
    %c0_11 = arith.constant 0 : index
    %9 = vector.load %arg1[%c1, %c0_10, %c0_11] : memref<2x64x64xf32, #tpu.memory_space<vmem>>, vector<1x64x64xf32>
    %10 = vector.shape_cast %9 : vector<1x64x64xf32> to vector<64x64xf32>
    %c0_12 = arith.constant 0 : index
    %c0_13 = arith.constant 0 : index
    %11 = vector.load %arg3[%c0_12, %c0_13] : memref<64x16xf32, #tpu.memory_space<vmem>>, vector<64x16xf32>
    %cst_14 = arith.constant dense<0.000000e+00> : vector<64x16xf32>
    %12 = tpu.matmul %10, %11, %cst_14 {dimension_numbers = #tpu.dot_dimension_numbers<[1], [0], [0], [1], [0, 0, 1, 1], [], []>} : vector<64x64xf32>, vector<64x16xf32>, vector<64x16xf32> -> vector<64x16xf32>
    %c0_15 = arith.constant 0 : index
    %c0_16 = arith.constant 0 : index
    %13 = vector.load %arg2[%c0_15, %c0_16] : memref<16x64xf32, #tpu.memory_space<vmem>>, vector<16x64xf32>
    %cst_17 = arith.constant dense<0.000000e+00> : vector<16x16xf32>
    %14 = tpu.matmul %13, %12, %cst_17 {dimension_numbers = #tpu.dot_dimension_numbers<[1], [0], [0], [1], [0, 0, 1, 1], [], []>} : vector<16x64xf32>, vector<64x16xf32>, vector<16x16xf32> -> vector<16x16xf32>
    %c1_18 = arith.constant 1 : index
    %c0_19 = arith.constant 0 : index
    %c0_20 = arith.constant 0 : index
    %15 = vector.load %arg4[%c1_18, %c0_19, %c0_20] : memref<2x16x16xf32, #tpu.memory_space<vmem>>, vector<1x16x16xf32>
    %16 = vector.shape_cast %15 : vector<1x16x16xf32> to vector<16x16xf32>
    %17 = vector.shape_cast %14 : vector<16x16xf32> to vector<1x16x16xf32>
    tpu.vector_store %arg4[%c1_18, %c0_19, %c0_20], %17 {strides = array<i32>} : memref<2x16x16xf32, #tpu.memory_space<vmem>>, vector<1x16x16xf32>,
    return
  }
  func.func @transform_0(%arg0: i32) -> (i32, i32, i32) {
    %c0_i32 = arith.constant 0 : i32
    %c0_i32_0 = arith.constant 0 : i32
    %c0_i32_1 = arith.constant 0 : i32
    %c0_i32_2 = arith.constant 0 : i32
    return %c0_i32, %c0_i32_0, %c0_i32_1 : i32, i32, i32
  }
  func.func @transform_1(%arg0: i32) -> (i32, i32) {
    %c0_i32 = arith.constant 0 : i32
    %c0_i32_0 = arith.constant 0 : i32
    %c0_i32_1 = arith.constant 0 : i32
    return %c0_i32, %c0_i32_0 : i32, i32
  }
  func.func @transform_2(%arg0: i32) -> (i32, i32) {
    %c0_i32 = arith.constant 0 : i32
    %c0_i32_0 = arith.constant 0 : i32
    %c0_i32_1 = arith.constant 0 : i32
    return %c0_i32, %c0_i32_0 : i32, i32
  }
  func.func @transform_3(%arg0: i32) -> (i32, i32, i32) {
    %c0_i32 = arith.constant 0 : i32
    %c0_i32_0 = arith.constant 0 : i32
    %c0_i32_1 = arith.constant 0 : i32
    %c0_i32_2 = arith.constant 0 : i32
    return %c0_i32, %c0_i32_0, %c0_i32_1 : i32, i32, i32
  }
}

</mosaic_0001>

<llo_original>
// kernel: _forward_impl.5
$region0: #{_forward_impl.5}
  #allocation0 [shape = 'u32[]', space=smem, size = 0x4, offset = 0x4, fixed_abs, tag = 'smem constant byte address 0x4 - core index']
  #allocation1 [shape = 'u32[144,128]{1,0:T(1,128)}', space=vmem, size = 0x12000, scoped, tag = 'internal scratch']
  %s0 = inlined_call_operand.hbm [shape: f32[6,16,16], index: 0, kind: input, shape index: {}]
  %s1 = inlined_call_operand.vmem [shape: f32[64,16], index: 1, kind: input, shape index: {}]
  %s2 = inlined_call_operand.hbm [shape: f32[16,64], index: 2, kind: input, shape index: {}]
  %s3 = inlined_call_operand.vmem [shape: f32[6,64,64], index: 3, kind: output, shape index: {}]
  %s4 = sld [smem:[#allocation0]]
  $region30: #{_forward_impl.5} parent=0
    _
  %s6 = ssub.s32 1, %s4
  %s7 = scalar_select 0, %s6, %s4
  $region1: #{_forward_impl.5} parent=0
    #allocation2 [shape = 'u8[49152]{0}', space=vmem, size = 0xc000, scoped, tag = 'input window, operand 0, single buffered']
    #allocation3 [shape = 's32[1]{0}', space=sflag, size = 0x4, scoped, tag = 'scoped memory for _forward_impl.5']
    #allocation4 [shape = 'u8[8192]{0}', space=vmem, size = 0x2000, scoped, tag = 'input window, operand 2, single buffered']
    #allocation5 [shape = 's32[1]{0}', space=sflag, size = 0x4, scoped, tag = 'scoped memory for _forward_impl.5']
    %8 = vsyncpa [#allocation3], 0
    %9 = vsyncpa [#allocation5], 0
    // Predicated region
    $region2: #{_forward_impl.5} parent=1 // pred_check
      _
    $region3: #{_forward_impl.5} parent=1 // pred_check_branch
      %11 = sbr.rel (0) target = $region5
    $region4: #{_forward_impl.5} parent=1 // pred_region
      %s13 = ssub.s32 1536, 1536
      %14 = vsyncadd [#allocation3], %s13
      %s15 = sshll.u32 [#allocation2], 4
      %s16 = int_to_ptr.vmem [resolvable:$true] %s15
      %21 = dma.hbm_to_vmem [thread:$0]  %s0, 1536, %s16, [#allocation3], 128, 128, 8
    $region5: #{_forward_impl.5} parent=1 // pred_fallthru
      _
    // Predicated region
    $region6: #{_forward_impl.5} parent=1 // pred_check
      _
    $region7: #{_forward_impl.5} parent=1 // pred_check_branch
      %23 = sbr.rel (0) target = $region9
    $region8: #{_forward_impl.5} parent=1 // pred_region
      _
    $region9: #{_forward_impl.5} parent=1 // pred_fallthru
      _
    // Predicated region
    $region10: #{_forward_impl.5} parent=1 // pred_check
      _
    $region11: #{_forward_impl.5} parent=1 // pred_check_branch
      %25 = sbr.rel (0) target = $region13
    $region12: #{_forward_impl.5} parent=1 // pred_region
      %s27 = ssub.s32 256, 256
      %28 = vsyncadd [#allocation5], %s27
      %s29 = sshll.u32 [#allocation4], 4
      %s30 = int_to_ptr.vmem [resolvable:$true] %s29
      %35 = dma.hbm_to_vmem [thread:$0]  %s2, 256, %s30, [#allocation5], 128, 128, 8
    $region13: #{_forward_impl.5} parent=1 // pred_fallthru
      _
    // Predicated region
    $region14: #{_forward_impl.5} parent=1 // pred_check
      _
    $region15: #{_forward_impl.5} parent=1 // pred_check_branch
      %37 = sbr.rel (0) target = $region17
    $region16: #{_forward_impl.5} parent=1 // pred_region
      %38 = dma.done [#allocation3], 1536
    $region17: #{_forward_impl.5} parent=1 // pred_fallthru
      _
    // Predicated region
    $region18: #{_forward_impl.5} parent=1 // pred_check
      _
    $region19: #{_forward_impl.5} parent=1 // pred_check_branch
      %40 = sbr.rel (0) target = $region21
    $region20: #{_forward_impl.5} parent=1 // pred_region
      %41 = dma.done [#allocation5], 256
    $region21: #{_forward_impl.5} parent=1 // pred_fallthru
      _
    %v42 = vld [vmem:[#allocation2] sm:$0xff]
    %v43 = vld [vmem:[#allocation2 + $0x8] sm:$0xff]
    %v44 = vld [vmem:[#allocation4] sm:$0xff]
    %v45 = vld [vmem:[#allocation4 + $0x8] sm:$0xff]
    %vm46 = vcmask 130048
    %v48 = vsel %vm46, %v42, 0
    %v51 = vsel %vm46, %v43, 0
    %53 = vmatprep.subr.mxu0 0.0
    %54 = vmatpush1.msra.mxu0 %v44
    %55 = vmatprep.subr.mxu0 0.0
    %56 = vmatpush1.msra.mxu0 %v45
    %57 = vmatprep.subr.mxu0 0.0
    %58 = vmatpush1.msra.mxu0 0.0
    %59 = vmatprep.subr.mxu0 0.0
    %60 = vmatpush1.msra.mxu0 0.0
    %61 = vmatprep.subr.mxu0 0.0
    %62 = vmatpush1.msra.mxu0 0.0
    %63 = vmatprep.subr.mxu0 0.0
    %64 = vmatpush1.msra.mxu0 0.0
    %65 = vmatprep.subr.mxu0 0.0
    %66 = vmatpush1.msra.mxu0 0.0
    %67 = vmatprep.subr.mxu0 0.0
    %68 = vmatpush1.msra.mxu0 0.0
    %69 = vmatprep.subr.mxu0 0.0
    %70 = vmatpush1.msra.mxu0 0.0
    %71 = vmatprep.subr.mxu0 0.0
    %72 = vmatpush1.msra.mxu0 0.0
    %73 = vmatprep.subr.mxu0 0.0
    %74 = vmatpush1.msra.mxu0 0.0
    %75 = vmatprep.subr.mxu0 0.0
    %76 = vmatpush1.msra.mxu0 0.0
    %77 = vmatprep.subr.mxu0 0.0
    %78 = vmatpush1.msra.mxu0 0.0
    %79 = vmatprep.subr.mxu0 0.0
    %80 = vmatpush1.msra.mxu0 0.0
    %81 = vmatprep.subr.mxu0 0.0
    %82 = vmatpush1.msra.mxu0 0.0
    %83 = vmatprep.subr.mxu0 0.0
    %84 = vmatpush1.msra.mxu0 0.0
    %85 = vmatprep.subr.mxu0 0.0
    %86 = vmatpush1.msra.mxu0 0.0
    %87 = vmatprep.subr.mxu0 0.0
    %88 = vmatpush1.msra.mxu0 0.0
    %89 = vmatprep.subr.mxu0 0.0
    %90 = vmatpush1.msra.mxu0 0.0
    %91 = vmatprep.subr.mxu0 0.0
    %92 = vmatpush1.msra.mxu0 0.0
    %93 = vmatprep.subr.mxu0 0.0
    %94 = vmatpush1.msra.mxu0 0.0
    %95 = vmatprep.subr.mxu0 0.0
    %96 = vmatpush1.msra.mxu0 0.0
    %97 = vmatprep.subr.mxu0 0.0
    %98 = vmatpush1.msra.mxu0 0.0
    %99 = vmatprep.subr.mxu0 0.0
    %100 = vmatpush1.msra.mxu0 0.0
    %101 = vmatprep.subr.mxu0 0.0
    %102 = vmatpush1.msra.mxu0 0.0
    %103 = vmatprep.subr.mxu0 0.0
    %104 = vmatpush1.msra.mxu0 0.0
    %105 = vmatprep.subr.mxu0 0.0
    %106 = vmatpush1.msra.mxu0 0.0
    %107 = vmatprep.subr.mxu0 0.0
    %108 = vmatpush1.msra.mxu0 0.0
    %109 = vmatprep.subr.mxu0 0.0
    %110 = vmatpush1.msra.mxu0 0.0
    %111 = vmatprep.subr.mxu0 0.0
    %112 = vmatpush1.msra.mxu0 0.0
    %113 = vmatprep.subr.mxu0 0.0
    %114 = vmatpush1.msra.mxu0 0.0
    %115 = vmatprep.subr.mxu0 0.0
    %116 = vmatpush1.msra.mxu0 0.0
    %117 = vmatprep.mubr.f32.mxu0 0.0
    %118 = vmatmul.mubr.f32.gmra.mrb[0].mxu0 %v48
    %v119 = vpop.f32.mrb[0].mxu0
    %v120 = vadd.f32 0.0, %v119
    %v121 = vpop.f32.mrb[0].mxu0
    %122 = vmatprep.mubr.f32.mxu0 0.0
    %123 = vmatmul.mubr.f32.gmra.mrb[0].mxu0 %v51
    %v124 = vpop.f32.mrb[0].mxu0
    %v125 = vadd.f32 0.0, %v124
    %v126 = vpop.f32.mrb[0].mxu0
    %127 = vdwg.mxu0
    %v128 = vld [vmem:[%s1] sm:$0xff]
    %v129 = vld [vmem:[%s1 + $0x8] sm:$0xff]
    %v130 = vld [vmem:[%s1 + $0x10] sm:$0xff]
    %v131 = vld [vmem:[%s1 + $0x18] sm:$0xff]
    %v132 = vld [vmem:[%s1 + $0x20] sm:$0xff]
    %v133 = vld [vmem:[%s1 + $0x28] sm:$0xff]
    %v134 = vld [vmem:[%s1 + $0x30] sm:$0xff]
    %v135 = vld [vmem:[%s1 + $0x38] sm:$0xff]
    %v137 = vsel %vm46, %v128, 0
    %v140 = vsel %vm46, %v129, 0
    %v143 = vsel %vm46, %v130, 0
    %v146 = vsel %vm46, %v131, 0
    %v149 = vsel %vm46, %v132, 0
    %v152 = vsel %vm46, %v133, 0
    %v155 = vsel %vm46, %v134, 0
    %v158 = vsel %vm46, %v135, 0
    %160 = vmatprep.subr.mxu0 0.0
    %161 = vmatpush1.msra.mxu0 %v120
    %162 = vmatprep.subr.mxu0 0.0
    %163 = vmatpush1.msra.mxu0 %v125
    %164 = vmatprep.subr.mxu0 0.0
    %165 = vmatpush1.msra.mxu0 0.0
    %166 = vmatprep.subr.mxu0 0.0
    %167 = vmatpush1.msra.mxu0 0.0
    %168 = vmatprep.subr.mxu0 0.0
    %169 = vmatpush1.msra.mxu0 0.0
    %170 = vmatprep.subr.mxu0 0.0
    %171 = vmatpush1.msra.mxu0 0.0
    %172 = vmatprep.subr.mxu0 0.0
    %173 = vmatpush1.msra.mxu0 0.0
    %174 = vmatprep.subr.mxu0 0.0
    %175 = vmatpush1.msra.mxu0 0.0
    %176 = vmatprep.subr.mxu0 0.0
    %177 = vmatpush1.msra.mxu0 0.0
    %178 = vmatprep.subr.mxu0 0.0
    %179 = vmatpush1.msra.mxu0 0.0
    %180 = vmatprep.subr.mxu0 0.0
    %181 = vmatpush1.msra.mxu0 0.0
    %182 = vmatprep.subr.mxu0 0.0
    %183 = vmatpush1.msra.mxu0 0.0
    %184 = vmatprep.subr.mxu0 0.0
    %185 = vmatpush1.msra.mxu0 0.0
    %186 = vmatprep.subr.mxu0 0.0
    %187 = vmatpush1.msra.mxu0 0.0
    %188 = vmatprep.subr.mxu0 0.0
    %189 = vmatpush1.msra.mxu0 0.0
    %190 = vmatprep.subr.mxu0 0.0
    %191 = vmatpush1.msra.mxu0 0.0
    %192 = vmatprep.subr.mxu0 0.0
    %193 = vmatpush1.msra.mxu0 0.0
    %194 = vmatprep.subr.mxu0 0.0
    %195 = vmatpush1.msra.mxu0 0.0
    %196 = vmatprep.subr.mxu0 0.0
    %197 = vmatpush1.msra.mxu0 0.0
    %198 = vmatprep.subr.mxu0 0.0
    %199 = vmatpush1.msra.mxu0 0.0
    %200 = vmatprep.subr.mxu0 0.0
    %201 = vmatpush1.msra.mxu0 0.0
    %202 = vmatprep.subr.mxu0 0.0
    %203 = vmatpush1.msra.mxu0 0.0
    %204 = vmatprep.subr.mxu0 0.0
    %205 = vmatpush1.msra.mxu0 0.0
    %206 = vmatprep.subr.mxu0 0.0
    %207 = vmatpush1.msra.mxu0 0.0
    %208 = vmatprep.subr.mxu0 0.0
    %209 = vmatpush1.msra.mxu0 0.0
    %210 = vmatprep.subr.mxu0 0.0
    %211 = vmatpush1.msra.mxu0 0.0
    %212 = vmatprep.subr.mxu0 0.0
    %213 = vmatpush1.msra.mxu0 0.0
    %214 = vmatprep.subr.mxu0 0.0
    %215 = vmatpush1.msra.mxu0 0.0
    %216 = vmatprep.subr.mxu0 0.0
    %217 = vmatpush1.msra.mxu0 0.0
    %218 = vmatprep.subr.mxu0 0.0
    %219 = vmatpush1.msra.mxu0 0.0
    %220 = vmatprep.subr.mxu0 0.0
    %221 = vmatpush1.msra.mxu0 0.0
    %222 = vmatprep.subr.mxu0 0.0
    %223 = vmatpush1.msra.mxu0 0.0
    %224 = vmatprep.mubr.f32.mxu0 0.0
    %225 = vmatmul.mubr.f32.gmra.mrb[0].mxu0 %v137
    %v226 = vpop.f32.mrb[0].mxu0
    %v227 = vadd.f32 0.0, %v226
    %v228 = vpop.f32.mrb[0].mxu0
    %229 = vmatprep.mubr.f32.mxu0 0.0
    %230 = vmatmul.mubr.f32.gmra.mrb[0].mxu0 %v140
    %v231 = vpop.f32.mrb[0].mxu0
    %v232 = vadd.f32 0.0, %v231
    %v233 = vpop.f32.mrb[0].mxu0
    %234 = vmatprep.mubr.f32.mxu0 0.0
    %235 = vmatmul.mubr.f32.gmra.mrb[0].mxu0 %v143
    %v236 = vpop.f32.mrb[0].mxu0
    %v237 = vadd.f32 0.0, %v236
    %v238 = vpop.f32.mrb[0].mxu0
    %239 = vmatprep.mubr.f32.mxu0 0.0
    %240 = vmatmul.mubr.f32.gmra.mrb[0].mxu0 %v146
    %v241 = vpop.f32.mrb[0].mxu0
    %v242 = vadd.f32 0.0, %v241
    %v243 = vpop.f32.mrb[0].mxu0
    %244 = vmatprep.mubr.f32.mxu0 0.0
    %245 = vmatmul.mubr.f32.gmra.mrb[0].mxu0 %v149
    %v246 = vpop.f32.mrb[0].mxu0
    %v247 = vadd.f32 0.0, %v246
    %v248 = vpop.f32.mrb[0].mxu0
    %249 = vmatprep.mubr.f32.mxu0 0.0
    %250 = vmatmul.mubr.f32.gmra.mrb[0].mxu0 %v152
    %v251 = vpop.f32.mrb[0].mxu0
    %v252 = vadd.f32 0.0, %v251
    %v253 = vpop.f32.mrb[0].mxu0
    %254 = vmatprep.mubr.f32.mxu0 0.0
    %255 = vmatmul.mubr.f32.gmra.mrb[0].mxu0 %v155
    %v256 = vpop.f32.mrb[0].mxu0
    %v257 = vadd.f32 0.0, %v256
    %v258 = vpop.f32.mrb[0].mxu0
    %259 = vmatprep.mubr.f32.mxu0 0.0
    %260 = vmatmul.mubr.f32.gmra.mrb[0].mxu0 %v158
    %v261 = vpop.f32.mrb[0].mxu0
    %v262 = vadd.f32 0.0, %v261
    %v263 = vpop.f32.mrb[0].mxu0
    %264 = vdwg.mxu0
    %vm265 = vcmask 523264
    %266 = vst.msk [vmem:[%s3] sm:$0xff] %vm265, %v227
    %267 = vst.msk [vmem:[%s3 + $0x8] sm:$0xff] %vm265, %v232
    %268 = vst.msk [vmem:[%s3 + $0x10] sm:$0xff] %vm265, %v237
    %269 = vst.msk [vmem:[%s3 + $0x18] sm:$0xff] %vm265, %v242
    %270 = vst.msk [vmem:[%s3 + $0x20] sm:$0xff] %vm265, %v247
    %271 = vst.msk [vmem:[%s3 + $0x28] sm:$0xff] %vm265, %v252
    %272 = vst.msk [vmem:[%s3 + $0x30] sm:$0xff] %vm265, %v257
    %273 = vst.msk [vmem:[%s3 + $0x38] sm:$0xff] %vm265, %v262
    %s274 = scalar_lea.vmem [#allocation2], 16
    %v275 = vld [vmem:[%s274] sm:$0xff]
    %v276 = vld [vmem:[%s274 + $0x8] sm:$0xff]
    %v277 = vld [vmem:[#allocation4] sm:$0xff]
    %v278 = vld [vmem:[#allocation4 + $0x8] sm:$0xff]
    %v280 = vsel %vm46, %v275, 0
    %v283 = vsel %vm46, %v276, 0
    %285 = vmatprep.subr.mxu0 0.0
    %286 = vmatpush1.msra.mxu0 %v277
    %287 = vmatprep.subr.mxu0 0.0
    %288 = vmatpush1.msra.mxu0 %v278
    %289 = vmatprep.subr.mxu0 0.0
    %290 = vmatpush1.msra.mxu0 0.0
    %291 = vmatprep.subr.mxu0 0.0
    %292 = vmatpush1.msra.mxu0 0.0
    %293 = vmatprep.subr.mxu0 0.0
    %294 = vmatpush1.msra.mxu0 0.0
    %295 = vmatprep.subr.mxu0 0.0
    %296 = vmatpush1.msra.mxu0 0.0
    %297 = vmatprep.subr.mxu0 0.0
    %298 = vmatpush1.msra.mxu0 0.0
    %299 = vmatprep.subr.mxu0 0.0
    %300 = vmatpush1.msra.mxu0 0.0
    %301 = vmatprep.subr.mxu0 0.0
    %302 = vmatpush1.msra.mxu0 0.0
    %303 = vmatprep.subr.mxu0 0.0
    %304 = vmatpush1.msra.mxu0 0.0
    %305 = vmatprep.subr.mxu0 0.0
    %306 = vmatpush1.msra.mxu0 0.0
    %307 = vmatprep.subr.mxu0 0.0
    %308 = vmatpush1.msra.mxu0 0.0
    %309 = vmatprep.subr.mxu0 0.0
    %310 = vmatpush1.msra.mxu0 0.0
    %311 = vmatprep.subr.mxu0 0.0
    %312 = vmatpush1.msra.mxu0 0.0
    %313 = vmatprep.subr.mxu0 0.0
    %314 = vmatpush1.msra.mxu0 0.0
    %315 = vmatprep.subr.mxu0 0.0
    %316 = vmatpush1.msra.mxu0 0.0
    %317 = vmatprep.subr.mxu0 0.0
    %318 = vmatpush1.msra.mxu0 0.0
    %319 = vmatprep.subr.mxu0 0.0
    %320 = vmatpush1.msra.mxu0 0.0
    %321 = vmatprep.subr.mxu0 0.0
    %322 = vmatpush1.msra.mxu0 0.0
    %323 = vmatprep.subr.mxu0 0.0
    %324 = vmatpush1.msra.mxu0 0.0
    %325 = vmatprep.subr.mxu0 0.0
    %326 = vmatpush1.msra.mxu0 0.0
    %327 = vmatprep.subr.mxu0 0.0
    %328 = vmatpush1.msra.mxu0 0.0
    %329 = vmatprep.subr.mxu0 0.0
    %330 = vmatpush1.msra.mxu0 0.0
    %331 = vmatprep.subr.mxu0 0.0
    %332 = vmatpush1.msra.mxu0 0.0
    %333 = vmatprep.subr.mxu0 0.0
    %334 = vmatpush1.msra.mxu0 0.0
    %335 = vmatprep.subr.mxu0 0.0
    %336 = vmatpush1.msra.mxu0 0.0
    %337 = vmatprep.subr.mxu0 0.0
    %338 = vmatpush1.msra.mxu0 0.0
    %339 = vmatprep.subr.mxu0 0.0
    %340 = vmatpush1.msra.mxu0 0.0
    %341 = vmatprep.subr.mxu0 0.0
    %342 = vmatpush1.msra.mxu0 0.0
    %343 = vmatprep.subr.mxu0 0.0
    %344 = vmatpush1.msra.mxu0 0.0
    %345 = vmatprep.subr.mxu0 0.0
    %346 = vmatpush1.msra.mxu0 0.0
    %347 = vmatprep.subr.mxu0 0.0
    %348 = vmatpush1.msra.mxu0 0.0
    %349 = vmatprep.mubr.f32.mxu0 0.0
    %350 = vmatmul.mubr.f32.gmra.mrb[0].mxu0 %v280
    %v351 = vpop.f32.mrb[0].mxu0
    %v352 = vadd.f32 0.0, %v351
    %v353 = vpop.f32.mrb[0].mxu0
    %354 = vmatprep.mubr.f32.mxu0 0.0
    %355 = vmatmul.mubr.f32.gmra.mrb[0].mxu0 %v283
    %v356 = vpop.f32.mrb[0].mxu0
    %v357 = vadd.f32 0.0, %v356
    %v358 = vpop.f32.mrb[0].mxu0
    %359 = vdwg.mxu0
    %v360 = vld [vmem:[%s1] sm:$0xff]
    %v361 = vld [vmem:[%s1 + $0x8] sm:$0xff]
    %v362 = vld [vmem:[%s1 + $0x10] sm:$0xff]
    %v363 = vld [vmem:[%s1 + $0x18] sm:$0xff]
    %v364 = vld [vmem:[%s1 + $0x20] sm:$0xff]
    %v365 = vld [vmem:[%s1 + $0x28] sm:$0xff]
    %v366 = vld [vmem:[%s1 + $0x30] sm:$0xff]
    %v367 = vld [vmem:[%s1 + $0x38] sm:$0xff]
    %v369 = vsel %vm46, %v360, 0
    %v372 = vsel %vm46, %v361, 0
    %v375 = vsel %vm46, %v362, 0
    %v378 = vsel %vm46, %v363, 0
    %v381 = vsel %vm46, %v364, 0
    %v384 = vsel %vm46, %v365, 0
    %v387 = vsel %vm46, %v366, 0
    %v390 = vsel %vm46, %v367, 0
    %392 = vmatprep.subr.mxu0 0.0
    %393 = vmatpush1.msra.mxu0 %v352
    %394 = vmatprep.subr.mxu0 0.0
    %395 = vmatpush1.msra.mxu0 %v357
    %396 = vmatprep.subr.mxu0 0.0
    %397 = vmatpush1.msra.mxu0 0.0
    %398 = vmatprep.subr.mxu0 0.0
    %399 = vmatpush1.msra.mxu0 0.0
    %400 = vmatprep.subr.mxu0 0.0
    %401 = vmatpush1.msra.mxu0 0.0
    %402 = vmatprep.subr.mxu0 0.0
    %403 = vmatpush1.msra.mxu0 0.0
    %404 = vmatprep.subr.mxu0 0.0
    %405 = vmatpush1.msra.mxu0 0.0
    %406 = vmatprep.subr.mxu0 0.0
    %407 = vmatpush1.msra.mxu0 0.0
    %408 = vmatprep.subr.mxu0 0.0
    %409 = vmatpush1.msra.mxu0 0.0
    %410 = vmatprep.subr.mxu0 0.0
    %411 = vmatpush1.msra.mxu0 0.0
    %412 = vmatprep.subr.mxu0 0.0
    %413 = vmatpush1.msra.mxu0 0.0
    %414 = vmatprep.subr.mxu0 0.0
    %415 = vmatpush1.msra.mxu0 0.0
    %416 = vmatprep.subr.mxu0 0.0
    %417 = vmatpush1.msra.mxu0 0.0
    %418 = vmatprep.subr.mxu0 0.0
    %419 = vmatpush1.msra.mxu0 0.0
    %420 = vmatprep.subr.mxu0 0.0
    %421 = vmatpush1.msra.mxu0 0.0
    %422 = vmatprep.subr.mxu0 0.0
    %423 = vmatpush1.msra.mxu0 0.0
    %424 = vmatprep.subr.mxu0 0.0
    %425 = vmatpush1.msra.mxu0 0.0
    %426 = vmatprep.subr.mxu0 0.0
    %427 = vmatpush1.msra.mxu0 0.0
    %428 = vmatprep.subr.mxu0 0.0
    %429 = vmatpush1.msra.mxu0 0.0
    %430 = vmatprep.subr.mxu0 0.0
    %431 = vmatpush1.msra.mxu0 0.0
    %432 = vmatprep.subr.mxu0 0.0
    %433 = vmatpush1.msra.mxu0 0.0
    %434 = vmatprep.subr.mxu0 0.0
    %435 = vmatpush1.msra.mxu0 0.0
    %436 = vmatprep.subr.mxu0 0.0
    %437 = vmatpush1.msra.mxu0 0.0
    %438 = vmatprep.subr.mxu0 0.0
    %439 = vmatpush1.msra.mxu0 0.0
    %440 = vmatprep.subr.mxu0 0.0
    %441 = vmatpush1.msra.mxu0 0.0
    %442 = vmatprep.subr.mxu0 0.0
    %443 = vmatpush1.msra.mxu0 0.0
    %444 = vmatprep.subr.mxu0 0.0
    %445 = vmatpush1.msra.mxu0 0.0
    %446 = vmatprep.subr.mxu0 0.0
    %447 = vmatpush1.msra.mxu0 0.0
    %448 = vmatprep.subr.mxu0 0.0
    %449 = vmatpush1.msra.mxu0 0.0
    %450 = vmatprep.subr.mxu0 0.0
    %451 = vmatpush1.msra.mxu0 0.0
    %452 = vmatprep.subr.mxu0 0.0
    %453 = vmatpush1.msra.mxu0 0.0
    %454 = vmatprep.subr.mxu0 0.0
    %455 = vmatpush1.msra.mxu0 0.0
    %456 = vmatprep.mubr.f32.mxu0 0.0
    %457 = vmatmul.mubr.f32.gmra.mrb[0].mxu0 %v369
    %v458 = vpop.f32.mrb[0].mxu0
    %v459 = vadd.f32 0.0, %v458
    %v460 = vpop.f32.mrb[0].mxu0
    %461 = vmatprep.mubr.f32.mxu0 0.0
    %462 = vmatmul.mubr.f32.gmra.mrb[0].mxu0 %v372
    %v463 = vpop.f32.mrb[0].mxu0
    %v464 = vadd.f32 0.0, %v463
    %v465 = vpop.f32.mrb[0].mxu0
    %466 = vmatprep.mubr.f32.mxu0 0.0
    %467 = vmatmul.mubr.f32.gmra.mrb[0].mxu0 %v375
    %v468 = vpop.f32.mrb[0].mxu0
    %v469 = vadd.f32 0.0, %v468
    %v470 = vpop.f32.mrb[0].mxu0
    %471 = vmatprep.mubr.f32.mxu0 0.0
    %472 = vmatmul.mubr.f32.gmra.mrb[0].mxu0 %v378
    %v473 = vpop.f32.mrb[0].mxu0
    %v474 = vadd.f32 0.0, %v473
    %v475 = vpop.f32.mrb[0].mxu0
    %476 = vmatprep.mubr.f32.mxu0 0.0
    %477 = vmatmul.mubr.f32.gmra.mrb[0].mxu0 %v381
    %v478 = vpop.f32.mrb[0].mxu0
    %v479 = vadd.f32 0.0, %v478
    %v480 = vpop.f32.mrb[0].mxu0
    %481 = vmatprep.mubr.f32.mxu0 0.0
    %482 = vmatmul.mubr.f32.gmra.mrb[0].mxu0 %v384
    %v483 = vpop.f32.mrb[0].mxu0
    %v484 = vadd.f32 0.0, %v483
    %v485 = vpop.f32.mrb[0].mxu0
    %486 = vmatprep.mubr.f32.mxu0 0.0
    %487 = vmatmul.mubr.f32.gmra.mrb[0].mxu0 %v387
    %v488 = vpop.f32.mrb[0].mxu0
    %v489 = vadd.f32 0.0, %v488
    %v490 = vpop.f32.mrb[0].mxu0
    %491 = vmatprep.mubr.f32.mxu0 0.0
    %492 = vmatmul.mubr.f32.gmra.mrb[0].mxu0 %v390
    %v493 = vpop.f32.mrb[0].mxu0
    %v494 = vadd.f32 0.0, %v493
    %v495 = vpop.f32.mrb[0].mxu0
    %496 = vdwg.mxu0
    %s497 = scalar_lea.vmem %s3, 64
    %498 = vst.msk [vmem:[%s497] sm:$0xff] %vm265, %v459
    %499 = vst.msk [vmem:[%s497 + $0x8] sm:$0xff] %vm265, %v464
    %500 = vst.msk [vmem:[%s497 + $0x10] sm:$0xff] %vm265, %v469
    %501 = vst.msk [vmem:[%s497 + $0x18] sm:$0xff] %vm265, %v474
    %502 = vst.msk [vmem:[%s497 + $0x20] sm:$0xff] %vm265, %v479
    %503 = vst.msk [vmem:[%s497 + $0x28] sm:$0xff] %vm265, %v484
    %504 = vst.msk [vmem:[%s497 + $0x30] sm:$0xff] %vm265, %v489
    %505 = vst.msk [vmem:[%s497 + $0x38] sm:$0xff] %vm265, %v494
    %s506 = scalar_lea.vmem [#allocation2], 32
    %v507 = vld [vmem:[%s506] sm:$0xff]
    %v508 = vld [vmem:[%s506 + $0x8] sm:$0xff]
    %v509 = vld [vmem:[#allocation4] sm:$0xff]
    %v510 = vld [vmem:[#allocation4 + $0x8] sm:$0xff]
    %v512 = vsel %vm46, %v507, 0
    %v515 = vsel %vm46, %v508, 0
    %517 = vmatprep.subr.mxu0 0.0
    %518 = vmatpush1.msra.mxu0 %v509
    %519 = vmatprep.subr.mxu0 0.0
    %520 = vmatpush1.msra.mxu0 %v510
    %521 = vmatprep.subr.mxu0 0.0
    %522 = vmatpush1.msra.mxu0 0.0
    %523 = vmatprep.subr.mxu0 0.0
    %524 = vmatpush1.msra.mxu0 0.0
    %525 = vmatprep.subr.mxu0 0.0
    %526 = vmatpush1.msra.mxu0 0.0
    %527 = vmatprep.subr.mxu0 0.0
    %528 = vmatpush1.msra.mxu0 0.0
    %529 = vmatprep.subr.mxu0 0.0
    %530 = vmatpush1.msra.mxu0 0.0
    %531 = vmatprep.subr.mxu0 0.0
    %532 = vmatpush1.msra.mxu0 0.0
    %533 = vmatprep.subr.mxu0 0.0
    %534 = vmatpush1.msra.mxu0 0.0
    %535 = vmatprep.subr.mxu0 0.0
    %536 = vmatpush1.msra.mxu0 0.0
    %537 = vmatprep.subr.mxu0 0.0
    %538 = vmatpush1.msra.mxu0 0.0
    %539 = vmatprep.subr.mxu0 0.0
    %540 = vmatpush1.msra.mxu0 0.0
    %541 = vmatprep.subr.mxu0 0.0
    %542 = vmatpush1.msra.mxu0 0.0
    %543 = vmatprep.subr.mxu0 0.0
    %544 = vmatpush1.msra.mxu0 0.0
    %545 = vmatprep.subr.mxu0 0.0
    %546 = vmatpush1.msra.mxu0 0.0
    %547 = vmatprep.subr.mxu0 0.0
    %548 = vmatpush1.msra.mxu0 0.0
    %549 = vmatprep.subr.mxu0 0.0
    %550 = vmatpush1.msra.mxu0 0.0
    %551 = vmatprep.subr.mxu0 0.0
    %552 = vmatpush1.msra.mxu0 0.0
    %553 = vmatprep.subr.mxu0 0.0
    %554 = vmatpush1.msra.mxu0 0.0
    %555 = vmatprep.subr.mxu0 0.0
    %556 = vmatpush1.msra.mxu0 0.0
    %557 = vmatprep.subr.mxu0 0.0
    %558 = vmatpush1.msra.mxu0 0.0
    %559 = vmatprep.subr.mxu0 0.0
    %560 = vmatpush1.msra.mxu0 0.0
    %561 = vmatprep.subr.mxu0 0.0
    %562 = vmatpush1.msra.mxu0 0.0
    %563 = vmatprep.subr.mxu0 0.0
    %564 = vmatpush1.msra.mxu0 0.0
    %565 = vmatprep.subr.mxu0 0.0
    %566 = vmatpush1.msra.mxu0 0.0
    %567 = vmatprep.subr.mxu0 0.0
    %568 = vmatpush1.msra.mxu0 0.0
    %569 = vmatprep.subr.mxu0 0.0
    %570 = vmatpush1.msra.mxu0 0.0
    %571 = vmatprep.subr.mxu0 0.0
    %572 = vmatpush1.msra.mxu0 0.0
    %573 = vmatprep.subr.mxu0 0.0
    %574 = vmatpush1.msra.mxu0 0.0
    %575 = vmatprep.subr.mxu0 0.0
    %576 = vmatpush1.msra.mxu0 0.0
    %577 = vmatprep.subr.mxu0 0.0
    %578 = vmatpush1.msra.mxu0 0.0
    %579 = vmatprep.subr.mxu0 0.0
    %580 = vmatpush1.msra.mxu0 0.0
    %581 = vmatprep.mubr.f32.mxu0 0.0
    %582 = vmatmul.mubr.f32.gmra.mrb[0].mxu0 %v512
    %v583 = vpop.f32.mrb[0].mxu0
    %v584 = vadd.f32 0.0, %v583
    %v585 = vpop.f32.mrb[0].mxu0
    %586 = vmatprep.mubr.f32.mxu0 0.0
    %587 = vmatmul.mubr.f32.gmra.mrb[0].mxu0 %v515
    %v588 = vpop.f32.mrb[0].mxu0
    %v589 = vadd.f32 0.0, %v588
    %v590 = vpop.f32.mrb[0].mxu0
    %591 = vdwg.mxu0
    %v592 = vld [vmem:[%s1] sm:$0xff]
    %v593 = vld [vmem:[%s1 + $0x8] sm:$0xff]
    %v594 = vld [vmem:[%s1 + $0x10] sm:$0xff]
    %v595 = vld [vmem:[%s1 + $0x18] sm:$0xff]
    %v596 = vld [vmem:[%s1 + $0x20] sm:$0xff]
    %v597 = vld [vmem:[%s1 + $0x28] sm:$0xff]
    %v598 = vld [vmem:[%s1 + $0x30] sm:$0xff]
    %v599 = vld [vmem:[%s1 + $0x38] sm:$0xff]
    %v601 = vsel %vm46, %v592, 0
    %v604 = vsel %vm46, %v593, 0
    %v607 = vsel %vm46, %v594, 0
    %v610 = vsel %vm46, %v595, 0
    %v613 = vsel %vm46, %v596, 0
    %v616 = vsel %vm46, %v597, 0
    %v619 = vsel %vm46, %v598, 0
    %v622 = vsel %vm46, %v599, 0
    %624 = vmatprep.subr.mxu0 0.0
    %625 = vmatpush1.msra.mxu0 %v584
    %626 = vmatprep.subr.mxu0 0.0
    %627 = vmatpush1.msra.mxu0 %v589
    %628 = vmatprep.subr.mxu0 0.0
    %629 = vmatpush1.msra.mxu0 0.0
    %630 = vmatprep.subr.mxu0 0.0
    %631 = vmatpush1.msra.mxu0 0.0
    %632 = vmatprep.subr.mxu0 0.0
    %633 = vmatpush1.msra.mxu0 0.0
    %634 = vmatprep.subr.mxu0 0.0
    %635 = vmatpush1.msra.mxu0 0.0
    %636 = vmatprep.subr.mxu0 0.0
    %637 = vmatpush1.msra.mxu0 0.0
    %638 = vmatprep.subr.mxu0 0.0
    %639 = vmatpush1.msra.mxu0 0.0
    %640 = vmatprep.subr.mxu0 0.0
    %641 = vmatpush1.msra.mxu0 0.0
    %642 = vmatprep.subr.mxu0 0.0
    %643 = vmatpush1.msra.mxu0 0.0
    %644 = vmatprep.subr.mxu0 0.0
    %645 = vmatpush1.msra.mxu0 0.0
    %646 = vmatprep.subr.mxu0 0.0
    %647 = vmatpush1.msra.mxu0 0.0
    %648 = vmatprep.subr.mxu0 0.0
    %649 = vmatpush1.msra.mxu0 0.0
    %650 = vmatprep.subr.mxu0 0.0
    %651 = vmatpush1.msra.mxu0 0.0
    %652 = vmatprep.subr.mxu0 0.0
    %653 = vmatpush1.msra.mxu0 0.0
    %654 = vmatprep.subr.mxu0 0.0
    %655 = vmatpush1.msra.mxu0 0.0
    %656 = vmatprep.subr.mxu0 0.0
    %657 = vmatpush1.msra.mxu0 0.0
    %658 = vmatprep.subr.mxu0 0.0
    %659 = vmatpush1.msra.mxu0 0.0
    %660 = vmatprep.subr.mxu0 0.0
    %661 = vmatpush1.msra.mxu0 0.0
    %662 = vmatprep.subr.mxu0 0.0
    %663 = vmatpush1.msra.mxu0 0.0
    %664 = vmatprep.subr.mxu0 0.0
    %665 = vmatpush1.msra.mxu0 0.0
    %666 = vmatprep.subr.mxu0 0.0
    %667 = vmatpush1.msra.mxu0 0.0
    %668 = vmatprep.subr.mxu0 0.0
    %669 = vmatpush1.msra.mxu0 0.0
    %670 = vmatprep.subr.mxu0 0.0
    %671 = vmatpush1.msra.mxu0 0.0
    %672 = vmatprep.subr.mxu0 0.0
    %673 = vmatpush1.msra.mxu0 0.0
    %674 = vmatprep.subr.mxu0 0.0
    %675 = vmatpush1.msra.mxu0 0.0
    %676 = vmatprep.subr.mxu0 0.0
    %677 = vmatpush1.msra.mxu0 0.0
    %678 = vmatprep.subr.mxu0 0.0
    %679 = vmatpush1.msra.mxu0 0.0
    %680 = vmatprep.subr.mxu0 0.0
    %681 = vmatpush1.msra.mxu0 0.0
    %682 = vmatprep.subr.mxu0 0.0
    %683 = vmatpush1.msra.mxu0 0.0
    %684 = vmatprep.subr.mxu0 0.0
    %685 = vmatpush1.msra.mxu0 0.0
    %686 = vmatprep.subr.mxu0 0.0
    %687 = vmatpush1.msra.mxu0 0.0
    %688 = vmatprep.mubr.f32.mxu0 0.0
    %689 = vmatmul.mubr.f32.gmra.mrb[0].mxu0 %v601
    %v690 = vpop.f32.mrb[0].mxu0
    %v691 = vadd.f32 0.0, %v690
    %v692 = vpop.f32.mrb[0].mxu0
    %693 = vmatprep.mubr.f32.mxu0 0.0
    %694 = vmatmul.mubr.f32.gmra.mrb[0].mxu0 %v604
    %v695 = vpop.f32.mrb[0].mxu0
    %v696 = vadd.f32 0.0, %v695
    %v697 = vpop.f32.mrb[0].mxu0
    %698 = vmatprep.mubr.f32.mxu0 0.0
    %699 = vmatmul.mubr.f32.gmra.mrb[0].mxu0 %v607
    %v700 = vpop.f32.mrb[0].mxu0
    %v701 = vadd.f32 0.0, %v700
    %v702 = vpop.f32.mrb[0].mxu0
    %703 = vmatprep.mubr.f32.mxu0 0.0
    %704 = vmatmul.mubr.f32.gmra.mrb[0].mxu0 %v610
    %v705 = vpop.f32.mrb[0].mxu0
    %v706 = vadd.f32 0.0, %v705
    %v707 = vpop.f32.mrb[0].mxu0
    %708 = vmatprep.mubr.f32.mxu0 0.0
    %709 = vmatmul.mubr.f32.gmra.mrb[0].mxu0 %v613
    %v710 = vpop.f32.mrb[0].mxu0
    %v711 = vadd.f32 0.0, %v710
    %v712 = vpop.f32.mrb[0].mxu0
    %713 = vmatprep.mubr.f32.mxu0 0.0
    %714 = vmatmul.mubr.f32.gmra.mrb[0].mxu0 %v616
    %v715 = vpop.f32.mrb[0].mxu0
    %v716 = vadd.f32 0.0, %v715
    %v717 = vpop.f32.mrb[0].mxu0
    %718 = vmatprep.mubr.f32.mxu0 0.0
    %719 = vmatmul.mubr.f32.gmra.mrb[0].mxu0 %v619
    %v720 = vpop.f32.mrb[0].mxu0
    %v721 = vadd.f32 0.0, %v720
    %v722 = vpop.f32.mrb[0].mxu0
    %723 = vmatprep.mubr.f32.mxu0 0.0
    %724 = vmatmul.mubr.f32.gmra.mrb[0].mxu0 %v622
    %v725 = vpop.f32.mrb[0].mxu0
    %v726 = vadd.f32 0.0, %v725
    %v727 = vpop.f32.mrb[0].mxu0
    %728 = vdwg.mxu0
    %s729 = scalar_lea.vmem %s3, 128
    %730 = vst.msk [vmem:[%s729] sm:$0xff] %vm265, %v691
    %731 = vst.msk [vmem:[%s729 + $0x8] sm:$0xff] %vm265, %v696
    %732 = vst.msk [vmem:[%s729 + $0x10] sm:$0xff] %vm265, %v701
    %733 = vst.msk [vmem:[%s729 + $0x18] sm:$0xff] %vm265, %v706
    %734 = vst.msk [vmem:[%s729 + $0x20] sm:$0xff] %vm265, %v711
    %735 = vst.msk [vmem:[%s729 + $0x28] sm:$0xff] %vm265, %v716
    %736 = vst.msk [vmem:[%s729 + $0x30] sm:$0xff] %vm265, %v721
    %737 = vst.msk [vmem:[%s729 + $0x38] sm:$0xff] %vm265, %v726
    %s738 = scalar_lea.vmem [#allocation2], 48
    %v739 = vld [vmem:[%s738] sm:$0xff]
    %v740 = vld [vmem:[%s738 + $0x8] sm:$0xff]
    %v741 = vld [vmem:[#allocation4] sm:$0xff]
    %v742 = vld [vmem:[#allocation4 + $0x8] sm:$0xff]
    %v744 = vsel %vm46, %v739, 0
    %v747 = vsel %vm46, %v740, 0
    %749 = vmatprep.subr.mxu0 0.0
    %750 = vmatpush1.msra.mxu0 %v741
    %751 = vmatprep.subr.mxu0 0.0
    %752 = vmatpush1.msra.mxu0 %v742
    %753 = vmatprep.subr.mxu0 0.0
    %754 = vmatpush1.msra.mxu0 0.0
    %755 = vmatprep.subr.mxu0 0.0
    %756 = vmatpush1.msra.mxu0 0.0
    %757 = vmatprep.subr.mxu0 0.0
    %758 = vmatpush1.msra.mxu0 0.0
    %759 = vmatprep.subr.mxu0 0.0
    %760 = vmatpush1.msra.mxu0 0.0
    %761 = vmatprep.subr.mxu0 0.0
    %762 = vmatpush1.msra.mxu0 0.0
    %763 = vmatprep.subr.mxu0 0.0
    %764 = vmatpush1.msra.mxu0 0.0
    %765 = vmatprep.subr.mxu0 0.0
    %766 = vmatpush1.msra.mxu0 0.0
    %767 = vmatprep.subr.mxu0 0.0
    %768 = vmatpush1.msra.mxu0 0.0
    %769 = vmatprep.subr.mxu0 0.0
    %770 = vmatpush1.msra.mxu0 0.0
    %771 = vmatprep.subr.mxu0 0.0
    %772 = vmatpush1.msra.mxu0 0.0
    %773 = vmatprep.subr.mxu0 0.0
    %774 = vmatpush1.msra.mxu0 0.0
    %775 = vmatprep.subr.mxu0 0.0
    %776 = vmatpush1.msra.mxu0 0.0
    %777 = vmatprep.subr.mxu0 0.0
    %778 = vmatpush1.msra.mxu0 0.0
    %779 = vmatprep.subr.mxu0 0.0
    %780 = vmatpush1.msra.mxu0 0.0
    %781 = vmatprep.subr.mxu0 0.0
    %782 = vmatpush1.msra.mxu0 0.0
    %783 = vmatprep.subr.mxu0 0.0
    %784 = vmatpush1.msra.mxu0 0.0
    %785 = vmatprep.subr.mxu0 0.0
    %786 = vmatpush1.msra.mxu0 0.0
    %787 = vmatprep.subr.mxu0 0.0
    %788 = vmatpush1.msra.mxu0 0.0
    %789 = vmatprep.subr.mxu0 0.0
    %790 = vmatpush1.msra.mxu0 0.0
    %791 = vmatprep.subr.mxu0 0.0
    %792 = vmatpush1.msra.mxu0 0.0
    %793 = vmatprep.subr.mxu0 0.0
    %794 = vmatpush1.msra.mxu0 0.0
    %795 = vmatprep.subr.mxu0 0.0
    %796 = vmatpush1.msra.mxu0 0.0
    %797 = vmatprep.subr.mxu0 0.0
    %798 = vmatpush1.msra.mxu0 0.0
    %799 = vmatprep.subr.mxu0 0.0
    %800 = vmatpush1.msra.mxu0 0.0
    %801 = vmatprep.subr.mxu0 0.0
    %802 = vmatpush1.msra.mxu0 0.0
    %803 = vmatprep.subr.mxu0 0.0
    %804 = vmatpush1.msra.mxu0 0.0
    %805 = vmatprep.subr.mxu0 0.0
    %806 = vmatpush1.msra.mxu0 0.0
    %807 = vmatprep.subr.mxu0 0.0
    %808 = vmatpush1.msra.mxu0 0.0
    %809 = vmatprep.subr.mxu0 0.0
    %810 = vmatpush1.msra.mxu0 0.0
    %811 = vmatprep.subr.mxu0 0.0
    %812 = vmatpush1.msra.mxu0 0.0
    %813 = vmatprep.mubr.f32.mxu0 0.0
    %814 = vmatmul.mubr.f32.gmra.mrb[0].mxu0 %v744
    %v815 = vpop.f32.mrb[0].mxu0
    %v816 = vadd.f32 0.0, %v815
    %v817 = vpop.f32.mrb[0].mxu0
    %818 = vmatprep.mubr.f32.mxu0 0.0
    %819 = vmatmul.mubr.f32.gmra.mrb[0].mxu0 %v747
    %v820 = vpop.f32.mrb[0].mxu0
    %v821 = vadd.f32 0.0, %v820
    %v822 = vpop.f32.mrb[0].mxu0
    %823 = vdwg.mxu0
    %v824 = vld [vmem:[%s1] sm:$0xff]
    %v825 = vld [vmem:[%s1 + $0x8] sm:$0xff]
    %v826 = vld [vmem:[%s1 + $0x10] sm:$0xff]
    %v827 = vld [vmem:[%s1 + $0x18] sm:$0xff]
    %v828 = vld [vmem:[%s1 + $0x20] sm:$0xff]
    %v829 = vld [vmem:[%s1 + $0x28] sm:$0xff]
    %v830 = vld [vmem:[%s1 + $0x30] sm:$0xff]
    %v831 = vld [vmem:[%s1 + $0x38] sm:$0xff]
    %v833 = vsel %vm46, %v824, 0
    %v836 = vsel %vm46, %v825, 0
    %v839 = vsel %vm46, %v826, 0
    %v842 = vsel %vm46, %v827, 0
    %v845 = vsel %vm46, %v828, 0
    %v848 = vsel %vm46, %v829, 0
    %v851 = vsel %vm46, %v830, 0
    %v854 = vsel %vm46, %v831, 0
    %856 = vmatprep.subr.mxu0 0.0
    %857 = vmatpush1.msra.mxu0 %v816
    %858 = vmatprep.subr.mxu0 0.0
    %859 = vmatpush1.msra.mxu0 %v821
    %860 = vmatprep.subr.mxu0 0.0
    %861 = vmatpush1.msra.mxu0 0.0
    %862 = vmatprep.subr.mxu0 0.0
    %863 = vmatpush1.msra.mxu0 0.0
    %864 = vmatprep.subr.mxu0 0.0
    %865 = vmatpush1.msra.mxu0 0.0
    %866 = vmatprep.subr.mxu0 0.0
    %867 = vmatpush1.msra.mxu0 0.0
    %868 = vmatprep.subr.mxu0 0.0
    %869 = vmatpush1.msra.mxu0 0.0
    %870 = vmatprep.subr.mxu0 0.0
    %871 = vmatpush1.msra.mxu0 0.0
    %872 = vmatprep.subr.mxu0 0.0
    %873 = vmatpush1.msra.mxu0 0.0
    %874 = vmatprep.subr.mxu0 0.0
    %875 = vmatpush1.msra.mxu0 0.0
    %876 = vmatprep.subr.mxu0 0.0
    %877 = vmatpush1.msra.mxu0 0.0
    %878 = vmatprep.subr.mxu0 0.0
    %879 = vmatpush1.msra.mxu0 0.0
    %880 = vmatprep.subr.mxu0 0.0
    %881 = vmatpush1.msra.mxu0 0.0
    %882 = vmatprep.subr.mxu0 0.0
    %883 = vmatpush1.msra.mxu0 0.0
    %884 = vmatprep.subr.mxu0 0.0
    %885 = vmatpush1.msra.mxu0 0.0
    %886 = vmatprep.subr.mxu0 0.0
    %887 = vmatpush1.msra.mxu0 0.0
    %888 = vmatprep.subr.mxu0 0.0
    %889 = vmatpush1.msra.mxu0 0.0
    %890 = vmatprep.subr.mxu0 0.0
    %891 = vmatpush1.msra.mxu0 0.0
    %892 = vmatprep.subr.mxu0 0.0
    %893 = vmatpush1.msra.mxu0 0.0
    %894 = vmatprep.subr.mxu0 0.0
    %895 = vmatpush1.msra.mxu0 0.0
    %896 = vmatprep.subr.mxu0 0.0
    %897 = vmatpush1.msra.mxu0 0.0
    %898 = vmatprep.subr.mxu0 0.0
    %899 = vmatpush1.msra.mxu0 0.0
    %900 = vmatprep.subr.mxu0 0.0
    %901 = vmatpush1.msra.mxu0 0.0
    %902 = vmatprep.subr.mxu0 0.0
    %903 = vmatpush1.msra.mxu0 0.0
    %904 = vmatprep.subr.mxu0 0.0
    %905 = vmatpush1.msra.mxu0 0.0
    %906 = vmatprep.subr.mxu0 0.0
    %907 = vmatpush1.msra.mxu0 0.0
    %908 = vmatprep.subr.mxu0 0.0
    %909 = vmatpush1.msra.mxu0 0.0
    %910 = vmatprep.subr.mxu0 0.0
    %911 = vmatpush1.msra.mxu0 0.0
    %912 = vmatprep.subr.mxu0 0.0
    %913 = vmatpush1.msra.mxu0 0.0
    %914 = vmatprep.subr.mxu0 0.0
    %915 = vmatpush1.msra.mxu0 0.0
    %916 = vmatprep.subr.mxu0 0.0
    %917 = vmatpush1.msra.mxu0 0.0
    %918 = vmatprep.subr.mxu0 0.0
    %919 = vmatpush1.msra.mxu0 0.0
    %920 = vmatprep.mubr.f32.mxu0 0.0
    %921 = vmatmul.mubr.f32.gmra.mrb[0].mxu0 %v833
    %v922 = vpop.f32.mrb[0].mxu0
    %v923 = vadd.f32 0.0, %v922
    %v924 = vpop.f32.mrb[0].mxu0
    %925 = vmatprep.mubr.f32.mxu0 0.0
    %926 = vmatmul.mubr.f32.gmra.mrb[0].mxu0 %v836
    %v927 = vpop.f32.mrb[0].mxu0
    %v928 = vadd.f32 0.0, %v927
    %v929 = vpop.f32.mrb[0].mxu0
    %930 = vmatprep.mubr.f32.mxu0 0.0
    %931 = vmatmul.mubr.f32.gmra.mrb[0].mxu0 %v839
    %v932 = vpop.f32.mrb[0].mxu0
    %v933 = vadd.f32 0.0, %v932
    %v934 = vpop.f32.mrb[0].mxu0
    %935 = vmatprep.mubr.f32.mxu0 0.0
    %936 = vmatmul.mubr.f32.gmra.mrb[0].mxu0 %v842
    %v937 = vpop.f32.mrb[0].mxu0
    %v938 = vadd.f32 0.0, %v937
    %v939 = vpop.f32.mrb[0].mxu0
    %940 = vmatprep.mubr.f32.mxu0 0.0
    %941 = vmatmul.mubr.f32.gmra.mrb[0].mxu0 %v845
    %v942 = vpop.f32.mrb[0].mxu0
    %v943 = vadd.f32 0.0, %v942
    %v944 = vpop.f32.mrb[0].mxu0
    %945 = vmatprep.mubr.f32.mxu0 0.0
    %946 = vmatmul.mubr.f32.gmra.mrb[0].mxu0 %v848
    %v947 = vpop.f32.mrb[0].mxu0
    %v948 = vadd.f32 0.0, %v947
    %v949 = vpop.f32.mrb[0].mxu0
    %950 = vmatprep.mubr.f32.mxu0 0.0
    %951 = vmatmul.mubr.f32.gmra.mrb[0].mxu0 %v851
    %v952 = vpop.f32.mrb[0].mxu0
    %v953 = vadd.f32 0.0, %v952
    %v954 = vpop.f32.mrb[0].mxu0
    %955 = vmatprep.mubr.f32.mxu0 0.0
    %956 = vmatmul.mubr.f32.gmra.mrb[0].mxu0 %v854
    %v957 = vpop.f32.mrb[0].mxu0
    %v958 = vadd.f32 0.0, %v957
    %v959 = vpop.f32.mrb[0].mxu0
    %960 = vdwg.mxu0
    %s961 = scalar_lea.vmem %s3, 192
    %962 = vst.msk [vmem:[%s961] sm:$0xff] %vm265, %v923
    %963 = vst.msk [vmem:[%s961 + $0x8] sm:$0xff] %vm265, %v928
    %964 = vst.msk [vmem:[%s961 + $0x10] sm:$0xff] %vm265, %v933
    %965 = vst.msk [vmem:[%s961 + $0x18] sm:$0xff] %vm265, %v938
    %966 = vst.msk [vmem:[%s961 + $0x20] sm:$0xff] %vm265, %v943
    %967 = vst.msk [vmem:[%s961 + $0x28] sm:$0xff] %vm265, %v948
    %968 = vst.msk [vmem:[%s961 + $0x30] sm:$0xff] %vm265, %v953
    %969 = vst.msk [vmem:[%s961 + $0x38] sm:$0xff] %vm265, %v958
    %s970 = scalar_lea.vmem [#allocation2], 64
    %v971 = vld [vmem:[%s970] sm:$0xff]
    %v972 = vld [vmem:[%s970 + $0x8] sm:$0xff]
    %v973 = vld [vmem:[#allocation4] sm:$0xff]
    %v974 = vld [vmem:[#allocation4 + $0x8] sm:$0xff]
    %v976 = vsel %vm46, %v971, 0
    %v979 = vsel %vm46, %v972, 0
    %981 = vmatprep.subr.mxu0 0.0
    %982 = vmatpush1.msra.mxu0 %v973
    %983 = vmatprep.subr.mxu0 0.0
    %984 = vmatpush1.msra.mxu0 %v974
    %985 = vmatprep.subr.mxu0 0.0
    %986 = vmatpush1.msra.mxu0 0.0
    %987 = vmatprep.subr.mxu0 0.0
    %988 = vmatpush1.msra.mxu0 0.0
    %989 = vmatprep.subr.mxu0 0.0
    %990 = vmatpush1.msra.mxu0 0.0
    %991 = vmatprep.subr.mxu0 0.0
    %992 = vmatpush1.msra.mxu0 0.0
    %993 = vmatprep.subr.mxu0 0.0
    %994 = vmatpush1.msra.mxu0 0.0
    %995 = vmatprep.subr.mxu0 0.0
    %996 = vmatpush1.msra.mxu0 0.0
    %997 = vmatprep.subr.mxu0 0.0
    %998 = vmatpush1.msra.mxu0 0.0
    %999 = vmatprep.subr.mxu0 0.0
    %1000 = vmatpush1.msra.mxu0 0.0
    %1001 = vmatprep.subr.mxu0 0.0
    %1002 = vmatpush1.msra.mxu0 0.0
    %1003 = vmatprep.subr.mxu0 0.0
    %1004 = vmatpush1.msra.mxu0 0.0
    %1005 = vmatprep.subr.mxu0 0.0
    %1006 = vmatpush1.msra.mxu0 0.0
    %1007 = vmatprep.subr.mxu0 0.0
    %1008 = vmatpush1.msra.mxu0 0.0
    %1009 = vmatprep.subr.mxu0 0.0
    %1010 = vmatpush1.msra.mxu0 0.0
    %1011 = vmatprep.subr.mxu0 0.0
    %1012 = vmatpush1.msra.mxu0 0.0
    %1013 = vmatprep.subr.mxu0 0.0
    %1014 = vmatpush1.msra.mxu0 0.0
    %1015 = vmatprep.subr.mxu0 0.0
    %1016 = vmatpush1.msra.mxu0 0.0
    %1017 = vmatprep.subr.mxu0 0.0
    %1018 = vmatpush1.msra.mxu0 0.0
    %1019 = vmatprep.subr.mxu0 0.0
    %1020 = vmatpush1.msra.mxu0 0.0
    %1021 = vmatprep.subr.mxu0 0.0
    %1022 = vmatpush1.msra.mxu0 0.0
    %1023 = vmatprep.subr.mxu0 0.0
    %1024 = vmatpush1.msra.mxu0 0.0
    %1025 = vmatprep.subr.mxu0 0.0
    %1026 = vmatpush1.msra.mxu0 0.0
    %1027 = vmatprep.subr.mxu0 0.0
    %1028 = vmatpush1.msra.mxu0 0.0
    %1029 = vmatprep.subr.mxu0 0.0
    %1030 = vmatpush1.msra.mxu0 0.0
    %1031 = vmatprep.subr.mxu0 0.0
    %1032 = vmatpush1.msra.mxu0 0.0
    %1033 = vmatprep.subr.mxu0 0.0
    %1034 = vmatpush1.msra.mxu0 0.0
    %1035 = vmatprep.subr.mxu0 0.0
    %1036 = vmatpush1.msra.mxu0 0.0
    %1037 = vmatprep.subr.mxu0 0.0
    %1038 = vmatpush1.msra.mxu0 0.0
    %1039 = vmatprep.subr.mxu0 0.0
    %1040 = vmatpush1.msra.mxu0 0.0
    %1041 = vmatprep.subr.mxu0 0.0
    %1042 = vmatpush1.msra.mxu0 0.0
    %1043 = vmatprep.subr.mxu0 0.0
    %1044 = vmatpush1.msra.mxu0 0.0
    %1045 = vmatprep.mubr.f32.mxu0 0.0
    %1046 = vmatmul.mubr.f32.gmra.mrb[0].mxu0 %v976
    %v1047 = vpop.f32.mrb[0].mxu0
    %v1048 = vadd.f32 0.0, %v1047
    %v1049 = vpop.f32.mrb[0].mxu0
    %1050 = vmatprep.mubr.f32.mxu0 0.0
    %1051 = vmatmul.mubr.f32.gmra.mrb[0].mxu0 %v979
    %v1052 = vpop.f32.mrb[0].mxu0
    %v1053 = vadd.f32 0.0, %v1052
    %v1054 = vpop.f32.mrb[0].mxu0
    %1055 = vdwg.mxu0
    %v1056 = vld [vmem:[%s1] sm:$0xff]
    %v1057 = vld [vmem:[%s1 + $0x8] sm:$0xff]
    %v1058 = vld [vmem:[%s1 + $0x10] sm:$0xff]
    %v1059 = vld [vmem:[%s1 + $0x18] sm:$0xff]
    %v1060 = vld [vmem:[%s1 + $0x20] sm:$0xff]
    %v1061 = vld [vmem:[%s1 + $0x28] sm:$0xff]
    %v1062 = vld [vmem:[%s1 + $0x30] sm:$0xff]
    %v1063 = vld [vmem:[%s1 + $0x38] sm:$0xff]
    %v1065 = vsel %vm46, %v1056, 0
    %v1068 = vsel %vm46, %v1057, 0
    %v1071 = vsel %vm46, %v1058, 0
    %v1074 = vsel %vm46, %v1059, 0
    %v1077 = vsel %vm46, %v1060, 0
    %v1080 = vsel %vm46, %v1061, 0
    %v1083 = vsel %vm46, %v1062, 0
    %v1086 = vsel %vm46, %v1063, 0
    %1088 = vmatprep.subr.mxu0 0.0
    %1089 = vmatpush1.msra.mxu0 %v1048
    %1090 = vmatprep.subr.mxu0 0.0
    %1091 = vmatpush1.msra.mxu0 %v1053
    %1092 = vmatprep.subr.mxu0 0.0
    %1093 = vmatpush1.msra.mxu0 0.0
    %1094 = vmatprep.subr.mxu0 0.0
    %1095 = vmatpush1.msra.mxu0 0.0
    %1096 = vmatprep.subr.mxu0 0.0
    %1097 = vmatpush1.msra.mxu0 0.0
    %1098 = vmatprep.subr.mxu0 0.0
    %1099 = vmatpush1.msra.mxu0 0.0
    %1100 = vmatprep.subr.mxu0 0.0
    %1101 = vmatpush1.msra.mxu0 0.0
    %1102 = vmatprep.subr.mxu0 0.0
    %1103 = vmatpush1.msra.mxu0 0.0
    %1104 = vmatprep.subr.mxu0 0.0
    %1105 = vmatpush1.msra.mxu0 0.0
    %1106 = vmatprep.subr.mxu0 0.0
    %1107 = vmatpush1.msra.mxu0 0.0
    %1108 = vmatprep.subr.mxu0 0.0
    %1109 = vmatpush1.msra.mxu0 0.0
    %1110 = vmatprep.subr.mxu0 0.0
    %1111 = vmatpush1.msra.mxu0 0.0
    %1112 = vmatprep.subr.mxu0 0.0
    %1113 = vmatpush1.msra.mxu0 0.0
    %1114 = vmatprep.subr.mxu0 0.0
    %1115 = vmatpush1.msra.mxu0 0.0
    %1116 = vmatprep.subr.mxu0 0.0
    %1117 = vmatpush1.msra.mxu0 0.0
    %1118 = vmatprep.subr.mxu0 0.0
    %1119 = vmatpush1.msra.mxu0 0.0
    %1120 = vmatprep.subr.mxu0 0.0
    %1121 = vmatpush1.msra.mxu0 0.0
    %1122 = vmatprep.subr.mxu0 0.0
    %1123 = vmatpush1.msra.mxu0 0.0
    %1124 = vmatprep.subr.mxu0 0.0
    %1125 = vmatpush1.msra.mxu0 0.0
    %1126 = vmatprep.subr.mxu0 0.0
    %1127 = vmatpush1.msra.mxu0 0.0
    %1128 = vmatprep.subr.mxu0 0.0
    %1129 = vmatpush1.msra.mxu0 0.0
    %1130 = vmatprep.subr.mxu0 0.0
    %1131 = vmatpush1.msra.mxu0 0.0
    %1132 = vmatprep.subr.mxu0 0.0
    %1133 = vmatpush1.msra.mxu0 0.0
    %1134 = vmatprep.subr.mxu0 0.0
    %1135 = vmatpush1.msra.mxu0 0.0
    %1136 = vmatprep.subr.mxu0 0.0
    %1137 = vmatpush1.msra.mxu0 0.0
    %1138 = vmatprep.subr.mxu0 0.0
    %1139 = vmatpush1.msra.mxu0 0.0
    %1140 = vmatprep.subr.mxu0 0.0
    %1141 = vmatpush1.msra.mxu0 0.0
    %1142 = vmatprep.subr.mxu0 0.0
    %1143 = vmatpush1.msra.mxu0 0.0
    %1144 = vmatprep.subr.mxu0 0.0
    %1145 = vmatpush1.msra.mxu0 0.0
    %1146 = vmatprep.subr.mxu0 0.0
    %1147 = vmatpush1.msra.mxu0 0.0
    %1148 = vmatprep.subr.mxu0 0.0
    %1149 = vmatpush1.msra.mxu0 0.0
    %1150 = vmatprep.subr.mxu0 0.0
    %1151 = vmatpush1.msra.mxu0 0.0
    %1152 = vmatprep.mubr.f32.mxu0 0.0
    %1153 = vmatmul.mubr.f32.gmra.mrb[0].mxu0 %v1065
    %v1154 = vpop.f32.mrb[0].mxu0
    %v1155 = vadd.f32 0.0, %v1154
    %v1156 = vpop.f32.mrb[0].mxu0
    %1157 = vmatprep.mubr.f32.mxu0 0.0
    %1158 = vmatmul.mubr.f32.gmra.mrb[0].mxu0 %v1068
    %v1159 = vpop.f32.mrb[0].mxu0
    %v1160 = vadd.f32 0.0, %v1159
    %v1161 = vpop.f32.mrb[0].mxu0
    %1162 = vmatprep.mubr.f32.mxu0 0.0
    %1163 = vmatmul.mubr.f32.gmra.mrb[0].mxu0 %v1071
    %v1164 = vpop.f32.mrb[0].mxu0
    %v1165 = vadd.f32 0.0, %v1164
    %v1166 = vpop.f32.mrb[0].mxu0
    %1167 = vmatprep.mubr.f32.mxu0 0.0
    %1168 = vmatmul.mubr.f32.gmra.mrb[0].mxu0 %v1074
    %v1169 = vpop.f32.mrb[0].mxu0
    %v1170 = vadd.f32 0.0, %v1169
    %v1171 = vpop.f32.mrb[0].mxu0
    %1172 = vmatprep.mubr.f32.mxu0 0.0
    %1173 = vmatmul.mubr.f32.gmra.mrb[0].mxu0 %v1077
    %v1174 = vpop.f32.mrb[0].mxu0
    %v1175 = vadd.f32 0.0, %v1174
    %v1176 = vpop.f32.mrb[0].mxu0
    %1177 = vmatprep.mubr.f32.mxu0 0.0
    %1178 = vmatmul.mubr.f32.gmra.mrb[0].mxu0 %v1080
    %v1179 = vpop.f32.mrb[0].mxu0
    %v1180 = vadd.f32 0.0, %v1179
    %v1181 = vpop.f32.mrb[0].mxu0
    %1182 = vmatprep.mubr.f32.mxu0 0.0
    %1183 = vmatmul.mubr.f32.gmra.mrb[0].mxu0 %v1083
    %v1184 = vpop.f32.mrb[0].mxu0
    %v1185 = vadd.f32 0.0, %v1184
    %v1186 = vpop.f32.mrb[0].mxu0
    %1187 = vmatprep.mubr.f32.mxu0 0.0
    %1188 = vmatmul.mubr.f32.gmra.mrb[0].mxu0 %v1086
    %v1189 = vpop.f32.mrb[0].mxu0
    %v1190 = vadd.f32 0.0, %v1189
    %v1191 = vpop.f32.mrb[0].mxu0
    %1192 = vdwg.mxu0
    %s1193 = scalar_lea.vmem %s3, 256
    %1194 = vst.msk [vmem:[%s1193] sm:$0xff] %vm265, %v1155
    %1195 = vst.msk [vmem:[%s1193 + $0x8] sm:$0xff] %vm265, %v1160
    %1196 = vst.msk [vmem:[%s1193 + $0x10] sm:$0xff] %vm265, %v1165
    %1197 = vst.msk [vmem:[%s1193 + $0x18] sm:$0xff] %vm265, %v1170
    %1198 = vst.msk [vmem:[%s1193 + $0x20] sm:$0xff] %vm265, %v1175
    %1199 = vst.msk [vmem:[%s1193 + $0x28] sm:$0xff] %vm265, %v1180
    %1200 = vst.msk [vmem:[%s1193 + $0x30] sm:$0xff] %vm265, %v1185
    %1201 = vst.msk [vmem:[%s1193 + $0x38] sm:$0xff] %vm265, %v1190
    %s1202 = scalar_lea.vmem [#allocation2], 80
    %v1203 = vld [vmem:[%s1202] sm:$0xff]
    %v1204 = vld [vmem:[%s1202 + $0x8] sm:$0xff]
    %v1205 = vld [vmem:[#allocation4] sm:$0xff]
    %v1206 = vld [vmem:[#allocation4 + $0x8] sm:$0xff]
    %v1208 = vsel %vm46, %v1203, 0
    %v1211 = vsel %vm46, %v1204, 0
    %1213 = vmatprep.subr.mxu0 0.0
    %1214 = vmatpush1.msra.mxu0 %v1205
    %1215 = vmatprep.subr.mxu0 0.0
    %1216 = vmatpush1.msra.mxu0 %v1206
    %1217 = vmatprep.subr.mxu0 0.0
    %1218 = vmatpush1.msra.mxu0 0.0
    %1219 = vmatprep.subr.mxu0 0.0
    %1220 = vmatpush1.msra.mxu0 0.0
    %1221 = vmatprep.subr.mxu0 0.0
    %1222 = vmatpush1.msra.mxu0 0.0
    %1223 = vmatprep.subr.mxu0 0.0
    %1224 = vmatpush1.msra.mxu0 0.0
    %1225 = vmatprep.subr.mxu0 0.0
    %1226 = vmatpush1.msra.mxu0 0.0
    %1227 = vmatprep.subr.mxu0 0.0
    %1228 = vmatpush1.msra.mxu0 0.0
    %1229 = vmatprep.subr.mxu0 0.0
    %1230 = vmatpush1.msra.mxu0 0.0
    %1231 = vmatprep.subr.mxu0 0.0
    %1232 = vmatpush1.msra.mxu0 0.0
    %1233 = vmatprep.subr.mxu0 0.0
    %1234 = vmatpush1.msra.mxu0 0.0
    %1235 = vmatprep.subr.mxu0 0.0
    %1236 = vmatpush1.msra.mxu0 0.0
    %1237 = vmatprep.subr.mxu0 0.0
    %1238 = vmatpush1.msra.mxu0 0.0
    %1239 = vmatprep.subr.mxu0 0.0
    %1240 = vmatpush1.msra.mxu0 0.0
    %1241 = vmatprep.subr.mxu0 0.0
    %1242 = vmatpush1.msra.mxu0 0.0
    %1243 = vmatprep.subr.mxu0 0.0
    %1244 = vmatpush1.msra.mxu0 0.0
    %1245 = vmatprep.subr.mxu0 0.0
    %1246 = vmatpush1.msra.mxu0 0.0
    %1247 = vmatprep.subr.mxu0 0.0
    %1248 = vmatpush1.msra.mxu0 0.0
    %1249 = vmatprep.subr.mxu0 0.0
    %1250 = vmatpush1.msra.mxu0 0.0
    %1251 = vmatprep.subr.mxu0 0.0
    %1252 = vmatpush1.msra.mxu0 0.0
    %1253 = vmatprep.subr.mxu0 0.0
    %1254 = vmatpush1.msra.mxu0 0.0
    %1255 = vmatprep.subr.mxu0 0.0
    %1256 = vmatpush1.msra.mxu0 0.0
    %1257 = vmatprep.subr.mxu0 0.0
    %1258 = vmatpush1.msra.mxu0 0.0
    %1259 = vmatprep.subr.mxu0 0.0
    %1260 = vmatpush1.msra.mxu0 0.0
    %1261 = vmatprep.subr.mxu0 0.0
    %1262 = vmatpush1.msra.mxu0 0.0
    %1263 = vmatprep.subr.mxu0 0.0
    %1264 = vmatpush1.msra.mxu0 0.0
    %1265 = vmatprep.subr.mxu0 0.0
    %1266 = vmatpush1.msra.mxu0 0.0
    %1267 = vmatprep.subr.mxu0 0.0
    %1268 = vmatpush1.msra.mxu0 0.0
    %1269 = vmatprep.subr.mxu0 0.0
    %1270 = vmatpush1.msra.mxu0 0.0
    %1271 = vmatprep.subr.mxu0 0.0
    %1272 = vmatpush1.msra.mxu0 0.0
    %1273 = vmatprep.subr.mxu0 0.0
    %1274 = vmatpush1.msra.mxu0 0.0
    %1275 = vmatprep.subr.mxu0 0.0
    %1276 = vmatpush1.msra.mxu0 0.0
    %1277 = vmatprep.mubr.f32.mxu0 0.0
    %1278 = vmatmul.mubr.f32.gmra.mrb[0].mxu0 %v1208
    %v1279 = vpop.f32.mrb[0].mxu0
    %v1280 = vadd.f32 0.0, %v1279
    %v1281 = vpop.f32.mrb[0].mxu0
    %1282 = vmatprep.mubr.f32.mxu0 0.0
    %1283 = vmatmul.mubr.f32.gmra.mrb[0].mxu0 %v1211
    %v1284 = vpop.f32.mrb[0].mxu0
    %v1285 = vadd.f32 0.0, %v1284
    %v1286 = vpop.f32.mrb[0].mxu0
    %1287 = vdwg.mxu0
    %v1288 = vld [vmem:[%s1] sm:$0xff]
    %v1289 = vld [vmem:[%s1 + $0x8] sm:$0xff]
    %v1290 = vld [vmem:[%s1 + $0x10] sm:$0xff]
    %v1291 = vld [vmem:[%s1 + $0x18] sm:$0xff]
    %v1292 = vld [vmem:[%s1 + $0x20] sm:$0xff]
    %v1293 = vld [vmem:[%s1 + $0x28] sm:$0xff]
    %v1294 = vld [vmem:[%s1 + $0x30] sm:$0xff]
    %v1295 = vld [vmem:[%s1 + $0x38] sm:$0xff]
    %v1297 = vsel %vm46, %v1288, 0
    %v1300 = vsel %vm46, %v1289, 0
    %v1303 = vsel %vm46, %v1290, 0
    %v1306 = vsel %vm46, %v1291, 0
    %v1309 = vsel %vm46, %v1292, 0
    %v1312 = vsel %vm46, %v1293, 0
    %v1315 = vsel %vm46, %v1294, 0
    %v1318 = vsel %vm46, %v1295, 0
    %1320 = vmatprep.subr.mxu0 0.0
    %1321 = vmatpush1.msra.mxu0 %v1280
    %1322 = vmatprep.subr.mxu0 0.0
    %1323 = vmatpush1.msra.mxu0 %v1285
    %1324 = vmatprep.subr.mxu0 0.0
    %1325 = vmatpush1.msra.mxu0 0.0
    %1326 = vmatprep.subr.mxu0 0.0
    %1327 = vmatpush1.msra.mxu0 0.0
    %1328 = vmatprep.subr.mxu0 0.0
    %1329 = vmatpush1.msra.mxu0 0.0
    %1330 = vmatprep.subr.mxu0 0.0
    %1331 = vmatpush1.msra.mxu0 0.0
    %1332 = vmatprep.subr.mxu0 0.0
    %1333 = vmatpush1.msra.mxu0 0.0
    %1334 = vmatprep.subr.mxu0 0.0
    %1335 = vmatpush1.msra.mxu0 0.0
    %1336 = vmatprep.subr.mxu0 0.0
    %1337 = vmatpush1.msra.mxu0 0.0
    %1338 = vmatprep.subr.mxu0 0.0
    %1339 = vmatpush1.msra.mxu0 0.0
    %1340 = vmatprep.subr.mxu0 0.0
    %1341 = vmatpush1.msra.mxu0 0.0
    %1342 = vmatprep.subr.mxu0 0.0
    %1343 = vmatpush1.msra.mxu0 0.0
    %1344 = vmatprep.subr.mxu0 0.0
    %1345 = vmatpush1.msra.mxu0 0.0
    %1346 = vmatprep.subr.mxu0 0.0
    %1347 = vmatpush1.msra.mxu0 0.0
    %1348 = vmatprep.subr.mxu0 0.0
    %1349 = vmatpush1.msra.mxu0 0.0
    %1350 = vmatprep.subr.mxu0 0.0
    %1351 = vmatpush1.msra.mxu0 0.0
    %1352 = vmatprep.subr.mxu0 0.0
    %1353 = vmatpush1.msra.mxu0 0.0
    %1354 = vmatprep.subr.mxu0 0.0
    %1355 = vmatpush1.msra.mxu0 0.0
    %1356 = vmatprep.subr.mxu0 0.0
    %1357 = vmatpush1.msra.mxu0 0.0
    %1358 = vmatprep.subr.mxu0 0.0
    %1359 = vmatpush1.msra.mxu0 0.0
    %1360 = vmatprep.subr.mxu0 0.0
    %1361 = vmatpush1.msra.mxu0 0.0
    %1362 = vmatprep.subr.mxu0 0.0
    %1363 = vmatpush1.msra.mxu0 0.0
    %1364 = vmatprep.subr.mxu0 0.0
    %1365 = vmatpush1.msra.mxu0 0.0
    %1366 = vmatprep.subr.mxu0 0.0
    %1367 = vmatpush1.msra.mxu0 0.0
    %1368 = vmatprep.subr.mxu0 0.0
    %1369 = vmatpush1.msra.mxu0 0.0
    %1370 = vmatprep.subr.mxu0 0.0
    %1371 = vmatpush1.msra.mxu0 0.0
    %1372 = vmatprep.subr.mxu0 0.0
    %1373 = vmatpush1.msra.mxu0 0.0
    %1374 = vmatprep.subr.mxu0 0.0
    %1375 = vmatpush1.msra.mxu0 0.0
    %1376 = vmatprep.subr.mxu0 0.0
    %1377 = vmatpush1.msra.mxu0 0.0
    %1378 = vmatprep.subr.mxu0 0.0
    %1379 = vmatpush1.msra.mxu0 0.0
    %1380 = vmatprep.subr.mxu0 0.0
    %1381 = vmatpush1.msra.mxu0 0.0
    %1382 = vmatprep.subr.mxu0 0.0
    %1383 = vmatpush1.msra.mxu0 0.0
    %1384 = vmatprep.mubr.f32.mxu0 0.0
    %1385 = vmatmul.mubr.f32.gmra.mrb[0].mxu0 %v1297
    %v1386 = vpop.f32.mrb[0].mxu0
    %v1387 = vadd.f32 0.0, %v1386
    %v1388 = vpop.f32.mrb[0].mxu0
    %1389 = vmatprep.mubr.f32.mxu0 0.0
    %1390 = vmatmul.mubr.f32.gmra.mrb[0].mxu0 %v1300
    %v1391 = vpop.f32.mrb[0].mxu0
    %v1392 = vadd.f32 0.0, %v1391
    %v1393 = vpop.f32.mrb[0].mxu0
    %1394 = vmatprep.mubr.f32.mxu0 0.0
    %1395 = vmatmul.mubr.f32.gmra.mrb[0].mxu0 %v1303
    %v1396 = vpop.f32.mrb[0].mxu0
    %v1397 = vadd.f32 0.0, %v1396
    %v1398 = vpop.f32.mrb[0].mxu0
    %1399 = vmatprep.mubr.f32.mxu0 0.0
    %1400 = vmatmul.mubr.f32.gmra.mrb[0].mxu0 %v1306
    %v1401 = vpop.f32.mrb[0].mxu0
    %v1402 = vadd.f32 0.0, %v1401
    %v1403 = vpop.f32.mrb[0].mxu0
    %1404 = vmatprep.mubr.f32.mxu0 0.0
    %1405 = vmatmul.mubr.f32.gmra.mrb[0].mxu0 %v1309
    %v1406 = vpop.f32.mrb[0].mxu0
    %v1407 = vadd.f32 0.0, %v1406
    %v1408 = vpop.f32.mrb[0].mxu0
    %1409 = vmatprep.mubr.f32.mxu0 0.0
    %1410 = vmatmul.mubr.f32.gmra.mrb[0].mxu0 %v1312
    %v1411 = vpop.f32.mrb[0].mxu0
    %v1412 = vadd.f32 0.0, %v1411
    %v1413 = vpop.f32.mrb[0].mxu0
    %1414 = vmatprep.mubr.f32.mxu0 0.0
    %1415 = vmatmul.mubr.f32.gmra.mrb[0].mxu0 %v1315
    %v1416 = vpop.f32.mrb[0].mxu0
    %v1417 = vadd.f32 0.0, %v1416
    %v1418 = vpop.f32.mrb[0].mxu0
    %1419 = vmatprep.mubr.f32.mxu0 0.0
    %1420 = vmatmul.mubr.f32.gmra.mrb[0].mxu0 %v1318
    %v1421 = vpop.f32.mrb[0].mxu0
    %v1422 = vadd.f32 0.0, %v1421
    %v1423 = vpop.f32.mrb[0].mxu0
    %1424 = vdwg.mxu0
    %s1425 = scalar_lea.vmem %s3, 320
    %1426 = vst.msk [vmem:[%s1425] sm:$0xff] %vm265, %v1387
    %1427 = vst.msk [vmem:[%s1425 + $0x8] sm:$0xff] %vm265, %v1392
    %1428 = vst.msk [vmem:[%s1425 + $0x10] sm:$0xff] %vm265, %v1397
    %1429 = vst.msk [vmem:[%s1425 + $0x18] sm:$0xff] %vm265, %v1402
    %1430 = vst.msk [vmem:[%s1425 + $0x20] sm:$0xff] %vm265, %v1407
    %1431 = vst.msk [vmem:[%s1425 + $0x28] sm:$0xff] %vm265, %v1412
    %1432 = vst.msk [vmem:[%s1425 + $0x30] sm:$0xff] %vm265, %v1417
    %1433 = vst.msk [vmem:[%s1425 + $0x38] sm:$0xff] %vm265, %v1422
    // Predicated region
    $region22: #{_forward_impl.5} parent=1 // pred_check
      _
    $region23: #{_forward_impl.5} parent=1 // pred_check_branch
      %1435 = sbr.rel (0) target = $region25
    $region24: #{_forward_impl.5} parent=1 // pred_region
      _
    $region25: #{_forward_impl.5} parent=1 // pred_fallthru
      _
    // Predicated region
    $region26: #{_forward_impl.5} parent=1 // pred_check
      _
    $region27: #{_forward_impl.5} parent=1 // pred_check_branch
      %1437 = sbr.rel (0) target = $region29
    $region28: #{_forward_impl.5} parent=1 // pred_region
      _
    $region29: #{_forward_impl.5} parent=1 // pred_fallthru
      _
    %1438 = vsyncpa [#allocation3], 1
    %1439 = vsyncpa [#allocation5], 1

// kernel: _forward_impl.6
$region0: #{_forward_impl.6}
  #allocation0 [shape = 'u32[]', space=smem, size = 0x4, offset = 0x4, fixed_abs, tag = 'smem constant byte address 0x4 - core index']
  #allocation1 [shape = 'u32[144,128]{1,0:T(1,128)}', space=vmem, size = 0x12000, scoped, tag = 'internal scratch']
  %s0 = inlined_call_operand.vmem [shape: f32[192,128], index: 0, kind: input, shape index: {}]
  %s1 = inlined_call_operand.vmem [shape: f32[8,192], index: 1, kind: input, shape index: {}]
  %s2 = inlined_call_operand.vmem [shape: f32[8,1], index: 2, kind: input, shape index: {}]
  %s3 = inlined_call_operand.vmem [shape: f32[4,128], index: 3, kind: input, shape index: {}]
  %s4 = inlined_call_operand.vmem [shape: f32[4,128], index: 4, kind: output, shape index: {}]
  %s5 = sld [smem:[#allocation0]]
  $region26: #{_forward_impl.6} parent=0
    _
  %s7 = ssub.s32 1, %s5
  %s8 = scalar_select 0, %s7, %s5
  // Predicated region
  $region2: #{_forward_impl.6} parent=0 // pred_check
    _
  $region3: #{_forward_impl.6} parent=0 // pred_check_branch
    %10 = sbr.rel (0) target = $region5
  $region4: #{_forward_impl.6} parent=0 // pred_region
    _
  $region5: #{_forward_impl.6} parent=0 // pred_fallthru
    _
  // Predicated region
  $region6: #{_forward_impl.6} parent=0 // pred_check
    _
  $region7: #{_forward_impl.6} parent=0 // pred_check_branch
    %12 = sbr.rel (0) target = $region9
  $region8: #{_forward_impl.6} parent=0 // pred_region
    _
  $region9: #{_forward_impl.6} parent=0 // pred_fallthru
    _
  // Predicated region
  $region10: #{_forward_impl.6} parent=0 // pred_check
    _
  $region11: #{_forward_impl.6} parent=0 // pred_check_branch
    %14 = sbr.rel (0) target = $region13
  $region12: #{_forward_impl.6} parent=0 // pred_region
    _
  $region13: #{_forward_impl.6} parent=0 // pred_fallthru
    _
  // Predicated region
  $region14: #{_forward_impl.6} parent=0 // pred_check
    _
  $region15: #{_forward_impl.6} parent=0 // pred_check_branch
    %16 = sbr.rel (0) target = $region17
  $region16: #{_forward_impl.6} parent=0 // pred_region
    _
  $region17: #{_forward_impl.6} parent=0 // pred_fallthru
    _
  %v17 = vld [vmem:[%s1] sm:$0xff]
  %v18 = vld [vmem:[%s1 + $0x8] sm:$0xff]
  %v19 = vld [vmem:[%s0] sm:$0xff]
  %v20 = vld [vmem:[%s0 + $0x8] sm:$0xff]
  %v21 = vld [vmem:[%s0 + $0x10] sm:$0xff]
  %v22 = vld [vmem:[%s0 + $0x18] sm:$0xff]
  %v23 = vld [vmem:[%s0 + $0x20] sm:$0xff]
  %v24 = vld [vmem:[%s0 + $0x28] sm:$0xff]
  %v25 = vld [vmem:[%s0 + $0x30] sm:$0xff]
  %v26 = vld [vmem:[%s0 + $0x38] sm:$0xff]
  %v27 = vld [vmem:[%s0 + $0x40] sm:$0xff]
  %v28 = vld [vmem:[%s0 + $0x48] sm:$0xff]
  %v29 = vld [vmem:[%s0 + $0x50] sm:$0xff]
  %v30 = vld [vmem:[%s0 + $0x58] sm:$0xff]
  %v31 = vld [vmem:[%s0 + $0x60] sm:$0xff]
  %v32 = vld [vmem:[%s0 + $0x68] sm:$0xff]
  %v33 = vld [vmem:[%s0 + $0x70] sm:$0xff]
  %v34 = vld [vmem:[%s0 + $0x78] sm:$0xff]
  %v35 = vld [vmem:[%s0 + $0x80] sm:$0xff]
  %v36 = vld [vmem:[%s0 + $0x88] sm:$0xff]
  %v37 = vld [vmem:[%s0 + $0x90] sm:$0xff]
  %v38 = vld [vmem:[%s0 + $0x98] sm:$0xff]
  %v39 = vld [vmem:[%s0 + $0xa0] sm:$0xff]
  %v40 = vld [vmem:[%s0 + $0xa8] sm:$0xff]
  %v41 = vld [vmem:[%s0 + $0xb0] sm:$0xff]
  %v42 = vld [vmem:[%s0 + $0xb8] sm:$0xff]
  %v43 = vld [vmem:[%s2] sm:$0xff]
  %45 = vset.pattern.permute.xlu0 0
  %46 = vperm.xlu0 %45, %v43
  %v47 = vpop.permute.xlu0 %46
  %vm49 = vcmask 523264
  %v51 = vsel %vm49, %v18, 0
  %53 = vmatprep.subr.mxu0 0.0
  %54 = vmatpush1.msra.mxu0 %v19
  %55 = vmatprep.subr.mxu0 0.0
  %56 = vmatpush1.msra.mxu0 %v20
  %57 = vmatprep.subr.mxu0 0.0
  %58 = vmatpush1.msra.mxu0 %v21
  %59 = vmatprep.subr.mxu0 0.0
  %60 = vmatpush1.msra.mxu0 %v22
  %61 = vmatprep.subr.mxu0 0.0
  %62 = vmatpush1.msra.mxu0 %v23
  %63 = vmatprep.subr.mxu0 0.0
  %64 = vmatpush1.msra.mxu0 %v24
  %65 = vmatprep.subr.mxu0 0.0
  %66 = vmatpush1.msra.mxu0 %v25
  %67 = vmatprep.subr.mxu0 0.0
  %68 = vmatpush1.msra.mxu0 %v26
  %69 = vmatprep.subr.mxu0 0.0
  %70 = vmatpush1.msra.mxu0 %v27
  %71 = vmatprep.subr.mxu0 0.0
  %72 = vmatpush1.msra.mxu0 %v28
  %73 = vmatprep.subr.mxu0 0.0
  %74 = vmatpush1.msra.mxu0 %v29
  %75 = vmatprep.subr.mxu0 0.0
  %76 = vmatpush1.msra.mxu0 %v30
  %77 = vmatprep.subr.mxu0 0.0
  %78 = vmatpush1.msra.mxu0 %v31
  %79 = vmatprep.subr.mxu0 0.0
  %80 = vmatpush1.msra.mxu0 %v32
  %81 = vmatprep.subr.mxu0 0.0
  %82 = vmatpush1.msra.mxu0 %v33
  %83 = vmatprep.subr.mxu0 0.0
  %84 = vmatpush1.msra.mxu0 %v34
  %85 = vmatprep.subr.mxu0 0.0
  %86 = vmatpush1.msra.mxu0 %v35
  %87 = vmatprep.subr.mxu0 0.0
  %88 = vmatpush1.msra.mxu0 %v36
  %89 = vmatprep.subr.mxu0 0.0
  %90 = vmatpush1.msra.mxu0 %v37
  %91 = vmatprep.subr.mxu0 0.0
  %92 = vmatpush1.msra.mxu0 %v38
  %93 = vmatprep.subr.mxu0 0.0
  %94 = vmatpush1.msra.mxu0 %v39
  %95 = vmatprep.subr.mxu0 0.0
  %96 = vmatpush1.msra.mxu0 %v40
  %97 = vmatprep.subr.mxu0 0.0
  %98 = vmatpush1.msra.mxu0 %v41
  %99 = vmatprep.subr.mxu0 0.0
  %100 = vmatpush1.msra.mxu0 %v42
  %101 = vmatprep.subr.mxu0 0.0
  %102 = vmatpush1.msra.mxu0 0.0
  %103 = vmatprep.subr.mxu0 0.0
  %104 = vmatpush1.msra.mxu0 0.0
  %105 = vmatprep.subr.mxu0 0.0
  %106 = vmatpush1.msra.mxu0 0.0
  %107 = vmatprep.subr.mxu0 0.0
  %108 = vmatpush1.msra.mxu0 0.0
  %109 = vmatprep.subr.mxu0 0.0
  %110 = vmatpush1.msra.mxu0 0.0
  %111 = vmatprep.subr.mxu0 0.0
  %112 = vmatpush1.msra.mxu0 0.0
  %113 = vmatprep.subr.mxu0 0.0
  %114 = vmatpush1.msra.mxu0 0.0
  %115 = vmatprep.subr.mxu0 0.0
  %116 = vmatpush1.msra.mxu0 0.0
  %117 = vmatprep.mubr.f32.mxu0 %v51
  %118 = vmatmul.mubr.f32.gmra.mrb[0].mxu0 %v17
  %v119 = vpop.f32.mrb[0].mxu0
  %v120 = vadd.f32 %v47, %v119
  %v121 = vpop.f32.mrb[0].mxu0
  %122 = vdwg.mxu0
  %v123 = vmax.f32 %v120, -30.0
  %v124 = vmin.f32 %v123, 20.0
  %v125 = vmul.f32 %v124, 0.5
  %v126 = vmul.f32 %v125, 1.442695
  %v127 = vpow.pop %v126
  %v128 = vld [vmem:[%s3] sm:$0xf]
  %v130 = vrot.slane %v128, 4
  %v132 = vmul.f32 %v127, %v130
  %v134 = vrot.slane %v132, 4
  %v136 = vadd.f32 %v120, %v134
  %v137 = vmul.f32 %v136, 0.18215
  %138 = vst [vmem:[%s4] sm:$0xf] %v137
  // Predicated region
  $region18: #{_forward_impl.6} parent=0 // pred_check
    _
  $region19: #{_forward_impl.6} parent=0 // pred_check_branch
    %140 = sbr.rel (0) target = $region21
  $region20: #{_forward_impl.6} parent=0 // pred_region
    _
  $region21: #{_forward_impl.6} parent=0 // pred_fallthru
    _
  // Predicated region
  $region22: #{_forward_impl.6} parent=0 // pred_check
    _
  $region23: #{_forward_impl.6} parent=0 // pred_check_branch
    %142 = sbr.rel (0) target = $region25
  $region24: #{_forward_impl.6} parent=0 // pred_region
    _
  $region25: #{_forward_impl.6} parent=0 // pred_fallthru
    _

// kernel: _forward_impl.8
$region0: #{_forward_impl.8}
  #allocation0 [shape = 'u32[]', space=smem, size = 0x4, offset = 0x4, fixed_abs, tag = 'smem constant byte address 0x4 - core index']
  #allocation1 [shape = 'u32[144,128]{1,0:T(1,128)}', space=vmem, size = 0x12000, scoped, tag = 'internal scratch']
  %s0 = inlined_call_operand.vmem [shape: f32[4,128], index: 0, kind: input, shape index: {}]
  %s1 = inlined_call_operand.vmem [shape: f32[64,4], index: 1, kind: input, shape index: {}]
  %s2 = inlined_call_operand.vmem [shape: f32[64,1], index: 2, kind: input, shape index: {}]
  %s3 = inlined_call_operand.vmem [shape: f32[64,128], index: 3, kind: output, shape index: {}]
  %s4 = sld [smem:[#allocation0]]
  $region22: #{_forward_impl.8} parent=0
    _
  %s6 = ssub.s32 1, %s4
  %s7 = scalar_select 0, %s6, %s4
  // Predicated region
  $region2: #{_forward_impl.8} parent=0 // pred_check
    _
  $region3: #{_forward_impl.8} parent=0 // pred_check_branch
    %9 = sbr.rel (0) target = $region5
  $region4: #{_forward_impl.8} parent=0 // pred_region
    _
  $region5: #{_forward_impl.8} parent=0 // pred_fallthru
    _
  // Predicated region
  $region6: #{_forward_impl.8} parent=0 // pred_check
    _
  $region7: #{_forward_impl.8} parent=0 // pred_check_branch
    %11 = sbr.rel (0) target = $region9
  $region8: #{_forward_impl.8} parent=0 // pred_region
    _
  $region9: #{_forward_impl.8} parent=0 // pred_fallthru
    _
  // Predicated region
  $region10: #{_forward_impl.8} parent=0 // pred_check
    _
  $region11: #{_forward_impl.8} parent=0 // pred_check_branch
    %13 = sbr.rel (0) target = $region13
  $region12: #{_forward_impl.8} parent=0 // pred_region
    _
  $region13: #{_forward_impl.8} parent=0 // pred_fallthru
    _
  %v14 = vld [vmem:[%s0] sm:$0xf]
  %v15 = vmul.f32 %v14, 5.4899807
  %v16 = vld [vmem:[%s1] sm:$0xff]
  %v17 = vld [vmem:[%s1 + $0x8] sm:$0xff]
  %v18 = vld [vmem:[%s1 + $0x10] sm:$0xff]
  %v19 = vld [vmem:[%s1 + $0x18] sm:$0xff]
  %v20 = vld [vmem:[%s1 + $0x20] sm:$0xff]
  %v21 = vld [vmem:[%s1 + $0x28] sm:$0xff]
  %v22 = vld [vmem:[%s1 + $0x30] sm:$0xff]
  %v23 = vld [vmem:[%s1 + $0x38] sm:$0xff]
  %v24 = vld [vmem:[%s2] sm:$0xff]
  %v25 = vld [vmem:[%s2 + $0x8] sm:$0xff]
  %v26 = vld [vmem:[%s2 + $0x10] sm:$0xff]
  %v27 = vld [vmem:[%s2 + $0x18] sm:$0xff]
  %v28 = vld [vmem:[%s2 + $0x20] sm:$0xff]
  %v29 = vld [vmem:[%s2 + $0x28] sm:$0xff]
  %v30 = vld [vmem:[%s2 + $0x30] sm:$0xff]
  %v31 = vld [vmem:[%s2 + $0x38] sm:$0xff]
  %33 = vset.pattern.permute.xlu0 0
  %34 = vperm.xlu0 %33, %v24
  %v35 = vpop.permute.xlu0 %34
  %38 = vset.pattern.permute.xlu0 0
  %39 = vperm.xlu0 %38, %v25
  %v40 = vpop.permute.xlu0 %39
  %43 = vset.pattern.permute.xlu0 0
  %44 = vperm.xlu0 %43, %v26
  %v45 = vpop.permute.xlu0 %44
  %48 = vset.pattern.permute.xlu0 0
  %49 = vperm.xlu0 %48, %v27
  %v50 = vpop.permute.xlu0 %49
  %53 = vset.pattern.permute.xlu0 0
  %54 = vperm.xlu0 %53, %v28
  %v55 = vpop.permute.xlu0 %54
  %58 = vset.pattern.permute.xlu0 0
  %59 = vperm.xlu0 %58, %v29
  %v60 = vpop.permute.xlu0 %59
  %63 = vset.pattern.permute.xlu0 0
  %64 = vperm.xlu0 %63, %v30
  %v65 = vpop.permute.xlu0 %64
  %68 = vset.pattern.permute.xlu0 0
  %69 = vperm.xlu0 %68, %v31
  %v70 = vpop.permute.xlu0 %69
  %vm72 = vcmask 31744
  %v74 = vsel %vm72, %v16, 0
  %v77 = vsel %vm72, %v17, 0
  %v80 = vsel %vm72, %v18, 0
  %v83 = vsel %vm72, %v19, 0
  %v86 = vsel %vm72, %v20, 0
  %v89 = vsel %vm72, %v21, 0
  %v92 = vsel %vm72, %v22, 0
  %v95 = vsel %vm72, %v23, 0
  %vm97 = vcmask 1043456
  %v99 = vsel %vm97, %v15, 0
  %101 = vmatprep.subr.mxu0 0.0
  %102 = vmatpush1.msra.mxu0 %v99
  %103 = vmatprep.subr.mxu0 0.0
  %104 = vmatpush1.msra.mxu0 0.0
  %105 = vmatprep.subr.mxu0 0.0
  %106 = vmatpush1.msra.mxu0 0.0
  %107 = vmatprep.subr.mxu0 0.0
  %108 = vmatpush1.msra.mxu0 0.0
  %109 = vmatprep.subr.mxu0 0.0
  %110 = vmatpush1.msra.mxu0 0.0
  %111 = vmatprep.subr.mxu0 0.0
  %112 = vmatpush1.msra.mxu0 0.0
  %113 = vmatprep.subr.mxu0 0.0
  %114 = vmatpush1.msra.mxu0 0.0
  %115 = vmatprep.subr.mxu0 0.0
  %116 = vmatpush1.msra.mxu0 0.0
  %117 = vmatprep.subr.mxu0 0.0
  %118 = vmatpush1.msra.mxu0 0.0
  %119 = vmatprep.subr.mxu0 0.0
  %120 = vmatpush1.msra.mxu0 0.0
  %121 = vmatprep.subr.mxu0 0.0
  %122 = vmatpush1.msra.mxu0 0.0
  %123 = vmatprep.subr.mxu0 0.0
  %124 = vmatpush1.msra.mxu0 0.0
  %125 = vmatprep.subr.mxu0 0.0
  %126 = vmatpush1.msra.mxu0 0.0
  %127 = vmatprep.subr.mxu0 0.0
  %128 = vmatpush1.msra.mxu0 0.0
  %129 = vmatprep.subr.mxu0 0.0
  %130 = vmatpush1.msra.mxu0 0.0
  %131 = vmatprep.subr.mxu0 0.0
  %132 = vmatpush1.msra.mxu0 0.0
  %133 = vmatprep.subr.mxu0 0.0
  %134 = vmatpush1.msra.mxu0 0.0
  %135 = vmatprep.subr.mxu0 0.0
  %136 = vmatpush1.msra.mxu0 0.0
  %137 = vmatprep.subr.mxu0 0.0
  %138 = vmatpush1.msra.mxu0 0.0
  %139 = vmatprep.subr.mxu0 0.0
  %140 = vmatpush1.msra.mxu0 0.0
  %141 = vmatprep.subr.mxu0 0.0
  %142 = vmatpush1.msra.mxu0 0.0
  %143 = vmatprep.subr.mxu0 0.0
  %144 = vmatpush1.msra.mxu0 0.0
  %145 = vmatprep.subr.mxu0 0.0
  %146 = vmatpush1.msra.mxu0 0.0
  %147 = vmatprep.subr.mxu0 0.0
  %148 = vmatpush1.msra.mxu0 0.0
  %149 = vmatprep.subr.mxu0 0.0
  %150 = vmatpush1.msra.mxu0 0.0
  %151 = vmatprep.subr.mxu0 0.0
  %152 = vmatpush1.msra.mxu0 0.0
  %153 = vmatprep.subr.mxu0 0.0
  %154 = vmatpush1.msra.mxu0 0.0
  %155 = vmatprep.subr.mxu0 0.0
  %156 = vmatpush1.msra.mxu0 0.0
  %157 = vmatprep.subr.mxu0 0.0
  %158 = vmatpush1.msra.mxu0 0.0
  %159 = vmatprep.subr.mxu0 0.0
  %160 = vmatpush1.msra.mxu0 0.0
  %161 = vmatprep.subr.mxu0 0.0
  %162 = vmatpush1.msra.mxu0 0.0
  %163 = vmatprep.subr.mxu0 0.0
  %164 = vmatpush1.msra.mxu0 0.0
  %165 = vmatprep.mubr.f32.mxu0 0.0
  %166 = vmatmul.mubr.f32.gmra.mrb[0].mxu0 %v74
  %v167 = vpop.f32.mrb[0].mxu0
  %v168 = vadd.f32 %v35, %v167
  %v169 = vpop.f32.mrb[0].mxu0
  %170 = vmatprep.mubr.f32.mxu0 0.0
  %171 = vmatmul.mubr.f32.gmra.mrb[0].mxu0 %v77
  %v172 = vpop.f32.mrb[0].mxu0
  %v173 = vadd.f32 %v40, %v172
  %v174 = vpop.f32.mrb[0].mxu0
  %175 = vmatprep.mubr.f32.mxu0 0.0
  %176 = vmatmul.mubr.f32.gmra.mrb[0].mxu0 %v80
  %v177 = vpop.f32.mrb[0].mxu0
  %v178 = vadd.f32 %v45, %v177
  %v179 = vpop.f32.mrb[0].mxu0
  %180 = vmatprep.mubr.f32.mxu0 0.0
  %181 = vmatmul.mubr.f32.gmra.mrb[0].mxu0 %v83
  %v182 = vpop.f32.mrb[0].mxu0
  %v183 = vadd.f32 %v50, %v182
  %v184 = vpop.f32.mrb[0].mxu0
  %185 = vmatprep.mubr.f32.mxu0 0.0
  %186 = vmatmul.mubr.f32.gmra.mrb[0].mxu0 %v86
  %v187 = vpop.f32.mrb[0].mxu0
  %v188 = vadd.f32 %v55, %v187
  %v189 = vpop.f32.mrb[0].mxu0
  %190 = vmatprep.mubr.f32.mxu0 0.0
  %191 = vmatmul.mubr.f32.gmra.mrb[0].mxu0 %v89
  %v192 = vpop.f32.mrb[0].mxu0
  %v193 = vadd.f32 %v60, %v192
  %v194 = vpop.f32.mrb[0].mxu0
  %195 = vmatprep.mubr.f32.mxu0 0.0
  %196 = vmatmul.mubr.f32.gmra.mrb[0].mxu0 %v92
  %v197 = vpop.f32.mrb[0].mxu0
  %v198 = vadd.f32 %v65, %v197
  %v199 = vpop.f32.mrb[0].mxu0
  %200 = vmatprep.mubr.f32.mxu0 0.0
  %201 = vmatmul.mubr.f32.gmra.mrb[0].mxu0 %v95
  %v202 = vpop.f32.mrb[0].mxu0
  %v203 = vadd.f32 %v70, %v202
  %v204 = vpop.f32.mrb[0].mxu0
  %205 = vdwg.mxu0
  %v206 = vmul.f32 %v168, 0.5
  %v207 = vmul.f32 %v173, 0.5
  %v208 = vmul.f32 %v178, 0.5
  %v209 = vmul.f32 %v183, 0.5
  %v210 = vmul.f32 %v188, 0.5
  %v211 = vmul.f32 %v193, 0.5
  %v212 = vmul.f32 %v198, 0.5
  %v213 = vmul.f32 %v203, 0.5
  %v214 = vadd.f32 %v206, 0.5
  %v215 = vadd.f32 %v207, 0.5
  %v216 = vadd.f32 %v208, 0.5
  %v217 = vadd.f32 %v209, 0.5
  %v218 = vadd.f32 %v210, 0.5
  %v219 = vadd.f32 %v211, 0.5
  %v220 = vadd.f32 %v212, 0.5
  %v221 = vadd.f32 %v213, 0.5
  %v222 = vmax.f32 %v214, 0.0
  %v223 = vmax.f32 %v215, 0.0
  %v224 = vmax.f32 %v216, 0.0
  %v225 = vmax.f32 %v217, 0.0
  %v226 = vmax.f32 %v218, 0.0
  %v227 = vmax.f32 %v219, 0.0
  %v228 = vmax.f32 %v220, 0.0
  %v229 = vmax.f32 %v221, 0.0
  %v230 = vmin.f32 %v222, 1.0
  %v231 = vmin.f32 %v223, 1.0
  %v232 = vmin.f32 %v224, 1.0
  %v233 = vmin.f32 %v225, 1.0
  %v234 = vmin.f32 %v226, 1.0
  %v235 = vmin.f32 %v227, 1.0
  %v236 = vmin.f32 %v228, 1.0
  %v237 = vmin.f32 %v229, 1.0
  %238 = vst [vmem:[%s3] sm:$0xff] %v230
  %239 = vst [vmem:[%s3 + $0x8] sm:$0xff] %v231
  %240 = vst [vmem:[%s3 + $0x10] sm:$0xff] %v232
  %241 = vst [vmem:[%s3 + $0x18] sm:$0xff] %v233
  %242 = vst [vmem:[%s3 + $0x20] sm:$0xff] %v234
  %243 = vst [vmem:[%s3 + $0x28] sm:$0xff] %v235
  %244 = vst [vmem:[%s3 + $0x30] sm:$0xff] %v236
  %245 = vst [vmem:[%s3 + $0x38] sm:$0xff] %v237
  // Predicated region
  $region14: #{_forward_impl.8} parent=0 // pred_check
    _
  $region15: #{_forward_impl.8} parent=0 // pred_check_branch
    %247 = sbr.rel (0) target = $region17
  $region16: #{_forward_impl.8} parent=0 // pred_region
    _
  $region17: #{_forward_impl.8} parent=0 // pred_fallthru
    _
  // Predicated region
  $region18: #{_forward_impl.8} parent=0 // pred_check
    _
  $region19: #{_forward_impl.8} parent=0 // pred_check_branch
    %249 = sbr.rel (0) target = $region21
  $region20: #{_forward_impl.8} parent=0 // pred_region
    _
  $region21: #{_forward_impl.8} parent=0 // pred_fallthru
    _

// kernel: _forward_impl.7
$region0: #{_forward_impl.7}
  #allocation0 [shape = 'u32[]', space=smem, size = 0x4, offset = 0x4, fixed_abs, tag = 'smem constant byte address 0x4 - core index']
  #allocation1 [shape = 'u32[144,128]{1,0:T(1,128)}', space=vmem, size = 0x12000, scoped, tag = 'internal scratch']
  %s0 = inlined_call_operand.vmem [shape: f32[8,128], index: 0, kind: input, shape index: {}]
  %s1 = inlined_call_operand.vmem [shape: f32[8,128], index: 1, kind: input, shape index: {}]
  %s2 = inlined_call_operand.vmem [shape: f32[4,32,1], index: 2, kind: input, shape index: {}]
  %s3 = inlined_call_operand.vmem [shape: f32[32,1], index: 3, kind: input, shape index: {}]
  %s4 = inlined_call_operand.vmem [shape: f32[32,1], index: 4, kind: input, shape index: {}]
  %s5 = inlined_call_operand.vmem [shape: f32[32,1], index: 5, kind: input, shape index: {}]
  %s6 = inlined_call_operand.vmem [shape: f32[32,1], index: 6, kind: input, shape index: {}]
  %s7 = inlined_call_operand.vmem [shape: f32[9,1,128], index: 7, kind: input, shape index: {}]
  %s8 = inlined_call_operand.vmem [shape: bf16[32,72], index: 8, kind: input, shape index: {}]
  %s9 = inlined_call_operand.vmem [shape: bf16[32,72], index: 9, kind: input, shape index: {}]
  %s10 = inlined_call_operand.vmem [shape: f32[32,1], index: 10, kind: input, shape index: {}]
  %s11 = inlined_call_operand.vmem [shape: bf16[32,32], index: 11, kind: input, shape index: {}]
  %s12 = inlined_call_operand.vmem [shape: bf16[8,288], index: 12, kind: input, shape index: {}]
  %s13 = inlined_call_operand.vmem [shape: f32[8,1], index: 13, kind: input, shape index: {}]
  %s14 = inlined_call_operand.vmem [shape: f32[16], index: 14, kind: input, shape index: {}]
  %s15 = inlined_call_operand.vmem [shape: f32[8,128], index: 15, kind: output, shape index: {}]
  %s16 = sld [smem:[#allocation0]]
  $region81: #{_forward_impl.7} parent=0
    _
  %s18 = ssub.s32 1, %s16
  %s19 = scalar_select 0, %s18, %s16
  $region1: #{_forward_impl.7} parent=0
    #allocation2 [shape = 'u8[512]{0}', space=smem, size = 0x200, scoped, tag = 'input window, operand 14, single buffered']
    #allocation3 [shape = 's32[1]{0}', space=sflag, size = 0x4, scoped, tag = 'scoped memory for _forward_impl.7']
    %20 = vsyncpa [#allocation3], 0
    // Predicated region
    $region2: #{_forward_impl.7} parent=1 // pred_check
      _
    $region3: #{_forward_impl.7} parent=1 // pred_check_branch
      %22 = sbr.rel (0) target = $region5
    $region4: #{_forward_impl.7} parent=1 // pred_region
      _
    $region5: #{_forward_impl.7} parent=1 // pred_fallthru
      _
    // Predicated region
    $region6: #{_forward_impl.7} parent=1 // pred_check
      _
    $region7: #{_forward_impl.7} parent=1 // pred_check_branch
      %24 = sbr.rel (0) target = $region9
    $region8: #{_forward_impl.7} parent=1 // pred_region
      _
    $region9: #{_forward_impl.7} parent=1 // pred_fallthru
      _
    // Predicated region
    $region10: #{_forward_impl.7} parent=1 // pred_check
      _
    $region11: #{_forward_impl.7} parent=1 // pred_check_branch
      %26 = sbr.rel (0) target = $region13
    $region12: #{_forward_impl.7} parent=1 // pred_region
      _
    $region13: #{_forward_impl.7} parent=1 // pred_fallthru
      _
    // Predicated region
    $region14: #{_forward_impl.7} parent=1 // pred_check
      _
    $region15: #{_forward_impl.7} parent=1 // pred_check_branch
      %28 = sbr.rel (0) target = $region17
    $region16: #{_forward_impl.7} parent=1 // pred_region
      _
    $region17: #{_forward_impl.7} parent=1 // pred_fallthru
      _
    // Predicated region
    $region18: #{_forward_impl.7} parent=1 // pred_check
      _
    $region19: #{_forward_impl.7} parent=1 // pred_check_branch
      %30 = sbr.rel (0) target = $region21
    $region20: #{_forward_impl.7} parent=1 // pred_region
      _
    $region21: #{_forward_impl.7} parent=1 // pred_fallthru
      _
    // Predicated region
    $region22: #{_forward_impl.7} parent=1 // pred_check
      _
    $region23: #{_forward_impl.7} parent=1 // pred_check_branch
      %32 = sbr.rel (0) target = $region25
    $region24: #{_forward_impl.7} parent=1 // pred_region
      _
    $region25: #{_forward_impl.7} parent=1 // pred_fallthru
      _
    // Predicated region
    $region26: #{_forward_impl.7} parent=1 // pred_check
      _
    $region27: #{_forward_impl.7} parent=1 // pred_check_branch
      %34 = sbr.rel (0) target = $region29
    $region28: #{_forward_impl.7} parent=1 // pred_region
      _
    $region29: #{_forward_impl.7} parent=1 // pred_fallthru
      _
    // Predicated region
    $region30: #{_forward_impl.7} parent=1 // pred_check
      _
    $region31: #{_forward_impl.7} parent=1 // pred_check_branch
      %36 = sbr.rel (0) target = $region33
    $region32: #{_forward_impl.7} parent=1 // pred_region
      _
    $region33: #{_forward_impl.7} parent=1 // pred_fallthru
      _
    // Predicated region
    $region34: #{_forward_impl.7} parent=1 // pred_check
      _
    $region35: #{_forward_impl.7} parent=1 // pred_check_branch
      %38 = sbr.rel (0) target = $region37
    $region36: #{_forward_impl.7} parent=1 // pred_region
      _
    $region37: #{_forward_impl.7} parent=1 // pred_fallthru
      _
    // Predicated region
    $region38: #{_forward_impl.7} parent=1 // pred_check
      _
    $region39: #{_forward_impl.7} parent=1 // pred_check_branch
      %40 = sbr.rel (0) target = $region41
    $region40: #{_forward_impl.7} parent=1 // pred_region
      _
    $region41: #{_forward_impl.7} parent=1 // pred_fallthru
      _
    // Predicated region
    $region42: #{_forward_impl.7} parent=1 // pred_check
      _
    $region43: #{_forward_impl.7} parent=1 // pred_check_branch
      %42 = sbr.rel (0) target = $region45
    $region44: #{_forward_impl.7} parent=1 // pred_region
      _
    $region45: #{_forward_impl.7} parent=1 // pred_fallthru
      _
    // Predicated region
    $region46: #{_forward_impl.7} parent=1 // pred_check
      _
    $region47: #{_forward_impl.7} parent=1 // pred_check_branch
      %44 = sbr.rel (0) target = $region49
    $region48: #{_forward_impl.7} parent=1 // pred_region
      _
    $region49: #{_forward_impl.7} parent=1 // pred_fallthru
      _
    // Predicated region
    $region50: #{_forward_impl.7} parent=1 // pred_check
      _
    $region51: #{_forward_impl.7} parent=1 // pred_check_branch
      %46 = sbr.rel (0) target = $region53
    $region52: #{_forward_impl.7} parent=1 // pred_region
      _
    $region53: #{_forward_impl.7} parent=1 // pred_fallthru
      _
    // Predicated region
    $region54: #{_forward_impl.7} parent=1 // pred_check
      _
    $region55: #{_forward_impl.7} parent=1 // pred_check_branch
      %48 = sbr.rel (0) target = $region57
    $region56: #{_forward_impl.7} parent=1 // pred_region
      _
    $region57: #{_forward_impl.7} parent=1 // pred_fallthru
      _
    // Predicated region
    $region58: #{_forward_impl.7} parent=1 // pred_check
      _
    $region59: #{_forward_impl.7} parent=1 // pred_check_branch
      %50 = sbr.rel (0) target = $region61
    $region60: #{_forward_impl.7} parent=1 // pred_region
      %s52 = ssub.s32 16, 16
      %53 = vsyncadd [#allocation3], %s52
      %s55 = sshll.u32 %s14, 4
      %s56 = int_to_ptr.vmem [resolvable:$true] %s55
      %58 = dma.vmem_to_smem %s56, 16, [#allocation2], [#allocation3]
    $region61: #{_forward_impl.7} parent=1 // pred_fallthru
      _
    // Predicated region
    $region62: #{_forward_impl.7} parent=1 // pred_check
      _
    $region63: #{_forward_impl.7} parent=1 // pred_check_branch
      %60 = sbr.rel (0) target = $region65
    $region64: #{_forward_impl.7} parent=1 // pred_region
      %61 = dma.done [#allocation3], 16
    $region65: #{_forward_impl.7} parent=1 // pred_fallthru
      _
    %62 = sfence
    %v64 = vld [vmem:[%s7] sm:$0x1]
    %s65 = scalar_lea.vmem %s7, 1
    %v66 = vld [vmem:[%s65] sm:$0x1]
    %s67 = scalar_lea.vmem %s7, 2
    %v68 = vld [vmem:[%s67] sm:$0x1]
    %s69 = scalar_lea.vmem %s7, 3
    %v70 = vld [vmem:[%s69] sm:$0x1]
    %s71 = scalar_lea.vmem %s7, 4
    %v72 = vld [vmem:[%s71] sm:$0x1]
    %s73 = scalar_lea.vmem %s7, 5
    %v74 = vld [vmem:[%s73] sm:$0x1]
    %s75 = scalar_lea.vmem %s7, 6
    %v76 = vld [vmem:[%s75] sm:$0x1]
    %s77 = scalar_lea.vmem %s7, 7
    %v78 = vld [vmem:[%s77] sm:$0x1]
    %s79 = scalar_lea.vmem %s7, 8
    %v80 = vld [vmem:[%s79] sm:$0x1]
    %v81 = vld [vmem:[%s8] sm:$0xf]
    %v82 = vld [vmem:[%s8 + $0x4] sm:$0xf]
    %v83 = vld [vmem:[%s8 + $0x8] sm:$0xf]
    %v84 = vld [vmem:[%s8 + $0xc] sm:$0xf]
    %v85 = vld [vmem:[%s0] sm:$0xff]
    %86 = vrot.lane.b32.xlu0 %v85, 9
    %v87 = vpop.permute.xlu0 %86
    %v89 = vlaneseq
    %v90 = vshrl.u32 %v89, 7
    %v91 = vsub.s32 0, %v90
    %v92 = vrot.slane %v64, %v91
    %v94 = vmul.f32 %v87, %v92
    %95 = vrot.lane.b32.xlu0 %v85, 8
    %v96 = vpop.permute.xlu0 %95
    %v98 = vlaneseq
    %v99 = vshrl.u32 %v98, 7
    %v100 = vsub.s32 0, %v99
    %v101 = vrot.slane %v66, %v100
    %v103 = vmul.f32 %v96, %v101
    %104 = vrot.lane.b32.xlu0 %v85, 7
    %v105 = vpop.permute.xlu0 %104
    %v107 = vlaneseq
    %v108 = vshrl.u32 %v107, 7
    %v109 = vsub.s32 0, %v108
    %v110 = vrot.slane %v68, %v109
    %v112 = vmul.f32 %v105, %v110
    %113 = vrot.lane.b32.xlu0 %v85, 1
    %v114 = vpop.permute.xlu0 %113
    %v116 = vlaneseq
    %v117 = vshrl.u32 %v116, 7
    %v118 = vsub.s32 0, %v117
    %v119 = vrot.slane %v70, %v118
    %v121 = vmul.f32 %v114, %v119
    %v123 = vlaneseq
    %v124 = vshrl.u32 %v123, 7
    %v125 = vsub.s32 0, %v124
    %v126 = vrot.slane %v72, %v125
    %v128 = vmul.f32 %v85, %v126
    %129 = vrot.lane.b32.xlu0 %v85, 127
    %v130 = vpop.permute.xlu0 %129
    %v132 = vlaneseq
    %v133 = vshrl.u32 %v132, 7
    %v134 = vsub.s32 0, %v133
    %v135 = vrot.slane %v74, %v134
    %v137 = vmul.f32 %v130, %v135
    %138 = vrot.lane.b32.xlu0 %v85, 121
    %v139 = vpop.permute.xlu0 %138
    %v141 = vlaneseq
    %v142 = vshrl.u32 %v141, 7
    %v143 = vsub.s32 0, %v142
    %v144 = vrot.slane %v76, %v143
    %v146 = vmul.f32 %v139, %v144
    %147 = vrot.lane.b32.xlu0 %v85, 120
    %v148 = vpop.permute.xlu0 %147
    %v150 = vlaneseq
    %v151 = vshrl.u32 %v150, 7
    %v152 = vsub.s32 0, %v151
    %v153 = vrot.slane %v78, %v152
    %v155 = vmul.f32 %v148, %v153
    %156 = vrot.lane.b32.xlu0 %v85, 119
    %v157 = vpop.permute.xlu0 %156
    %v159 = vlaneseq
    %v160 = vshrl.u32 %v159, 7
    %v161 = vsub.s32 0, %v160
    %v162 = vrot.slane %v80, %v161
    %v164 = vmul.f32 %v157, %v162
    %v165 = vpack.c.bf16 %v103, %v94
    %v166 = vpack.c.bf16 %v121, %v112
    %v167 = vpack.c.bf16 %v137, %v128
    %v168 = vpack.c.bf16 %v155, %v146
    %v169 = vpack.c.bf16 %v164, %v164
    %v170 = vld [vmem:[%s10] sm:$0xff]
    %v171 = vld [vmem:[%s10 + $0x8] sm:$0xff]
    %v172 = vld [vmem:[%s10 + $0x10] sm:$0xff]
    %v173 = vld [vmem:[%s10 + $0x18] sm:$0xff]
    %175 = vset.pattern.permute.xlu0 0
    %176 = vperm.xlu0 %175, %v170
    %v177 = vpop.permute.xlu0 %176
    %180 = vset.pattern.permute.xlu0 0
    %181 = vperm.xlu0 %180, %v171
    %v182 = vpop.permute.xlu0 %181
    %185 = vset.pattern.permute.xlu0 0
    %186 = vperm.xlu0 %185, %v172
    %v187 = vpop.permute.xlu0 %186
    %190 = vset.pattern.permute.xlu0 0
    %191 = vperm.xlu0 %190, %v173
    %v192 = vpop.permute.xlu0 %191
    %v198 = vunpack.c.l.b16 %v81
    %v199 = vunpack.c.l.b16 %v82
    %v200 = vunpack.c.l.b16 %v83
    %v201 = vunpack.c.l.b16 %v84
    %v202 = vpack.c.b16 %v199, %v198
    %v203 = vpack.c.b16 %v201, %v200
    %vm204 = vcmask 588800
    %v206 = vsel %vm204, %v202, 0
    %v209 = vsel %vm204, %v203, 0
    %vm211 = vcmask 1043456
    %v213 = vsel %vm211, %v169, 0
    %215 = vmatprep.subr.bf16.mxu0 0
    %216 = vmatpush1.bf16.msra.mxu0 %v165
    %217 = vmatprep.subr.bf16.mxu0 0
    %218 = vmatpush1.bf16.msra.mxu0 %v166
    %219 = vmatprep.subr.bf16.mxu0 0
    %220 = vmatpush1.bf16.msra.mxu0 %v167
    %221 = vmatprep.subr.bf16.mxu0 0
    %222 = vmatpush1.bf16.msra.mxu0 %v168
    %223 = vmatprep.subr.bf16.mxu0 0
    %224 = vmatpush1.bf16.msra.mxu0 %v213
    %225 = vmatprep.subr.bf16.mxu0 0
    %226 = vmatpush1.bf16.msra.mxu0 0
    %227 = vmatprep.subr.bf16.mxu0 0
    %228 = vmatpush1.bf16.msra.mxu0 0
    %229 = vmatprep.subr.bf16.mxu0 0
    %230 = vmatpush1.bf16.msra.mxu0 0
    %231 = vmatprep.subr.bf16.mxu0 0
    %232 = vmatpush1.bf16.msra.mxu0 0
    %233 = vmatprep.subr.bf16.mxu0 0
    %234 = vmatpush1.bf16.msra.mxu0 0
    %235 = vmatprep.subr.bf16.mxu0 0
    %236 = vmatpush1.bf16.msra.mxu0 0
    %237 = vmatprep.subr.bf16.mxu0 0
    %238 = vmatpush1.bf16.msra.mxu0 0
    %239 = vmatprep.subr.bf16.mxu0 0
    %240 = vmatpush1.bf16.msra.mxu0 0
    %241 = vmatprep.subr.bf16.mxu0 0
    %242 = vmatpush1.bf16.msra.mxu0 0
    %243 = vmatprep.subr.bf16.mxu0 0
    %244 = vmatpush1.bf16.msra.mxu0 0
    %245 = vmatprep.subr.bf16.mxu0 0
    %246 = vmatpush1.bf16.msra.mxu0 0
    %247 = vmatprep.mubr.bf16.mxu0 0
    %248 = vmatmul.mubr.bf16.gmra.mrb[0].mxu0 %v206
    %v249 = vpop.f32.mrb[0].mxu0
    %v250 = vadd.f32 %v177, %v249
    %v251 = vpop.f32.mrb[0].mxu0
    %v252 = vpop.f32.mrb[0].mxu0
    %v253 = vadd.f32 %v182, %v252
    %v254 = vpop.f32.mrb[0].mxu0
    %255 = vmatprep.mubr.bf16.mxu0 0
    %256 = vmatmul.mubr.bf16.gmra.mrb[0].mxu0 %v209
    %v257 = vpop.f32.mrb[0].mxu0
    %v258 = vadd.f32 %v187, %v257
    %v259 = vpop.f32.mrb[0].mxu0
    %v260 = vpop.f32.mrb[0].mxu0
    %v261 = vadd.f32 %v192, %v260
    %v262 = vpop.f32.mrb[0].mxu0
    %263 = vdwg.mxu0
    %v264 = vld [vmem:[%s9] sm:$0xf]
    %v265 = vld [vmem:[%s9 + $0x4] sm:$0xf]
    %v266 = vld [vmem:[%s9 + $0x8] sm:$0xf]
    %v267 = vld [vmem:[%s9 + $0xc] sm:$0xf]
    %v268 = vld [vmem:[%s11] sm:$0xf]
    %v269 = vld [vmem:[%s11 + $0x4] sm:$0xf]
    %v270 = vld [vmem:[%s11 + $0x8] sm:$0xf]
    %v271 = vld [vmem:[%s11 + $0xc] sm:$0xf]
    %v272 = vld [vmem:[%s12] sm:$0xff]
    %v273 = vld [vmem:[%s12 + $0x8] sm:$0xf]
    %v274 = vld [vmem:[%s13] sm:$0xff]
    %v275 = vld [vmem:[%s3] sm:$0xff]
    %v276 = vld [vmem:[%s3 + $0x8] sm:$0xff]
    %v277 = vld [vmem:[%s3 + $0x10] sm:$0xff]
    %v278 = vld [vmem:[%s3 + $0x18] sm:$0xff]
    %v279 = vld [vmem:[%s4] sm:$0xff]
    %v280 = vld [vmem:[%s4 + $0x8] sm:$0xff]
    %v281 = vld [vmem:[%s4 + $0x10] sm:$0xff]
    %v282 = vld [vmem:[%s4 + $0x18] sm:$0xff]
    %v283 = vld [vmem:[%s5] sm:$0xff]
    %v284 = vld [vmem:[%s5 + $0x8] sm:$0xff]
    %v285 = vld [vmem:[%s5 + $0x10] sm:$0xff]
    %v286 = vld [vmem:[%s5 + $0x18] sm:$0xff]
    %v287 = vld [vmem:[%s6] sm:$0xff]
    %v288 = vld [vmem:[%s6 + $0x8] sm:$0xff]
    %v289 = vld [vmem:[%s6 + $0x10] sm:$0xff]
    %v290 = vld [vmem:[%s6 + $0x18] sm:$0xff]
    %v291 = vld [vmem:[%s1] sm:$0xff]
    loop: start=0, step=1, limit=4
    $region66: #{_forward_impl.7} parent=1 // loop_pre_header
      _
    $region67: #{_forward_impl.7} parent=1 // loop_header
      %s293 = sphi 0, %s297
      %p294 = scmp.ge.s32.totalorder %s293, 4
      %v298 = vphi %v291, %v900
    $region68: #{_forward_impl.7} parent=1 // loop_header_branch
      %296 = sbr.rel (%p294) target = $region72
    $region69: #{_forward_impl.7} parent=1 // loop_body
      %299 = vrot.lane.b32.xlu0 %v298, 9
      %v300 = vpop.permute.xlu0 %299
      %v301 = vmul.f32 %v300, %v92
      %302 = vrot.lane.b32.xlu0 %v298, 8
      %v303 = vpop.permute.xlu0 %302
      %v304 = vmul.f32 %v303, %v101
      %305 = vrot.lane.b32.xlu0 %v298, 7
      %v306 = vpop.permute.xlu0 %305
      %v307 = vmul.f32 %v306, %v110
      %308 = vrot.lane.b32.xlu0 %v298, 1
      %v309 = vpop.permute.xlu0 %308
      %v310 = vmul.f32 %v309, %v119
      %v311 = vmul.f32 %v298, %v126
      %312 = vrot.lane.b32.xlu0 %v298, 127
      %v313 = vpop.permute.xlu0 %312
      %v314 = vmul.f32 %v313, %v135
      %315 = vrot.lane.b32.xlu0 %v298, 121
      %v316 = vpop.permute.xlu0 %315
      %v317 = vmul.f32 %v316, %v144
      %318 = vrot.lane.b32.xlu0 %v298, 120
      %v319 = vpop.permute.xlu0 %318
      %v320 = vmul.f32 %v319, %v153
      %321 = vrot.lane.b32.xlu0 %v298, 119
      %v322 = vpop.permute.xlu0 %321
      %v323 = vmul.f32 %v322, %v162
      %v324 = vpack.c.bf16 %v304, %v301
      %v325 = vpack.c.bf16 %v310, %v307
      %v326 = vpack.c.bf16 %v314, %v311
      %v327 = vpack.c.bf16 %v320, %v317
      %v328 = vpack.c.bf16 %v323, %v323
      %v333 = vunpack.c.l.b16 %v264
      %v334 = vunpack.c.l.b16 %v265
      %v335 = vunpack.c.l.b16 %v266
      %v336 = vunpack.c.l.b16 %v267
      %v337 = vpack.c.b16 %v334, %v333
      %v338 = vpack.c.b16 %v336, %v335
      %v340 = vsel %vm204, %v337, 0
      %v343 = vsel %vm204, %v338, 0
      %v346 = vsel %vm211, %v328, 0
      %348 = vmatprep.subr.bf16.mxu0 0
      %349 = vmatpush1.bf16.msra.mxu0 %v324
      %350 = vmatprep.subr.bf16.mxu0 0
      %351 = vmatpush1.bf16.msra.mxu0 %v325
      %352 = vmatprep.subr.bf16.mxu0 0
      %353 = vmatpush1.bf16.msra.mxu0 %v326
      %354 = vmatprep.subr.bf16.mxu0 0
      %355 = vmatpush1.bf16.msra.mxu0 %v327
      %356 = vmatprep.subr.bf16.mxu0 0
      %357 = vmatpush1.bf16.msra.mxu0 %v346
      %358 = vmatprep.subr.bf16.mxu0 0
      %359 = vmatpush1.bf16.msra.mxu0 0
      %360 = vmatprep.subr.bf16.mxu0 0
      %361 = vmatpush1.bf16.msra.mxu0 0
      %362 = vmatprep.subr.bf16.mxu0 0
      %363 = vmatpush1.bf16.msra.mxu0 0
      %364 = vmatprep.subr.bf16.mxu0 0
      %365 = vmatpush1.bf16.msra.mxu0 0
      %366 = vmatprep.subr.bf16.mxu0 0
      %367 = vmatpush1.bf16.msra.mxu0 0
      %368 = vmatprep.subr.bf16.mxu0 0
      %369 = vmatpush1.bf16.msra.mxu0 0
      %370 = vmatprep.subr.bf16.mxu0 0
      %371 = vmatpush1.bf16.msra.mxu0 0
      %372 = vmatprep.subr.bf16.mxu0 0
      %373 = vmatpush1.bf16.msra.mxu0 0
      %374 = vmatprep.subr.bf16.mxu0 0
      %375 = vmatpush1.bf16.msra.mxu0 0
      %376 = vmatprep.subr.bf16.mxu0 0
      %377 = vmatpush1.bf16.msra.mxu0 0
      %378 = vmatprep.subr.bf16.mxu0 0
      %379 = vmatpush1.bf16.msra.mxu0 0
      %380 = vmatprep.mubr.bf16.mxu0 0
      %381 = vmatmul.mubr.bf16.gmra.mrb[0].mxu0 %v340
      %v382 = vpop.f32.mrb[0].mxu0
      %v383 = vadd.f32 0.0, %v382
      %v384 = vpop.f32.mrb[0].mxu0
      %v385 = vpop.f32.mrb[0].mxu0
      %v386 = vadd.f32 0.0, %v385
      %v387 = vpop.f32.mrb[0].mxu0
      %388 = vmatprep.mubr.bf16.mxu0 0
      %389 = vmatmul.mubr.bf16.gmra.mrb[0].mxu0 %v343
      %v390 = vpop.f32.mrb[0].mxu0
      %v391 = vadd.f32 0.0, %v390
      %v392 = vpop.f32.mrb[0].mxu0
      %v393 = vpop.f32.mrb[0].mxu0
      %v394 = vadd.f32 0.0, %v393
      %v395 = vpop.f32.mrb[0].mxu0
      %396 = vdwg.mxu0
      %v397 = vadd.f32 %v250, %v383
      %v398 = vadd.f32 %v253, %v386
      %v399 = vadd.f32 %v258, %v391
      %v400 = vadd.f32 %v261, %v394
      %v401 = vxor.u32 %v397, 2147483648
      %v402 = vxor.u32 %v398, 2147483648
      %v403 = vxor.u32 %v399, 2147483648
      %v404 = vxor.u32 %v400, 2147483648
      %v405 = vmul.f32 %v401, 1.442695
      %v406 = vpow.pop %v405
      %v407 = vmul.f32 %v402, 1.442695
      %v408 = vpow.pop %v407
      %v409 = vmul.f32 %v403, 1.442695
      %v410 = vpow.pop %v409
      %v411 = vmul.f32 %v404, 1.442695
      %v412 = vpow.pop %v411
      %v413 = vadd.f32 %v406, 1.0
      %v414 = vadd.f32 %v408, 1.0
      %v415 = vadd.f32 %v410, 1.0
      %v416 = vadd.f32 %v412, 1.0
      %v417 = vrcp.pop %v413
      %v418 = vmul.f32 1.0, %v417
      %v419 = vrcp.pop %v414
      %v420 = vmul.f32 1.0, %v419
      %v421 = vrcp.pop %v415
      %v422 = vmul.f32 1.0, %v421
      %v423 = vrcp.pop %v416
      %v424 = vmul.f32 1.0, %v423
      %v425 = vmul.f32 %v397, %v418
      %v426 = vmul.f32 %v398, %v420
      %v427 = vmul.f32 %v399, %v422
      %v428 = vmul.f32 %v400, %v424
      %s429 = smul.u32 %s293, 32
      %s430 = scalar_lea.vmem %s2, %s429
      %v431 = vld [vmem:[%s430] sm:$0xff]
      %v432 = vld [vmem:[%s430 + $0x8] sm:$0xff]
      %v433 = vld [vmem:[%s430 + $0x10] sm:$0xff]
      %v434 = vld [vmem:[%s430 + $0x18] sm:$0xff]
      %436 = vset.pattern.permute.xlu0 0
      %437 = vperm.xlu0 %436, %v431
      %v438 = vpop.permute.xlu0 %437
      %441 = vset.pattern.permute.xlu0 0
      %442 = vperm.xlu0 %441, %v432
      %v443 = vpop.permute.xlu0 %442
      %446 = vset.pattern.permute.xlu0 0
      %447 = vperm.xlu0 %446, %v433
      %v448 = vpop.permute.xlu0 %447
      %451 = vset.pattern.permute.xlu0 0
      %452 = vperm.xlu0 %451, %v434
      %v453 = vpop.permute.xlu0 %452
      %v455 = vadd.f32 %v425, %v438
      %v456 = vadd.f32 %v426, %v443
      %v457 = vadd.f32 %v427, %v448
      %v458 = vadd.f32 %v428, %v453
      %v459 = vpack.c.bf16 %v456, %v455
      %v460 = vpack.c.bf16 %v458, %v457
      %v465 = vunpack.c.l.b16 %v268
      %v466 = vunpack.c.l.b16 %v269
      %v467 = vunpack.c.l.b16 %v270
      %v468 = vunpack.c.l.b16 %v271
      %v469 = vpack.c.b16 %v466, %v465
      %v470 = vpack.c.b16 %v468, %v467
      %vm471 = vcmask 261120
      %v473 = vsel %vm471, %v469, 0
      %v476 = vsel %vm471, %v470, 0
      %478 = vmatprep.subr.bf16.mxu0 0
      %479 = vmatpush1.bf16.msra.mxu0 %v459
      %480 = vmatprep.subr.bf16.mxu0 0
      %481 = vmatpush1.bf16.msra.mxu0 %v460
      %482 = vmatprep.subr.bf16.mxu0 0
      %483 = vmatpush1.bf16.msra.mxu0 0
      %484 = vmatprep.subr.bf16.mxu0 0
      %485 = vmatpush1.bf16.msra.mxu0 0
      %486 = vmatprep.subr.bf16.mxu0 0
      %487 = vmatpush1.bf16.msra.mxu0 0
      %488 = vmatprep.subr.bf16.mxu0 0
      %489 = vmatpush1.bf16.msra.mxu0 0
      %490 = vmatprep.subr.bf16.mxu0 0
      %491 = vmatpush1.bf16.msra.mxu0 0
      %492 = vmatprep.subr.bf16.mxu0 0
      %493 = vmatpush1.bf16.msra.mxu0 0
      %494 = vmatprep.subr.bf16.mxu0 0
      %495 = vmatpush1.bf16.msra.mxu0 0
      %496 = vmatprep.subr.bf16.mxu0 0
      %497 = vmatpush1.bf16.msra.mxu0 0
      %498 = vmatprep.subr.bf16.mxu0 0
      %499 = vmatpush1.bf16.msra.mxu0 0
      %500 = vmatprep.subr.bf16.mxu0 0
      %501 = vmatpush1.bf16.msra.mxu0 0
      %502 = vmatprep.subr.bf16.mxu0 0
      %503 = vmatpush1.bf16.msra.mxu0 0
      %504 = vmatprep.subr.bf16.mxu0 0
      %505 = vmatpush1.bf16.msra.mxu0 0
      %506 = vmatprep.subr.bf16.mxu0 0
      %507 = vmatpush1.bf16.msra.mxu0 0
      %508 = vmatprep.subr.bf16.mxu0 0
      %509 = vmatpush1.bf16.msra.mxu0 0
      %510 = vmatprep.mubr.bf16.mxu0 0
      %511 = vmatmul.mubr.bf16.gmra.mrb[0].mxu0 %v473
      %v512 = vpop.f32.mrb[0].mxu0
      %v513 = vadd.f32 0.0, %v512
      %v514 = vpop.f32.mrb[0].mxu0
      %v515 = vpop.f32.mrb[0].mxu0
      %v516 = vadd.f32 0.0, %v515
      %v517 = vpop.f32.mrb[0].mxu0
      %518 = vmatprep.mubr.bf16.mxu0 0
      %519 = vmatmul.mubr.bf16.gmra.mrb[0].mxu0 %v476
      %v520 = vpop.f32.mrb[0].mxu0
      %v521 = vadd.f32 0.0, %v520
      %v522 = vpop.f32.mrb[0].mxu0
      %v523 = vpop.f32.mrb[0].mxu0
      %v524 = vadd.f32 0.0, %v523
      %v525 = vpop.f32.mrb[0].mxu0
      %526 = vdwg.mxu0
      %528 = vset.pattern.permute.xlu0 0
      %529 = vperm.xlu0 %528, %v275
      %v530 = vpop.permute.xlu0 %529
      %533 = vset.pattern.permute.xlu0 0
      %534 = vperm.xlu0 %533, %v276
      %v535 = vpop.permute.xlu0 %534
      %538 = vset.pattern.permute.xlu0 0
      %539 = vperm.xlu0 %538, %v277
      %v540 = vpop.permute.xlu0 %539
      %543 = vset.pattern.permute.xlu0 0
      %544 = vperm.xlu0 %543, %v278
      %v545 = vpop.permute.xlu0 %544
      %v547 = vmul.f32 %v513, %v530
      %v548 = vmul.f32 %v516, %v535
      %v549 = vmul.f32 %v521, %v540
      %v550 = vmul.f32 %v524, %v545
      %v551 = vadd.f32 %v547, %v548
      %v552 = vadd.f32 %v551, %v549
      %v553 = vadd.f32 %v552, %v550
      %v554 = vrot.slane %v553, 4
      %v555 = vadd.f32 %v553, %v554
      %v556 = vrot.slane %v555, 2
      %v557 = vadd.f32 %v555, %v556
      %v558 = vrot.slane %v557, 1
      %v559 = vadd.f32 %v557, %v558
      %v560 = vmul.f32 %v559, 0.17677669
      %562 = vset.pattern.permute.xlu0 0
      %563 = vperm.xlu0 %562, %v279
      %v564 = vpop.permute.xlu0 %563
      %567 = vset.pattern.permute.xlu0 0
      %568 = vperm.xlu0 %567, %v280
      %v569 = vpop.permute.xlu0 %568
      %572 = vset.pattern.permute.xlu0 0
      %573 = vperm.xlu0 %572, %v281
      %v574 = vpop.permute.xlu0 %573
      %577 = vset.pattern.permute.xlu0 0
      %578 = vperm.xlu0 %577, %v282
      %v579 = vpop.permute.xlu0 %578
      %v581 = vmul.f32 %v513, %v564
      %v582 = vmul.f32 %v516, %v569
      %v583 = vmul.f32 %v521, %v574
      %v584 = vmul.f32 %v524, %v579
      %v585 = vadd.f32 %v581, %v582
      %v586 = vadd.f32 %v585, %v583
      %v587 = vadd.f32 %v586, %v584
      %v588 = vrot.slane %v587, 4
      %v589 = vadd.f32 %v587, %v588
      %v590 = vrot.slane %v589, 2
      %v591 = vadd.f32 %v589, %v590
      %v592 = vrot.slane %v591, 1
      %v593 = vadd.f32 %v591, %v592
      %v594 = vmul.f32 %v593, 0.17677669
      %v595 = vmax.f32 %v560, %v594
      %v596 = vsub.f32 %v560, %v595
      %v597 = vmul.f32 %v596, 1.442695
      %v598 = vpow.pop %v597
      %v599 = vsub.f32 %v594, %v595
      %v600 = vmul.f32 %v599, 1.442695
      %v601 = vpow.pop %v600
      %v602 = vadd.f32 %v598, %v601
      %v603 = vrcp.pop %v602
      %605 = vset.pattern.permute.xlu0 0
      %606 = vperm.xlu0 %605, %v283
      %v607 = vpop.permute.xlu0 %606
      %610 = vset.pattern.permute.xlu0 0
      %611 = vperm.xlu0 %610, %v284
      %v612 = vpop.permute.xlu0 %611
      %615 = vset.pattern.permute.xlu0 0
      %616 = vperm.xlu0 %615, %v285
      %v617 = vpop.permute.xlu0 %616
      %620 = vset.pattern.permute.xlu0 0
      %621 = vperm.xlu0 %620, %v286
      %v622 = vpop.permute.xlu0 %621
      %v624 = vmul.f32 %v607, %v598
      %v625 = vmul.f32 %v612, %v598
      %v626 = vmul.f32 %v617, %v598
      %v627 = vmul.f32 %v622, %v598
      %629 = vset.pattern.permute.xlu0 0
      %630 = vperm.xlu0 %629, %v287
      %v631 = vpop.permute.xlu0 %630
      %634 = vset.pattern.permute.xlu0 0
      %635 = vperm.xlu0 %634, %v288
      %v636 = vpop.permute.xlu0 %635
      %639 = vset.pattern.permute.xlu0 0
      %640 = vperm.xlu0 %639, %v289
      %v641 = vpop.permute.xlu0 %640
      %644 = vset.pattern.permute.xlu0 0
      %645 = vperm.xlu0 %644, %v290
      %v646 = vpop.permute.xlu0 %645
      %v648 = vmul.f32 %v631, %v601
      %v649 = vmul.f32 %v636, %v601
      %v650 = vmul.f32 %v641, %v601
      %v651 = vmul.f32 %v646, %v601
      %v652 = vadd.f32 %v624, %v648
      %v653 = vadd.f32 %v625, %v649
      %v654 = vadd.f32 %v626, %v650
      %v655 = vadd.f32 %v627, %v651
      %v656 = vmul.f32 %v652, %v603
      %v657 = vmul.f32 %v653, %v603
      %v658 = vmul.f32 %v654, %v603
      %v659 = vmul.f32 %v655, %v603
      %v660 = vadd.f32 %v455, %v656
      %v661 = vadd.f32 %v456, %v657
      %v662 = vadd.f32 %v457, %v658
      %v663 = vadd.f32 %v458, %v659
      %664 = vrot.lane.b32.xlu0 %v660, 9
      %v665 = vpop.permute.xlu0 %664
      %666 = vrot.lane.b32.xlu0 %v661, 9
      %v667 = vpop.permute.xlu0 %666
      %668 = vrot.lane.b32.xlu0 %v662, 9
      %v669 = vpop.permute.xlu0 %668
      %670 = vrot.lane.b32.xlu0 %v663, 9
      %v671 = vpop.permute.xlu0 %670
      %v672 = vmul.f32 %v665, %v92
      %v673 = vmul.f32 %v667, %v92
      %v674 = vmul.f32 %v669, %v92
      %v675 = vmul.f32 %v671, %v92
      %676 = vrot.lane.b32.xlu0 %v660, 8
      %v677 = vpop.permute.xlu0 %676
      %678 = vrot.lane.b32.xlu0 %v661, 8
      %v679 = vpop.permute.xlu0 %678
      %680 = vrot.lane.b32.xlu0 %v662, 8
      %v681 = vpop.permute.xlu0 %680
      %682 = vrot.lane.b32.xlu0 %v663, 8
      %v683 = vpop.permute.xlu0 %682
      %v684 = vmul.f32 %v677, %v101
      %v685 = vmul.f32 %v679, %v101
      %v686 = vmul.f32 %v681, %v101
      %v687 = vmul.f32 %v683, %v101
      %688 = vrot.lane.b32.xlu0 %v660, 7
      %v689 = vpop.permute.xlu0 %688
      %690 = vrot.lane.b32.xlu0 %v661, 7
      %v691 = vpop.permute.xlu0 %690
      %692 = vrot.lane.b32.xlu0 %v662, 7
      %v693 = vpop.permute.xlu0 %692
      %694 = vrot.lane.b32.xlu0 %v663, 7
      %v695 = vpop.permute.xlu0 %694
      %v696 = vmul.f32 %v689, %v110
      %v697 = vmul.f32 %v691, %v110
      %v698 = vmul.f32 %v693, %v110
      %v699 = vmul.f32 %v695, %v110
      %700 = vrot.lane.b32.xlu0 %v660, 1
      %v701 = vpop.permute.xlu0 %700
      %702 = vrot.lane.b32.xlu0 %v661, 1
      %v703 = vpop.permute.xlu0 %702
      %704 = vrot.lane.b32.xlu0 %v662, 1
      %v705 = vpop.permute.xlu0 %704
      %706 = vrot.lane.b32.xlu0 %v663, 1
      %v707 = vpop.permute.xlu0 %706
      %v708 = vmul.f32 %v701, %v119
      %v709 = vmul.f32 %v703, %v119
      %v710 = vmul.f32 %v705, %v119
      %v711 = vmul.f32 %v707, %v119
      %v712 = vmul.f32 %v660, %v126
      %v713 = vmul.f32 %v661, %v126
      %v714 = vmul.f32 %v662, %v126
      %v715 = vmul.f32 %v663, %v126
      %716 = vrot.lane.b32.xlu0 %v660, 127
      %v717 = vpop.permute.xlu0 %716
      %718 = vrot.lane.b32.xlu0 %v661, 127
      %v719 = vpop.permute.xlu0 %718
      %720 = vrot.lane.b32.xlu0 %v662, 127
      %v721 = vpop.permute.xlu0 %720
      %722 = vrot.lane.b32.xlu0 %v663, 127
      %v723 = vpop.permute.xlu0 %722
      %v724 = vmul.f32 %v717, %v135
      %v725 = vmul.f32 %v719, %v135
      %v726 = vmul.f32 %v721, %v135
      %v727 = vmul.f32 %v723, %v135
      %728 = vrot.lane.b32.xlu0 %v660, 121
      %v729 = vpop.permute.xlu0 %728
      %730 = vrot.lane.b32.xlu0 %v661, 121
      %v731 = vpop.permute.xlu0 %730
      %732 = vrot.lane.b32.xlu0 %v662, 121
      %v733 = vpop.permute.xlu0 %732
      %734 = vrot.lane.b32.xlu0 %v663, 121
      %v735 = vpop.permute.xlu0 %734
      %v736 = vmul.f32 %v729, %v144
      %v737 = vmul.f32 %v731, %v144
      %v738 = vmul.f32 %v733, %v144
      %v739 = vmul.f32 %v735, %v144
      %740 = vrot.lane.b32.xlu0 %v660, 120
      %v741 = vpop.permute.xlu0 %740
      %742 = vrot.lane.b32.xlu0 %v661, 120
      %v743 = vpop.permute.xlu0 %742
      %744 = vrot.lane.b32.xlu0 %v662, 120
      %v745 = vpop.permute.xlu0 %744
      %746 = vrot.lane.b32.xlu0 %v663, 120
      %v747 = vpop.permute.xlu0 %746
      %v748 = vmul.f32 %v741, %v153
      %v749 = vmul.f32 %v743, %v153
      %v750 = vmul.f32 %v745, %v153
      %v751 = vmul.f32 %v747, %v153
      %752 = vrot.lane.b32.xlu0 %v660, 119
      %v753 = vpop.permute.xlu0 %752
      %754 = vrot.lane.b32.xlu0 %v661, 119
      %v755 = vpop.permute.xlu0 %754
      %756 = vrot.lane.b32.xlu0 %v662, 119
      %v757 = vpop.permute.xlu0 %756
      %758 = vrot.lane.b32.xlu0 %v663, 119
      %v759 = vpop.permute.xlu0 %758
      %v760 = vmul.f32 %v753, %v162
      %v761 = vmul.f32 %v755, %v162
      %v762 = vmul.f32 %v757, %v162
      %v763 = vmul.f32 %v759, %v162
      %v764 = vpack.c.bf16 %v673, %v672
      %v765 = vpack.c.bf16 %v675, %v674
      %v766 = vpack.c.bf16 %v685, %v684
      %v767 = vpack.c.bf16 %v687, %v686
      %v768 = vpack.c.bf16 %v697, %v696
      %v769 = vpack.c.bf16 %v699, %v698
      %v770 = vpack.c.bf16 %v709, %v708
      %v771 = vpack.c.bf16 %v711, %v710
      %v772 = vpack.c.bf16 %v713, %v712
      %v773 = vpack.c.bf16 %v715, %v714
      %v774 = vpack.c.bf16 %v725, %v724
      %v775 = vpack.c.bf16 %v727, %v726
      %v776 = vpack.c.bf16 %v737, %v736
      %v777 = vpack.c.bf16 %v739, %v738
      %v778 = vpack.c.bf16 %v749, %v748
      %v779 = vpack.c.bf16 %v751, %v750
      %v780 = vpack.c.bf16 %v761, %v760
      %v781 = vpack.c.bf16 %v763, %v762
      %783 = vset.pattern.permute.xlu0 0
      %784 = vperm.xlu0 %783, %v274
      %v785 = vpop.permute.xlu0 %784
      %v789 = vunpack.c.l.b16 %v272
      %v790 = vunpack.c.h.b16 %v272
      %v791 = vunpack.c.l.b16 %v273
      %v792 = vpack.c.b16 %v789, %v789
      %v793 = vpack.c.b16 %v790, %v790
      %v794 = vpack.c.b16 %v791, %v791
      %v798 = vsel %vm471, %v794, 0
      %800 = vmatprep.subr.bf16.mxu0 0
      %801 = vmatpush1.bf16.msra.mxu0 %v764
      %802 = vmatprep.subr.bf16.mxu0 0
      %803 = vmatpush1.bf16.msra.mxu0 %v765
      %804 = vmatprep.subr.bf16.mxu0 0
      %805 = vmatpush1.bf16.msra.mxu0 %v766
      %806 = vmatprep.subr.bf16.mxu0 0
      %807 = vmatpush1.bf16.msra.mxu0 %v767
      %808 = vmatprep.subr.bf16.mxu0 0
      %809 = vmatpush1.bf16.msra.mxu0 %v768
      %810 = vmatprep.subr.bf16.mxu0 0
      %811 = vmatpush1.bf16.msra.mxu0 %v769
      %812 = vmatprep.subr.bf16.mxu0 0
      %813 = vmatpush1.bf16.msra.mxu0 %v770
      %814 = vmatprep.subr.bf16.mxu0 0
      %815 = vmatpush1.bf16.msra.mxu0 %v771
      %816 = vmatprep.subr.bf16.mxu0 0
      %817 = vmatpush1.bf16.msra.mxu0 %v772
      %818 = vmatprep.subr.bf16.mxu0 0
      %819 = vmatpush1.bf16.msra.mxu0 %v773
      %820 = vmatprep.subr.bf16.mxu0 0
      %821 = vmatpush1.bf16.msra.mxu0 %v774
      %822 = vmatprep.subr.bf16.mxu0 0
      %823 = vmatpush1.bf16.msra.mxu0 %v775
      %824 = vmatprep.subr.bf16.mxu0 0
      %825 = vmatpush1.bf16.msra.mxu0 %v776
      %826 = vmatprep.subr.bf16.mxu0 0
      %827 = vmatpush1.bf16.msra.mxu0 %v777
      %828 = vmatprep.subr.bf16.mxu0 0
      %829 = vmatpush1.bf16.msra.mxu0 %v778
      %830 = vmatprep.subr.bf16.mxu0 0
      %831 = vmatpush1.bf16.msra.mxu0 %v779
      %832 = vmatprep.mubr.bf16.mxu0 %v793
      %833 = vmatmul.mubr.bf16.gmra.mrb[0].mxu0 %v792
      %v834 = vpop.f32.mrb[0].mxu0
      %v835 = vadd.f32 %v785, %v834
      %v836 = vpop.f32.mrb[0].mxu0
      %v837 = vpop.f32.mrb[0].mxu0
      %v838 = vpop.f32.mrb[0].mxu0
      %839 = vdwg.mxu0
      %840 = vmatprep.subr.bf16.mxu0 0
      %841 = vmatpush1.bf16.msra.mxu0 %v780
      %842 = vmatprep.subr.bf16.mxu0 0
      %843 = vmatpush1.bf16.msra.mxu0 %v781
      %844 = vmatprep.subr.bf16.mxu0 0
      %845 = vmatpush1.bf16.msra.mxu0 0
      %846 = vmatprep.subr.bf16.mxu0 0
      %847 = vmatpush1.bf16.msra.mxu0 0
      %848 = vmatprep.subr.bf16.mxu0 0
      %849 = vmatpush1.bf16.msra.mxu0 0
      %850 = vmatprep.subr.bf16.mxu0 0
      %851 = vmatpush1.bf16.msra.mxu0 0
      %852 = vmatprep.subr.bf16.mxu0 0
      %853 = vmatpush1.bf16.msra.mxu0 0
      %854 = vmatprep.subr.bf16.mxu0 0
      %855 = vmatpush1.bf16.msra.mxu0 0
      %856 = vmatprep.subr.bf16.mxu0 0
      %857 = vmatpush1.bf16.msra.mxu0 0
      %858 = vmatprep.subr.bf16.mxu0 0
      %859 = vmatpush1.bf16.msra.mxu0 0
      %860 = vmatprep.subr.bf16.mxu0 0
      %861 = vmatpush1.bf16.msra.mxu0 0
      %862 = vmatprep.subr.bf16.mxu0 0
      %863 = vmatpush1.bf16.msra.mxu0 0
      %864 = vmatprep.subr.bf16.mxu0 0
      %865 = vmatpush1.bf16.msra.mxu0 0
      %866 = vmatprep.subr.bf16.mxu0 0
      %867 = vmatpush1.bf16.msra.mxu0 0
      %868 = vmatprep.subr.bf16.mxu0 0
      %869 = vmatpush1.bf16.msra.mxu0 0
      %870 = vmatprep.subr.bf16.mxu0 0
      %871 = vmatpush1.bf16.msra.mxu0 0
      %872 = vmatprep.mubr.bf16.mxu0 0
      %873 = vmatmul.mubr.bf16.gmra.mrb[0].mxu0 %v798
      %v874 = vpop.f32.mrb[0].mxu0
      %v875 = vadd.f32 %v835, %v874
      %v876 = vpop.f32.mrb[0].mxu0
      %v877 = vpop.f32.mrb[0].mxu0
      %v878 = vpop.f32.mrb[0].mxu0
      %879 = vdwg.mxu0
      %s880 = smul.u32 %s293, 4
      %s881 = sld [smem:[#allocation2 + %s880]]
      %s882 = sadd.s32 %s880, 1
      %s883 = sld [smem:[#allocation2 + %s882]]
      %s884 = sadd.s32 %s880, 2
      %s885 = sld [smem:[#allocation2 + %s884]]
      %s886 = sadd.s32 %s880, 3
      %s887 = sld [smem:[#allocation2 + %s886]]
      %v888 = vstv %s881
      %v889 = vmul.f32 %v888, %v298
      %v890 = vstv %s883
      %v891 = vmul.f32 %v890, %v875
      %v892 = vsub.f32 %v889, %v891
      %v893 = vmul.f32 %v888, %v875
      %v894 = vmul.f32 %v890, %v298
      %v895 = vadd.f32 %v893, %v894
      %v896 = vstv %s885
      %v897 = vmul.f32 %v896, %v892
      %v898 = vstv %s887
      %v899 = vmul.f32 %v898, %v895
      %v900 = vadd.f32 %v897, %v899
    $region70: #{_forward_impl.7} parent=1 // loop_footer
      %s297 = sadd.s32 1, %s293
    $region71: #{_forward_impl.7} parent=1 // loop_footer_branch
      %292 = sbr.rel target = $region67
    $region72: #{_forward_impl.7} parent=1 // loop_exit
      _
    %901 = vst [vmem:[%s15] sm:$0xff] %v298
    // Predicated region
    $region73: #{_forward_impl.7} parent=1 // pred_check
      _
    $region74: #{_forward_impl.7} parent=1 // pred_check_branch
      %903 = sbr.rel (0) target = $region76
    $region75: #{_forward_impl.7} parent=1 // pred_region
      _
    $region76: #{_forward_impl.7} parent=1 // pred_fallthru
      _
    // Predicated region
    $region77: #{_forward_impl.7} parent=1 // pred_check
      _
    $region78: #{_forward_impl.7} parent=1 // pred_check_branch
      %905 = sbr.rel (0) target = $region80
    $region79: #{_forward_impl.7} parent=1 // pred_region
      _
    $region80: #{_forward_impl.7} parent=1 // pred_fallthru
      _
    %906 = vsyncpa [#allocation3], 1

// kernel: _forward_impl.9
$region0: #{_forward_impl.9}
  #allocation0 [shape = 'u32[]', space=smem, size = 0x4, offset = 0x4, fixed_abs, tag = 'smem constant byte address 0x4 - core index']
  #allocation1 [shape = 'u32[144,128]{1,0:T(1,128)}', space=vmem, size = 0x12000, scoped, tag = 'internal scratch']
  %s0 = inlined_call_operand.vmem [shape: f32[2,64,64], index: 0, kind: input, shape index: {}]
  %s1 = inlined_call_operand.vmem [shape: f32[16,64], index: 1, kind: input, shape index: {}]
  %s2 = inlined_call_operand.vmem [shape: f32[64,16], index: 2, kind: input, shape index: {}]
  %s3 = inlined_call_operand.vmem [shape: f32[2,16,16], index: 3, kind: output, shape index: {}]
  %s4 = sld [smem:[#allocation0]]
  $region22: #{_forward_impl.9} parent=0
    _
  %s6 = ssub.s32 1, %s4
  %s7 = scalar_select 0, %s6, %s4
  // Predicated region
  $region2: #{_forward_impl.9} parent=0 // pred_check
    _
  $region3: #{_forward_impl.9} parent=0 // pred_check_branch
    %9 = sbr.rel (0) target = $region5
  $region4: #{_forward_impl.9} parent=0 // pred_region
    _
  $region5: #{_forward_impl.9} parent=0 // pred_fallthru
    _
  // Predicated region
  $region6: #{_forward_impl.9} parent=0 // pred_check
    _
  $region7: #{_forward_impl.9} parent=0 // pred_check_branch
    %11 = sbr.rel (0) target = $region9
  $region8: #{_forward_impl.9} parent=0 // pred_region
    _
  $region9: #{_forward_impl.9} parent=0 // pred_fallthru
    _
  // Predicated region
  $region10: #{_forward_impl.9} parent=0 // pred_check
    _
  $region11: #{_forward_impl.9} parent=0 // pred_check_branch
    %13 = sbr.rel (0) target = $region13
  $region12: #{_forward_impl.9} parent=0 // pred_region
    _
  $region13: #{_forward_impl.9} parent=0 // pred_fallthru
    _
  %v14 = vld [vmem:[%s0] sm:$0xff]
  %v15 = vld [vmem:[%s0 + $0x8] sm:$0xff]
  %v16 = vld [vmem:[%s0 + $0x10] sm:$0xff]
  %v17 = vld [vmem:[%s0 + $0x18] sm:$0xff]
  %v18 = vld [vmem:[%s0 + $0x20] sm:$0xff]
  %v19 = vld [vmem:[%s0 + $0x28] sm:$0xff]
  %v20 = vld [vmem:[%s0 + $0x30] sm:$0xff]
  %v21 = vld [vmem:[%s0 + $0x38] sm:$0xff]
  %v22 = vld [vmem:[%s2] sm:$0xff]
  %v23 = vld [vmem:[%s2 + $0x8] sm:$0xff]
  %v24 = vld [vmem:[%s2 + $0x10] sm:$0xff]
  %v25 = vld [vmem:[%s2 + $0x18] sm:$0xff]
  %v26 = vld [vmem:[%s2 + $0x20] sm:$0xff]
  %v27 = vld [vmem:[%s2 + $0x28] sm:$0xff]
  %v28 = vld [vmem:[%s2 + $0x30] sm:$0xff]
  %v29 = vld [vmem:[%s2 + $0x38] sm:$0xff]
  %vm30 = vcmask 523264
  %v32 = vsel %vm30, %v14, 0
  %v35 = vsel %vm30, %v15, 0
  %v38 = vsel %vm30, %v16, 0
  %v41 = vsel %vm30, %v17, 0
  %v44 = vsel %vm30, %v18, 0
  %v47 = vsel %vm30, %v19, 0
  %v50 = vsel %vm30, %v20, 0
  %v53 = vsel %vm30, %v21, 0
  %55 = vmatprep.subr.mxu0 0.0
  %56 = vmatpush1.msra.mxu0 %v22
  %57 = vmatprep.subr.mxu0 0.0
  %58 = vmatpush1.msra.mxu0 %v23
  %59 = vmatprep.subr.mxu0 0.0
  %60 = vmatpush1.msra.mxu0 %v24
  %61 = vmatprep.subr.mxu0 0.0
  %62 = vmatpush1.msra.mxu0 %v25
  %63 = vmatprep.subr.mxu0 0.0
  %64 = vmatpush1.msra.mxu0 %v26
  %65 = vmatprep.subr.mxu0 0.0
  %66 = vmatpush1.msra.mxu0 %v27
  %67 = vmatprep.subr.mxu0 0.0
  %68 = vmatpush1.msra.mxu0 %v28
  %69 = vmatprep.subr.mxu0 0.0
  %70 = vmatpush1.msra.mxu0 %v29
  %71 = vmatprep.subr.mxu0 0.0
  %72 = vmatpush1.msra.mxu0 0.0
  %73 = vmatprep.subr.mxu0 0.0
  %74 = vmatpush1.msra.mxu0 0.0
  %75 = vmatprep.subr.mxu0 0.0
  %76 = vmatpush1.msra.mxu0 0.0
  %77 = vmatprep.subr.mxu0 0.0
  %78 = vmatpush1.msra.mxu0 0.0
  %79 = vmatprep.subr.mxu0 0.0
  %80 = vmatpush1.msra.mxu0 0.0
  %81 = vmatprep.subr.mxu0 0.0
  %82 = vmatpush1.msra.mxu0 0.0
  %83 = vmatprep.subr.mxu0 0.0
  %84 = vmatpush1.msra.mxu0 0.0
  %85 = vmatprep.subr.mxu0 0.0
  %86 = vmatpush1.msra.mxu0 0.0
  %87 = vmatprep.subr.mxu0 0.0
  %88 = vmatpush1.msra.mxu0 0.0
  %89 = vmatprep.subr.mxu0 0.0
  %90 = vmatpush1.msra.mxu0 0.0
  %91 = vmatprep.subr.mxu0 0.0
  %92 = vmatpush1.msra.mxu0 0.0
  %93 = vmatprep.subr.mxu0 0.0
  %94 = vmatpush1.msra.mxu0 0.0
  %95 = vmatprep.subr.mxu0 0.0
  %96 = vmatpush1.msra.mxu0 0.0
  %97 = vmatprep.subr.mxu0 0.0
  %98 = vmatpush1.msra.mxu0 0.0
  %99 = vmatprep.subr.mxu0 0.0
  %100 = vmatpush1.msra.mxu0 0.0
  %101 = vmatprep.subr.mxu0 0.0
  %102 = vmatpush1.msra.mxu0 0.0
  %103 = vmatprep.subr.mxu0 0.0
  %104 = vmatpush1.msra.mxu0 0.0
  %105 = vmatprep.subr.mxu0 0.0
  %106 = vmatpush1.msra.mxu0 0.0
  %107 = vmatprep.subr.mxu0 0.0
  %108 = vmatpush1.msra.mxu0 0.0
  %109 = vmatprep.subr.mxu0 0.0
  %110 = vmatpush1.msra.mxu0 0.0
  %111 = vmatprep.subr.mxu0 0.0
  %112 = vmatpush1.msra.mxu0 0.0
  %113 = vmatprep.subr.mxu0 0.0
  %114 = vmatpush1.msra.mxu0 0.0
  %115 = vmatprep.subr.mxu0 0.0
  %116 = vmatpush1.msra.mxu0 0.0
  %117 = vmatprep.subr.mxu0 0.0
  %118 = vmatpush1.msra.mxu0 0.0
  %119 = vmatprep.mubr.f32.mxu0 0.0
  %120 = vmatmul.mubr.f32.gmra.mrb[0].mxu0 %v32
  %v121 = vpop.f32.mrb[0].mxu0
  %v122 = vadd.f32 0.0, %v121
  %v123 = vpop.f32.mrb[0].mxu0
  %124 = vmatprep.mubr.f32.mxu0 0.0
  %125 = vmatmul.mubr.f32.gmra.mrb[0].mxu0 %v35
  %v126 = vpop.f32.mrb[0].mxu0
  %v127 = vadd.f32 0.0, %v126
  %v128 = vpop.f32.mrb[0].mxu0
  %129 = vmatprep.mubr.f32.mxu0 0.0
  %130 = vmatmul.mubr.f32.gmra.mrb[0].mxu0 %v38
  %v131 = vpop.f32.mrb[0].mxu0
  %v132 = vadd.f32 0.0, %v131
  %v133 = vpop.f32.mrb[0].mxu0
  %134 = vmatprep.mubr.f32.mxu0 0.0
  %135 = vmatmul.mubr.f32.gmra.mrb[0].mxu0 %v41
  %v136 = vpop.f32.mrb[0].mxu0
  %v137 = vadd.f32 0.0, %v136
  %v138 = vpop.f32.mrb[0].mxu0
  %139 = vmatprep.mubr.f32.mxu0 0.0
  %140 = vmatmul.mubr.f32.gmra.mrb[0].mxu0 %v44
  %v141 = vpop.f32.mrb[0].mxu0
  %v142 = vadd.f32 0.0, %v141
  %v143 = vpop.f32.mrb[0].mxu0
  %144 = vmatprep.mubr.f32.mxu0 0.0
  %145 = vmatmul.mubr.f32.gmra.mrb[0].mxu0 %v47
  %v146 = vpop.f32.mrb[0].mxu0
  %v147 = vadd.f32 0.0, %v146
  %v148 = vpop.f32.mrb[0].mxu0
  %149 = vmatprep.mubr.f32.mxu0 0.0
  %150 = vmatmul.mubr.f32.gmra.mrb[0].mxu0 %v50
  %v151 = vpop.f32.mrb[0].mxu0
  %v152 = vadd.f32 0.0, %v151
  %v153 = vpop.f32.mrb[0].mxu0
  %154 = vmatprep.mubr.f32.mxu0 0.0
  %155 = vmatmul.mubr.f32.gmra.mrb[0].mxu0 %v53
  %v156 = vpop.f32.mrb[0].mxu0
  %v157 = vadd.f32 0.0, %v156
  %v158 = vpop.f32.mrb[0].mxu0
  %159 = vdwg.mxu0
  %v160 = vld [vmem:[%s1] sm:$0xff]
  %v161 = vld [vmem:[%s1 + $0x8] sm:$0xff]
  %v163 = vsel %vm30, %v160, 0
  %v166 = vsel %vm30, %v161, 0
  %168 = vmatprep.subr.mxu0 0.0
  %169 = vmatpush1.msra.mxu0 %v122
  %170 = vmatprep.subr.mxu0 0.0
  %171 = vmatpush1.msra.mxu0 %v127
  %172 = vmatprep.subr.mxu0 0.0
  %173 = vmatpush1.msra.mxu0 %v132
  %174 = vmatprep.subr.mxu0 0.0
  %175 = vmatpush1.msra.mxu0 %v137
  %176 = vmatprep.subr.mxu0 0.0
  %177 = vmatpush1.msra.mxu0 %v142
  %178 = vmatprep.subr.mxu0 0.0
  %179 = vmatpush1.msra.mxu0 %v147
  %180 = vmatprep.subr.mxu0 0.0
  %181 = vmatpush1.msra.mxu0 %v152
  %182 = vmatprep.subr.mxu0 0.0
  %183 = vmatpush1.msra.mxu0 %v157
  %184 = vmatprep.subr.mxu0 0.0
  %185 = vmatpush1.msra.mxu0 0.0
  %186 = vmatprep.subr.mxu0 0.0
  %187 = vmatpush1.msra.mxu0 0.0
  %188 = vmatprep.subr.mxu0 0.0
  %189 = vmatpush1.msra.mxu0 0.0
  %190 = vmatprep.subr.mxu0 0.0
  %191 = vmatpush1.msra.mxu0 0.0
  %192 = vmatprep.subr.mxu0 0.0
  %193 = vmatpush1.msra.mxu0 0.0
  %194 = vmatprep.subr.mxu0 0.0
  %195 = vmatpush1.msra.mxu0 0.0
  %196 = vmatprep.subr.mxu0 0.0
  %197 = vmatpush1.msra.mxu0 0.0
  %198 = vmatprep.subr.mxu0 0.0
  %199 = vmatpush1.msra.mxu0 0.0
  %200 = vmatprep.subr.mxu0 0.0
  %201 = vmatpush1.msra.mxu0 0.0
  %202 = vmatprep.subr.mxu0 0.0
  %203 = vmatpush1.msra.mxu0 0.0
  %204 = vmatprep.subr.mxu0 0.0
  %205 = vmatpush1.msra.mxu0 0.0
  %206 = vmatprep.subr.mxu0 0.0
  %207 = vmatpush1.msra.mxu0 0.0
  %208 = vmatprep.subr.mxu0 0.0
  %209 = vmatpush1.msra.mxu0 0.0
  %210 = vmatprep.subr.mxu0 0.0
  %211 = vmatpush1.msra.mxu0 0.0
  %212 = vmatprep.subr.mxu0 0.0
  %213 = vmatpush1.msra.mxu0 0.0
  %214 = vmatprep.subr.mxu0 0.0
  %215 = vmatpush1.msra.mxu0 0.0
  %216 = vmatprep.subr.mxu0 0.0
  %217 = vmatpush1.msra.mxu0 0.0
  %218 = vmatprep.subr.mxu0 0.0
  %219 = vmatpush1.msra.mxu0 0.0
  %220 = vmatprep.subr.mxu0 0.0
  %221 = vmatpush1.msra.mxu0 0.0
  %222 = vmatprep.subr.mxu0 0.0
  %223 = vmatpush1.msra.mxu0 0.0
  %224 = vmatprep.subr.mxu0 0.0
  %225 = vmatpush1.msra.mxu0 0.0
  %226 = vmatprep.subr.mxu0 0.0
  %227 = vmatpush1.msra.mxu0 0.0
  %228 = vmatprep.subr.mxu0 0.0
  %229 = vmatpush1.msra.mxu0 0.0
  %230 = vmatprep.subr.mxu0 0.0
  %231 = vmatpush1.msra.mxu0 0.0
  %232 = vmatprep.mubr.f32.mxu0 0.0
  %233 = vmatmul.mubr.f32.gmra.mrb[0].mxu0 %v163
  %v234 = vpop.f32.mrb[0].mxu0
  %v235 = vadd.f32 0.0, %v234
  %v236 = vpop.f32.mrb[0].mxu0
  %237 = vmatprep.mubr.f32.mxu0 0.0
  %238 = vmatmul.mubr.f32.gmra.mrb[0].mxu0 %v166
  %v239 = vpop.f32.mrb[0].mxu0
  %v240 = vadd.f32 0.0, %v239
  %v241 = vpop.f32.mrb[0].mxu0
  %242 = vdwg.mxu0
  %vm243 = vcmask 130048
  %244 = vst.msk [vmem:[%s3] sm:$0xff] %vm243, %v235
  %245 = vst.msk [vmem:[%s3 + $0x8] sm:$0xff] %vm243, %v240
  %s246 = scalar_lea.vmem %s0, 64
  %v247 = vld [vmem:[%s246] sm:$0xff]
  %v248 = vld [vmem:[%s246 + $0x8] sm:$0xff]
  %v249 = vld [vmem:[%s246 + $0x10] sm:$0xff]
  %v250 = vld [vmem:[%s246 + $0x18] sm:$0xff]
  %v251 = vld [vmem:[%s246 + $0x20] sm:$0xff]
  %v252 = vld [vmem:[%s246 + $0x28] sm:$0xff]
  %v253 = vld [vmem:[%s246 + $0x30] sm:$0xff]
  %v254 = vld [vmem:[%s246 + $0x38] sm:$0xff]
  %v255 = vld [vmem:[%s2] sm:$0xff]
  %v256 = vld [vmem:[%s2 + $0x8] sm:$0xff]
  %v257 = vld [vmem:[%s2 + $0x10] sm:$0xff]
  %v258 = vld [vmem:[%s2 + $0x18] sm:$0xff]
  %v259 = vld [vmem:[%s2 + $0x20] sm:$0xff]
  %v260 = vld [vmem:[%s2 + $0x28] sm:$0xff]
  %v261 = vld [vmem:[%s2 + $0x30] sm:$0xff]
  %v262 = vld [vmem:[%s2 + $0x38] sm:$0xff]
  %v264 = vsel %vm30, %v247, 0
  %v267 = vsel %vm30, %v248, 0
  %v270 = vsel %vm30, %v249, 0
  %v273 = vsel %vm30, %v250, 0
  %v276 = vsel %vm30, %v251, 0
  %v279 = vsel %vm30, %v252, 0
  %v282 = vsel %vm30, %v253, 0
  %v285 = vsel %vm30, %v254, 0
  %287 = vmatprep.subr.mxu0 0.0
  %288 = vmatpush1.msra.mxu0 %v255
  %289 = vmatprep.subr.mxu0 0.0
  %290 = vmatpush1.msra.mxu0 %v256
  %291 = vmatprep.subr.mxu0 0.0
  %292 = vmatpush1.msra.mxu0 %v257
  %293 = vmatprep.subr.mxu0 0.0
  %294 = vmatpush1.msra.mxu0 %v258
  %295 = vmatprep.subr.mxu0 0.0
  %296 = vmatpush1.msra.mxu0 %v259
  %297 = vmatprep.subr.mxu0 0.0
  %298 = vmatpush1.msra.mxu0 %v260
  %299 = vmatprep.subr.mxu0 0.0
  %300 = vmatpush1.msra.mxu0 %v261
  %301 = vmatprep.subr.mxu0 0.0
  %302 = vmatpush1.msra.mxu0 %v262
  %303 = vmatprep.subr.mxu0 0.0
  %304 = vmatpush1.msra.mxu0 0.0
  %305 = vmatprep.subr.mxu0 0.0
  %306 = vmatpush1.msra.mxu0 0.0
  %307 = vmatprep.subr.mxu0 0.0
  %308 = vmatpush1.msra.mxu0 0.0
  %309 = vmatprep.subr.mxu0 0.0
  %310 = vmatpush1.msra.mxu0 0.0
  %311 = vmatprep.subr.mxu0 0.0
  %312 = vmatpush1.msra.mxu0 0.0
  %313 = vmatprep.subr.mxu0 0.0
  %314 = vmatpush1.msra.mxu0 0.0
  %315 = vmatprep.subr.mxu0 0.0
  %316 = vmatpush1.msra.mxu0 0.0
  %317 = vmatprep.subr.mxu0 0.0
  %318 = vmatpush1.msra.mxu0 0.0
  %319 = vmatprep.subr.mxu0 0.0
  %320 = vmatpush1.msra.mxu0 0.0
  %321 = vmatprep.subr.mxu0 0.0
  %322 = vmatpush1.msra.mxu0 0.0
  %323 = vmatprep.subr.mxu0 0.0
  %324 = vmatpush1.msra.mxu0 0.0
  %325 = vmatprep.subr.mxu0 0.0
  %326 = vmatpush1.msra.mxu0 0.0
  %327 = vmatprep.subr.mxu0 0.0
  %328 = vmatpush1.msra.mxu0 0.0
  %329 = vmatprep.subr.mxu0 0.0
  %330 = vmatpush1.msra.mxu0 0.0
  %331 = vmatprep.subr.mxu0 0.0
  %332 = vmatpush1.msra.mxu0 0.0
  %333 = vmatprep.subr.mxu0 0.0
  %334 = vmatpush1.msra.mxu0 0.0
  %335 = vmatprep.subr.mxu0 0.0
  %336 = vmatpush1.msra.mxu0 0.0
  %337 = vmatprep.subr.mxu0 0.0
  %338 = vmatpush1.msra.mxu0 0.0
  %339 = vmatprep.subr.mxu0 0.0
  %340 = vmatpush1.msra.mxu0 0.0
  %341 = vmatprep.subr.mxu0 0.0
  %342 = vmatpush1.msra.mxu0 0.0
  %343 = vmatprep.subr.mxu0 0.0
  %344 = vmatpush1.msra.mxu0 0.0
  %345 = vmatprep.subr.mxu0 0.0
  %346 = vmatpush1.msra.mxu0 0.0
  %347 = vmatprep.subr.mxu0 0.0
  %348 = vmatpush1.msra.mxu0 0.0
  %349 = vmatprep.subr.mxu0 0.0
  %350 = vmatpush1.msra.mxu0 0.0
  %351 = vmatprep.mubr.f32.mxu0 0.0
  %352 = vmatmul.mubr.f32.gmra.mrb[0].mxu0 %v264
  %v353 = vpop.f32.mrb[0].mxu0
  %v354 = vadd.f32 0.0, %v353
  %v355 = vpop.f32.mrb[0].mxu0
  %356 = vmatprep.mubr.f32.mxu0 0.0
  %357 = vmatmul.mubr.f32.gmra.mrb[0].mxu0 %v267
  %v358 = vpop.f32.mrb[0].mxu0
  %v359 = vadd.f32 0.0, %v358
  %v360 = vpop.f32.mrb[0].mxu0
  %361 = vmatprep.mubr.f32.mxu0 0.0
  %362 = vmatmul.mubr.f32.gmra.mrb[0].mxu0 %v270
  %v363 = vpop.f32.mrb[0].mxu0
  %v364 = vadd.f32 0.0, %v363
  %v365 = vpop.f32.mrb[0].mxu0
  %366 = vmatprep.mubr.f32.mxu0 0.0
  %367 = vmatmul.mubr.f32.gmra.mrb[0].mxu0 %v273
  %v368 = vpop.f32.mrb[0].mxu0
  %v369 = vadd.f32 0.0, %v368
  %v370 = vpop.f32.mrb[0].mxu0
  %371 = vmatprep.mubr.f32.mxu0 0.0
  %372 = vmatmul.mubr.f32.gmra.mrb[0].mxu0 %v276
  %v373 = vpop.f32.mrb[0].mxu0
  %v374 = vadd.f32 0.0, %v373
  %v375 = vpop.f32.mrb[0].mxu0
  %376 = vmatprep.mubr.f32.mxu0 0.0
  %377 = vmatmul.mubr.f32.gmra.mrb[0].mxu0 %v279
  %v378 = vpop.f32.mrb[0].mxu0
  %v379 = vadd.f32 0.0, %v378
  %v380 = vpop.f32.mrb[0].mxu0
  %381 = vmatprep.mubr.f32.mxu0 0.0
  %382 = vmatmul.mubr.f32.gmra.mrb[0].mxu0 %v282
  %v383 = vpop.f32.mrb[0].mxu0
  %v384 = vadd.f32 0.0, %v383
  %v385 = vpop.f32.mrb[0].mxu0
  %386 = vmatprep.mubr.f32.mxu0 0.0
  %387 = vmatmul.mubr.f32.gmra.mrb[0].mxu0 %v285
  %v388 = vpop.f32.mrb[0].mxu0
  %v389 = vadd.f32 0.0, %v388
  %v390 = vpop.f32.mrb[0].mxu0
  %391 = vdwg.mxu0
  %v392 = vld [vmem:[%s1] sm:$0xff]
  %v393 = vld [vmem:[%s1 + $0x8] sm:$0xff]
  %v395 = vsel %vm30, %v392, 0
  %v398 = vsel %vm30, %v393, 0
  %400 = vmatprep.subr.mxu0 0.0
  %401 = vmatpush1.msra.mxu0 %v354
  %402 = vmatprep.subr.mxu0 0.0
  %403 = vmatpush1.msra.mxu0 %v359
  %404 = vmatprep.subr.mxu0 0.0
  %405 = vmatpush1.msra.mxu0 %v364
  %406 = vmatprep.subr.mxu0 0.0
  %407 = vmatpush1.msra.mxu0 %v369
  %408 = vmatprep.subr.mxu0 0.0
  %409 = vmatpush1.msra.mxu0 %v374
  %410 = vmatprep.subr.mxu0 0.0
  %411 = vmatpush1.msra.mxu0 %v379
  %412 = vmatprep.subr.mxu0 0.0
  %413 = vmatpush1.msra.mxu0 %v384
  %414 = vmatprep.subr.mxu0 0.0
  %415 = vmatpush1.msra.mxu0 %v389
  %416 = vmatprep.subr.mxu0 0.0
  %417 = vmatpush1.msra.mxu0 0.0
  %418 = vmatprep.subr.mxu0 0.0
  %419 = vmatpush1.msra.mxu0 0.0
  %420 = vmatprep.subr.mxu0 0.0
  %421 = vmatpush1.msra.mxu0 0.0
  %422 = vmatprep.subr.mxu0 0.0
  %423 = vmatpush1.msra.mxu0 0.0
  %424 = vmatprep.subr.mxu0 0.0
  %425 = vmatpush1.msra.mxu0 0.0
  %426 = vmatprep.subr.mxu0 0.0
  %427 = vmatpush1.msra.mxu0 0.0
  %428 = vmatprep.subr.mxu0 0.0
  %429 = vmatpush1.msra.mxu0 0.0
  %430 = vmatprep.subr.mxu0 0.0
  %431 = vmatpush1.msra.mxu0 0.0
  %432 = vmatprep.subr.mxu0 0.0
  %433 = vmatpush1.msra.mxu0 0.0
  %434 = vmatprep.subr.mxu0 0.0
  %435 = vmatpush1.msra.mxu0 0.0
  %436 = vmatprep.subr.mxu0 0.0
  %437 = vmatpush1.msra.mxu0 0.0
  %438 = vmatprep.subr.mxu0 0.0
  %439 = vmatpush1.msra.mxu0 0.0
  %440 = vmatprep.subr.mxu0 0.0
  %441 = vmatpush1.msra.mxu0 0.0
  %442 = vmatprep.subr.mxu0 0.0
  %443 = vmatpush1.msra.mxu0 0.0
  %444 = vmatprep.subr.mxu0 0.0
  %445 = vmatpush1.msra.mxu0 0.0
  %446 = vmatprep.subr.mxu0 0.0
  %447 = vmatpush1.msra.mxu0 0.0
  %448 = vmatprep.subr.mxu0 0.0
  %449 = vmatpush1.msra.mxu0 0.0
  %450 = vmatprep.subr.mxu0 0.0
  %451 = vmatpush1.msra.mxu0 0.0
  %452 = vmatprep.subr.mxu0 0.0
  %453 = vmatpush1.msra.mxu0 0.0
  %454 = vmatprep.subr.mxu0 0.0
  %455 = vmatpush1.msra.mxu0 0.0
  %456 = vmatprep.subr.mxu0 0.0
  %457 = vmatpush1.msra.mxu0 0.0
  %458 = vmatprep.subr.mxu0 0.0
  %459 = vmatpush1.msra.mxu0 0.0
  %460 = vmatprep.subr.mxu0 0.0
  %461 = vmatpush1.msra.mxu0 0.0
  %462 = vmatprep.subr.mxu0 0.0
  %463 = vmatpush1.msra.mxu0 0.0
  %464 = vmatprep.mubr.f32.mxu0 0.0
  %465 = vmatmul.mubr.f32.gmra.mrb[0].mxu0 %v395
  %v466 = vpop.f32.mrb[0].mxu0
  %v467 = vadd.f32 0.0, %v466
  %v468 = vpop.f32.mrb[0].mxu0
  %469 = vmatprep.mubr.f32.mxu0 0.0
  %470 = vmatmul.mubr.f32.gmra.mrb[0].mxu0 %v398
  %v471 = vpop.f32.mrb[0].mxu0
  %v472 = vadd.f32 0.0, %v471
  %v473 = vpop.f32.mrb[0].mxu0
  %474 = vdwg.mxu0
  %s475 = scalar_lea.vmem %s3, 16
  %476 = vst.msk [vmem:[%s475] sm:$0xff] %vm243, %v467
  %477 = vst.msk [vmem:[%s475 + $0x8] sm:$0xff] %vm243, %v472
  // Predicated region
  $region14: #{_forward_impl.9} parent=0 // pred_check
    _
  $region15: #{_forward_impl.9} parent=0 // pred_check_branch
    %479 = sbr.rel (0) target = $region17
  $region16: #{_forward_impl.9} parent=0 // pred_region
    _
  $region17: #{_forward_impl.9} parent=0 // pred_fallthru
    _
  // Predicated region
  $region18: #{_forward_impl.9} parent=0 // pred_check
    _
  $region19: #{_forward_impl.9} parent=0 // pred_check_branch
    %481 = sbr.rel (0) target = $region21
  $region20: #{_forward_impl.9} parent=0 // pred_region
    _
  $region21: #{_forward_impl.9} parent=0 // pred_fallthru
    _

</llo_original>
